<compile_context>
chip_gen: v5e
topology: v5e:2x2
jax: 0.10.0
libtpu: 0.0.40
codegen_flags: <defaults>
</compile_context>

<pallas_src>
import functools
import math

import jax
import jax.numpy as jnp
from jax import lax
from jax.experimental import pallas as pl
from jax.experimental.pallas import tpu as pltpu


# ----------------------------- Pallas kernels ------------------------------

def _conv3x3_bias_relu_kernel(x_ref, w_ref, b_ref, o_ref, *, offs, lout):
    """Fused 3x3 conv (as 9 shifted matmuls) + bias + ReLU for one image.

    x_ref: (Hp*Wp, Cin) f32   zero-padded image, flattened row-major
    w_ref: (9, Cin, Cout) bf16
    b_ref: (1, Cout)  f32
    o_ref: (lout, Cout) f32   "extended" conv output (lout = H*Wp); the two
                              wrap-around columns per spatial row are dropped
                              by the JAX wrapper.
    """
    cout = o_ref.shape[-1]
    acc = jnp.zeros((lout, cout), jnp.float32)
    for k, off in enumerate(offs):
        xs = x_ref[pl.ds(off, lout), :].astype(jnp.bfloat16)
        acc = acc + jnp.dot(xs, w_ref[k], preferred_element_type=jnp.float32)
    o_ref[...] = jnp.maximum(acc + b_ref[...], 0.0)


def _fused_head_kernel(x_ref, w0_ref, b0_ref, wc_ref, bc_ref, we_ref, be_ref,
                       wtc_ref, wta_ref, bt_ref, o_ref):
    """cnn_out -> {classifier, emo_regressor} -> packed top layers, one kernel.

    All weights live in VMEM; intermediate (B, 256) activations never hit HBM.
    Output is a lane-dense (B, 128) slab: cols [0:nc] = class logits,
    col [nc] = attribute score, remaining cols zero.
    """
    x = x_ref[...]                                                   # (B,1024) bf16
    # cnn_out: Linear(1024,256) + ReLU  (Dropout(0.5) is identity in eval mode)
    h = jnp.dot(x, w0_ref[...], preferred_element_type=jnp.float32)
    h = jnp.maximum(h + b0_ref[...], 0.0)
    hb = h.astype(jnp.bfloat16)
    # classifier branch: Linear(256,256) + ReLU
    hc = jnp.dot(hb, wc_ref[...], preferred_element_type=jnp.float32)
    hc = jnp.maximum(hc + bc_ref[...], 0.0)
    # emo_regressor branch: Linear(256,256) + ReLU
    he = jnp.dot(hb, we_ref[...], preferred_element_type=jnp.float32)
    he = jnp.maximum(he + be_ref[...], 0.0)
    # packed top layers: top_layer_class into cols [0:nc], top_layer_attri col nc
    out = (jnp.dot(hc.astype(jnp.bfloat16), wtc_ref[...],
                   preferred_element_type=jnp.float32)
           + jnp.dot(he.astype(jnp.bfloat16), wta_ref[...],
                     preferred_element_type=jnp.float32)
           + bt_ref[...])
    o_ref[...] = out


# ----------------------------- Pallas wrappers ------------------------------

def conv3x3_relu_pool(x_nhwc, w9, bias):
    """Conv2d(3x3, pad=1) + bias + ReLU (Pallas, fused) then 2x2 max-pool (jnp).

    x_nhwc: (B, H, W, Cin) f32,  w9: (9, Cin, Cout) bf16,  bias: (Cout,) f32.
    Returns (B, H//2, W//2, Cout) f32, NHWC.
    """
    B, H, W, Cin = x_nhwc.shape
    Cout = w9.shape[-1]
    Wp = W + 2
    lout = H * Wp
    # Pad rows (top=1, bottom=2) and cols (1, 1).  The extra bottom zero row keeps
    # all 9 shifted slices in-bounds for the "extended" output rows.
    xp = jnp.pad(x_nhwc, ((0, 0), (1, 2), (1, 1), (0, 0)))
    x2 = xp.reshape(B, (H + 3) * Wp, Cin)
    offs = tuple(di * Wp + dj for di in range(3) for dj in range(3))
    kern = functools.partial(_conv3x3_bias_relu_kernel, offs=offs, lout=lout)

    y2 = pl.pallas_call(
        kern,
        out_shape=jax.ShapeDtypeStruct((B, lout, Cout), jnp.float32),
        grid=(B,),
        in_specs=[
            pl.BlockSpec((None, (H + 3) * Wp, Cin), lambda b: (b, 0, 0)),
            pl.BlockSpec((9, Cin, Cout), lambda b: (0, 0, 0)),
            pl.BlockSpec((1, Cout), lambda b: (0, 0)),
        ],
        out_specs=pl.BlockSpec((None, lout, Cout), lambda b: (b, 0, 0)),
        compiler_params=pltpu.CompilerParams(
            dimension_semantics=("parallel",),
            vmem_limit_bytes=32 * 1024 * 1024),
    )(x2, w9, bias.reshape(1, Cout))

    # Drop the 2 wrap-around columns per row, then 2x2 max-pool (fused by XLA).
    y = y2.reshape(B, H, Wp, Cout)[:, :, :W, :]
    y = y.reshape(B, H // 2, 2, W // 2, 2, Cout).max(axis=(2, 4))
    return y


def fused_head(x_flat_bf16, kp, num_classes):
    """cnn_out + classifier + emo_regressor + both top layers in one pallas_call."""
    B = x_flat_bf16.shape[0]
    out_w = 128   # lane-dense packed output width

    def full_spec(shape):
        return pl.BlockSpec(shape, lambda: (0, 0))

    args = (x_flat_bf16, kp["w0"], kp["b0"], kp["wc"], kp["bc"],
            kp["we"], kp["be"], kp["wtc"], kp["wta"], kp["bt"])
    out = pl.pallas_call(
        _fused_head_kernel,
        out_shape=jax.ShapeDtypeStruct((B, out_w), jnp.float32),
        in_specs=[full_spec(a.shape) for a in args],
        out_specs=full_spec((B, out_w)),
        compiler_params=pltpu.CompilerParams(vmem_limit_bytes=32 * 1024 * 1024),
    )(*args)
    x_class = out[:, :num_classes]
    x_attri = out[:, num_classes:num_classes + 1]
    return x_class, x_attri


# ------------------------------ Parameters -----------------------------------

def init_raw_params(key, num_classes):
    """Parameters in PyTorch conventions (Conv: (Cout,Cin,3,3); Linear: (out,in))."""
    ks = jax.random.split(key, 7)

    def conv_init(k, cout, cin, kh=3, kw=3):
        std = math.sqrt(2.0 / (kh * kw * cout))          # matches _initialize_weights
        return (jax.random.normal(k, (cout, cin, kh, kw), jnp.float32) * std,
                jnp.zeros((cout,), jnp.float32))

    def lin_init(k, fout, fin):
        return (jax.random.normal(k, (fout, fin), jnp.float32) * 0.01,
                jnp.zeros((fout,), jnp.float32))

    p = {}
    p["conv1_w"], p["conv1_b"] = conv_init(ks[0], 16, 3)
    p["conv2_w"], p["conv2_b"] = conv_init(ks[1], 64, 16)
    p["cnn_out_w"], p["cnn_out_b"] = lin_init(ks[2], 256, 1024)
    p["cls_w"], p["cls_b"] = lin_init(ks[3], 256, 256)
    p["emo_w"], p["emo_b"] = lin_init(ks[4], 256, 256)
    p["top_cls_w"], p["top_cls_b"] = lin_init(ks[5], num_classes, 256)
    p["top_att_w"], p["top_att_b"] = lin_init(ks[6], 1, 256)
    return p


def pack_kernel_params(raw, num_classes, feat_c=64, feat_h=4, feat_w=4):
    """Convert PyTorch-layout params to the layouts the Pallas kernels use."""
    kp = {}

    def conv_pack(w):    # (Cout, Cin, 3, 3) -> (9, Cin, Cout), bf16
        cout, cin = w.shape[0], w.shape[1]
        return jnp.transpose(w, (2, 3, 1, 0)).reshape(9, cin, cout).astype(jnp.bfloat16)

    kp["conv1_w9"], kp["conv1_b"] = conv_pack(raw["conv1_w"]), raw["conv1_b"]
    kp["conv2_w9"], kp["conv2_b"] = conv_pack(raw["conv2_w"]), raw["conv2_b"]

    # Activations are flattened in HWC order (channel-last end-to-end), so permute
    # the rows of cnn_out's weight once here to match PyTorch's CHW flatten order.
    perm = jnp.arange(feat_c * feat_h * feat_w).reshape(feat_c, feat_h, feat_w)
    perm = jnp.transpose(perm, (1, 2, 0)).reshape(-1)            # HWC row -> CHW row
    kp["w0"] = raw["cnn_out_w"].T[perm, :].astype(jnp.bfloat16)  # (1024, 256)
    kp["b0"] = raw["cnn_out_b"].reshape(1, -1)
    kp["wc"] = raw["cls_w"].T.astype(jnp.bfloat16)               # (256, 256)
    kp["bc"] = raw["cls_b"].reshape(1, -1)
    kp["we"] = raw["emo_w"].T.astype(jnp.bfloat16)               # (256, 256)
    kp["be"] = raw["emo_b"].reshape(1, -1)

    # Pack both top layers into one lane-dense (*, 128) output slab.
    nc = num_classes
    wtc = jnp.zeros((256, 128), jnp.float32).at[:, :nc].set(raw["top_cls_w"].T)
    wta = jnp.zeros((256, 128), jnp.float32).at[:, nc:nc + 1].set(raw["top_att_w"].T)
    bt = jnp.zeros((1, 128), jnp.float32)
    bt = bt.at[0, :nc].set(raw["top_cls_b"]).at[0, nc].set(raw["top_att_b"][0])
    kp["wtc"] = wtc.astype(jnp.bfloat16)
    kp["wta"] = wta.astype(jnp.bfloat16)
    kp["bt"] = bt
    return kp


# --------------------------------- Forward ----------------------------------

def vgg_forward(kp, x_nchw, num_classes):
    # NCHW (PyTorch interface) -> NHWC once; channel-last everywhere after.
    x = jnp.transpose(x_nchw, (0, 2, 3, 1))
    x = conv3x3_relu_pool(x, kp["conv1_w9"], kp["conv1_b"])   # (B, 8, 8, 16)
    x = conv3x3_relu_pool(x, kp["conv2_w9"], kp["conv2_b"])   # (B, 4, 4, 64)
    B = x.shape[0]
    x = x.reshape(B, -1).astype(jnp.bfloat16)                 # (B, 1024), HWC flatten
    return fused_head(x, kp, num_classes)


# ------------------------- Pure-JAX reference (f32) --------------------------

def ref_forward(raw, x_nchw):
    def conv_relu(x, w, b):
        y = lax.conv_general_dilated(x, w, window_strides=(1, 1),
                                     padding=((1, 1), (1, 1)),
                                     dimension_numbers=("NCHW", "OIHW", "NCHW"))
        return jax.nn.relu(y + b[None, :, None, None])

    def pool(x):
        B, C, H, W = x.shape
        return x.reshape(B, C, H // 2, 2, W // 2, 2).max(axis=(3, 5))

    def linear(x, w, b):
        return x @ w.T + b

    x = pool(conv_relu(x_nchw, raw["conv1_w"], raw["conv1_b"]))
    x = pool(conv_relu(x, raw["conv2_w"], raw["conv2_b"]))
    x = x.reshape(x.shape[0], -1)
    x = jax.nn.relu(linear(x, raw["cnn_out_w"], raw["cnn_out_b"]))
    xc = jax.nn.relu(linear(x, raw["cls_w"], raw["cls_b"]))
    xc = linear(xc, raw["top_cls_w"], raw["top_cls_b"])
    xa = jax.nn.relu(linear(x, raw["emo_w"], raw["emo_b"]))
    xa = linear(xa, raw["top_att_w"], raw["top_att_b"])
    return xc, xa


# ----------------------------------- Main ------------------------------------

if __name__ == "__main__":
    num_classes = 8
    key = jax.random.PRNGKey(0)
    k_param, k_input = jax.random.split(key)

    raw = init_raw_params(k_param, num_classes)
    kp = pack_kernel_params(raw, num_classes)
    x = jax.random.normal(k_input, (2, 3, 16, 16), jnp.float32)  # NCHW, like PyTorch

    fwd = jax.jit(functools.partial(vgg_forward, num_classes=num_classes))
    x_class, x_attri = fwd(kp, x)
    x_class = jax.block_until_ready(x_class)
    x_attri = jax.block_until_ready(x_attri)

    assert x_class.shape == (2, num_classes)
    assert x_attri.shape == (2, 1)
    assert bool(jnp.all(jnp.isfinite(x_class))) and bool(jnp.all(jnp.isfinite(x_attri)))

    # Compare against a pure-JAX f32 reference (bf16 MXU inputs -> loose tolerance).
    rc, ra = ref_forward(raw, x)

    def close(a, b):
        return float(jnp.linalg.norm(a - b)) <= 0.05 * float(jnp.linalg.norm(b)) + 1e-4

    assert close(x_class, rc), "class head mismatch vs reference"
    assert close(x_attri, ra), "attri head mismatch vs reference"

    print("KERNEL_OK")
</pallas_src>

<mosaic_0001>
module attributes {stable_mosaic.version = 11 : i64} {
  func.func @_conv3x3_bias_relu_kernel(%arg0: i32, %arg1: memref<1x342x3xf32, #tpu.memory_space<vmem>>, %arg2: memref<9x3x16xbf16, #tpu.memory_space<vmem>>, %arg3: memref<1x16xf32, #tpu.memory_space<vmem>>, %arg4: memref<1x288x16xf32, #tpu.memory_space<vmem>>) attributes {dimension_semantics = [#tpu.dimension_semantics<parallel>], iteration_bounds = array<i64: 2>, scalar_prefetch = 0 : i64, scratch_operands = 0 : i64, tpu.core_type = #tpu.core_type<tc>, window_params = [{transform_indices = @transform_0, window_bounds = array<i64: 1, 342, 3>}, {pipeline_mode = #tpu.pipeline_mode<synchronous>, transform_indices = @transform_1, window_bounds = array<i64: 9, 3, 16>}, {pipeline_mode = #tpu.pipeline_mode<synchronous>, transform_indices = @transform_2, window_bounds = array<i64: 1, 16>}, {transform_indices = @transform_3, window_bounds = array<i64: 1, 288, 16>}]} {
    %cst = arith.constant 0.000000e+00 : f32
    %0 = vector.broadcast %cst : f32 to vector<288x16xf32>
    %c0 = arith.constant 0 : index
    %c0_0 = arith.constant 0 : index
    %c0_1 = arith.constant 0 : index
    %1 = vector.load %arg1[%c0, %c0_0, %c0_1] : memref<1x342x3xf32, #tpu.memory_space<vmem>>, vector<1x288x3xf32>
    %2 = vector.shape_cast %1 : vector<1x288x3xf32> to vector<288x3xf32>
    %3 = arith.truncf %2 : vector<288x3xf32> to vector<288x3xbf16>
    %c0_2 = arith.constant 0 : index
    %c0_3 = arith.constant 0 : index
    %c0_4 = arith.constant 0 : index
    %4 = vector.load %arg2[%c0_2, %c0_3, %c0_4] : memref<9x3x16xbf16, #tpu.memory_space<vmem>>, vector<1x3x16xbf16>
    %5 = vector.shape_cast %4 : vector<1x3x16xbf16> to vector<3x16xbf16>
    %cst_5 = arith.constant dense<0.000000e+00> : vector<288x16xf32>
    %6 = tpu.matmul %3, %5, %cst_5 {dimension_numbers = #tpu.dot_dimension_numbers<[1], [0], [0], [1], [0, 0, 1, 1], [], []>} : vector<288x3xbf16>, vector<3x16xbf16>, vector<288x16xf32> -> vector<288x16xf32>
    %7 = arith.addf %0, %6 : vector<288x16xf32>
    %c0_6 = arith.constant 0 : index
    %c1 = arith.constant 1 : index
    %c0_7 = arith.constant 0 : index
    %8 = vector.load %arg1[%c0_6, %c1, %c0_7] : memref<1x342x3xf32, #tpu.memory_space<vmem>>, vector<1x288x3xf32>
    %9 = vector.shape_cast %8 : vector<1x288x3xf32> to vector<288x3xf32>
    %10 = arith.truncf %9 : vector<288x3xf32> to vector<288x3xbf16>
    %c1_8 = arith.constant 1 : index
    %c0_9 = arith.constant 0 : index
    %c0_10 = arith.constant 0 : index
    %11 = vector.load %arg2[%c1_8, %c0_9, %c0_10] : memref<9x3x16xbf16, #tpu.memory_space<vmem>>, vector<1x3x16xbf16>
    %12 = vector.shape_cast %11 : vector<1x3x16xbf16> to vector<3x16xbf16>
    %cst_11 = arith.constant dense<0.000000e+00> : vector<288x16xf32>
    %13 = tpu.matmul %10, %12, %cst_11 {dimension_numbers = #tpu.dot_dimension_numbers<[1], [0], [0], [1], [0, 0, 1, 1], [], []>} : vector<288x3xbf16>, vector<3x16xbf16>, vector<288x16xf32> -> vector<288x16xf32>
    %14 = arith.addf %7, %13 : vector<288x16xf32>
    %c0_12 = arith.constant 0 : index
    %c2 = arith.constant 2 : index
    %c0_13 = arith.constant 0 : index
    %15 = vector.load %arg1[%c0_12, %c2, %c0_13] : memref<1x342x3xf32, #tpu.memory_space<vmem>>, vector<1x288x3xf32>
    %16 = vector.shape_cast %15 : vector<1x288x3xf32> to vector<288x3xf32>
    %17 = arith.truncf %16 : vector<288x3xf32> to vector<288x3xbf16>
    %c2_14 = arith.constant 2 : index
    %c0_15 = arith.constant 0 : index
    %c0_16 = arith.constant 0 : index
    %18 = vector.load %arg2[%c2_14, %c0_15, %c0_16] : memref<9x3x16xbf16, #tpu.memory_space<vmem>>, vector<1x3x16xbf16>
    %19 = vector.shape_cast %18 : vector<1x3x16xbf16> to vector<3x16xbf16>
    %cst_17 = arith.constant dense<0.000000e+00> : vector<288x16xf32>
    %20 = tpu.matmul %17, %19, %cst_17 {dimension_numbers = #tpu.dot_dimension_numbers<[1], [0], [0], [1], [0, 0, 1, 1], [], []>} : vector<288x3xbf16>, vector<3x16xbf16>, vector<288x16xf32> -> vector<288x16xf32>
    %21 = arith.addf %14, %20 : vector<288x16xf32>
    %c0_18 = arith.constant 0 : index
    %c18 = arith.constant 18 : index
    %c0_19 = arith.constant 0 : index
    %22 = vector.load %arg1[%c0_18, %c18, %c0_19] : memref<1x342x3xf32, #tpu.memory_space<vmem>>, vector<1x288x3xf32>
    %23 = vector.shape_cast %22 : vector<1x288x3xf32> to vector<288x3xf32>
    %24 = arith.truncf %23 : vector<288x3xf32> to vector<288x3xbf16>
    %c3 = arith.constant 3 : index
    %c0_20 = arith.constant 0 : index
    %c0_21 = arith.constant 0 : index
    %25 = vector.load %arg2[%c3, %c0_20, %c0_21] : memref<9x3x16xbf16, #tpu.memory_space<vmem>>, vector<1x3x16xbf16>
    %26 = vector.shape_cast %25 : vector<1x3x16xbf16> to vector<3x16xbf16>
    %cst_22 = arith.constant dense<0.000000e+00> : vector<288x16xf32>
    %27 = tpu.matmul %24, %26, %cst_22 {dimension_numbers = #tpu.dot_dimension_numbers<[1], [0], [0], [1], [0, 0, 1, 1], [], []>} : vector<288x3xbf16>, vector<3x16xbf16>, vector<288x16xf32> -> vector<288x16xf32>
    %28 = arith.addf %21, %27 : vector<288x16xf32>
    %c0_23 = arith.constant 0 : index
    %c19 = arith.constant 19 : index
    %c0_24 = arith.constant 0 : index
    %29 = vector.load %arg1[%c0_23, %c19, %c0_24] : memref<1x342x3xf32, #tpu.memory_space<vmem>>, vector<1x288x3xf32>
    %30 = vector.shape_cast %29 : vector<1x288x3xf32> to vector<288x3xf32>
    %31 = arith.truncf %30 : vector<288x3xf32> to vector<288x3xbf16>
    %c4 = arith.constant 4 : index
    %c0_25 = arith.constant 0 : index
    %c0_26 = arith.constant 0 : index
    %32 = vector.load %arg2[%c4, %c0_25, %c0_26] : memref<9x3x16xbf16, #tpu.memory_space<vmem>>, vector<1x3x16xbf16>
    %33 = vector.shape_cast %32 : vector<1x3x16xbf16> to vector<3x16xbf16>
    %cst_27 = arith.constant dense<0.000000e+00> : vector<288x16xf32>
    %34 = tpu.matmul %31, %33, %cst_27 {dimension_numbers = #tpu.dot_dimension_numbers<[1], [0], [0], [1], [0, 0, 1, 1], [], []>} : vector<288x3xbf16>, vector<3x16xbf16>, vector<288x16xf32> -> vector<288x16xf32>
    %35 = arith.addf %28, %34 : vector<288x16xf32>
    %c0_28 = arith.constant 0 : index
    %c20 = arith.constant 20 : index
    %c0_29 = arith.constant 0 : index
    %36 = vector.load %arg1[%c0_28, %c20, %c0_29] : memref<1x342x3xf32, #tpu.memory_space<vmem>>, vector<1x288x3xf32>
    %37 = vector.shape_cast %36 : vector<1x288x3xf32> to vector<288x3xf32>
    %38 = arith.truncf %37 : vector<288x3xf32> to vector<288x3xbf16>
    %c5 = arith.constant 5 : index
    %c0_30 = arith.constant 0 : index
    %c0_31 = arith.constant 0 : index
    %39 = vector.load %arg2[%c5, %c0_30, %c0_31] : memref<9x3x16xbf16, #tpu.memory_space<vmem>>, vector<1x3x16xbf16>
    %40 = vector.shape_cast %39 : vector<1x3x16xbf16> to vector<3x16xbf16>
    %cst_32 = arith.constant dense<0.000000e+00> : vector<288x16xf32>
    %41 = tpu.matmul %38, %40, %cst_32 {dimension_numbers = #tpu.dot_dimension_numbers<[1], [0], [0], [1], [0, 0, 1, 1], [], []>} : vector<288x3xbf16>, vector<3x16xbf16>, vector<288x16xf32> -> vector<288x16xf32>
    %42 = arith.addf %35, %41 : vector<288x16xf32>
    %c0_33 = arith.constant 0 : index
    %c36 = arith.constant 36 : index
    %c0_34 = arith.constant 0 : index
    %43 = vector.load %arg1[%c0_33, %c36, %c0_34] : memref<1x342x3xf32, #tpu.memory_space<vmem>>, vector<1x288x3xf32>
    %44 = vector.shape_cast %43 : vector<1x288x3xf32> to vector<288x3xf32>
    %45 = arith.truncf %44 : vector<288x3xf32> to vector<288x3xbf16>
    %c6 = arith.constant 6 : index
    %c0_35 = arith.constant 0 : index
    %c0_36 = arith.constant 0 : index
    %46 = vector.load %arg2[%c6, %c0_35, %c0_36] : memref<9x3x16xbf16, #tpu.memory_space<vmem>>, vector<1x3x16xbf16>
    %47 = vector.shape_cast %46 : vector<1x3x16xbf16> to vector<3x16xbf16>
    %cst_37 = arith.constant dense<0.000000e+00> : vector<288x16xf32>
    %48 = tpu.matmul %45, %47, %cst_37 {dimension_numbers = #tpu.dot_dimension_numbers<[1], [0], [0], [1], [0, 0, 1, 1], [], []>} : vector<288x3xbf16>, vector<3x16xbf16>, vector<288x16xf32> -> vector<288x16xf32>
    %49 = arith.addf %42, %48 : vector<288x16xf32>
    %c0_38 = arith.constant 0 : index
    %c37 = arith.constant 37 : index
    %c0_39 = arith.constant 0 : index
    %50 = vector.load %arg1[%c0_38, %c37, %c0_39] : memref<1x342x3xf32, #tpu.memory_space<vmem>>, vector<1x288x3xf32>
    %51 = vector.shape_cast %50 : vector<1x288x3xf32> to vector<288x3xf32>
    %52 = arith.truncf %51 : vector<288x3xf32> to vector<288x3xbf16>
    %c7 = arith.constant 7 : index
    %c0_40 = arith.constant 0 : index
    %c0_41 = arith.constant 0 : index
    %53 = vector.load %arg2[%c7, %c0_40, %c0_41] : memref<9x3x16xbf16, #tpu.memory_space<vmem>>, vector<1x3x16xbf16>
    %54 = vector.shape_cast %53 : vector<1x3x16xbf16> to vector<3x16xbf16>
    %cst_42 = arith.constant dense<0.000000e+00> : vector<288x16xf32>
    %55 = tpu.matmul %52, %54, %cst_42 {dimension_numbers = #tpu.dot_dimension_numbers<[1], [0], [0], [1], [0, 0, 1, 1], [], []>} : vector<288x3xbf16>, vector<3x16xbf16>, vector<288x16xf32> -> vector<288x16xf32>
    %56 = arith.addf %49, %55 : vector<288x16xf32>
    %c0_43 = arith.constant 0 : index
    %c38 = arith.constant 38 : index
    %c0_44 = arith.constant 0 : index
    %57 = vector.load %arg1[%c0_43, %c38, %c0_44] : memref<1x342x3xf32, #tpu.memory_space<vmem>>, vector<1x288x3xf32>
    %58 = vector.shape_cast %57 : vector<1x288x3xf32> to vector<288x3xf32>
    %59 = arith.truncf %58 : vector<288x3xf32> to vector<288x3xbf16>
    %c8 = arith.constant 8 : index
    %c0_45 = arith.constant 0 : index
    %c0_46 = arith.constant 0 : index
    %60 = vector.load %arg2[%c8, %c0_45, %c0_46] : memref<9x3x16xbf16, #tpu.memory_space<vmem>>, vector<1x3x16xbf16>
    %61 = vector.shape_cast %60 : vector<1x3x16xbf16> to vector<3x16xbf16>
    %cst_47 = arith.constant dense<0.000000e+00> : vector<288x16xf32>
    %62 = tpu.matmul %59, %61, %cst_47 {dimension_numbers = #tpu.dot_dimension_numbers<[1], [0], [0], [1], [0, 0, 1, 1], [], []>} : vector<288x3xbf16>, vector<3x16xbf16>, vector<288x16xf32> -> vector<288x16xf32>
    %63 = arith.addf %56, %62 : vector<288x16xf32>
    %c0_48 = arith.constant 0 : index
    %c0_49 = arith.constant 0 : index
    %64 = vector.load %arg3[%c0_48, %c0_49] : memref<1x16xf32, #tpu.memory_space<vmem>>, vector<1x16xf32>
    %65 = vector.broadcast %64 : vector<1x16xf32> to vector<288x16xf32>
    %66 = arith.addf %63, %65 : vector<288x16xf32>
    %cst_50 = arith.constant 0.000000e+00 : f32
    %67 = vector.broadcast %cst_50 : f32 to vector<288x16xf32>
    %68 = arith.maximumf %66, %67 : vector<288x16xf32>
    %c0_51 = arith.constant 0 : index
    %c0_52 = arith.constant 0 : index
    %c0_53 = arith.constant 0 : index
    %69 = vector.load %arg4[%c0_51, %c0_52, %c0_53] : memref<1x288x16xf32, #tpu.memory_space<vmem>>, vector<1x288x16xf32>
    %70 = vector.shape_cast %69 : vector<1x288x16xf32> to vector<288x16xf32>
    %71 = vector.shape_cast %68 : vector<288x16xf32> to vector<1x288x16xf32>
    tpu.vector_store %arg4[%c0_51, %c0_52, %c0_53], %71 {strides = array<i32>} : memref<1x288x16xf32, #tpu.memory_space<vmem>>, vector<1x288x16xf32>,
    return
  }
  func.func @transform_0(%arg0: i32) -> (i32, i32, i32) {
    %c0_i32 = arith.constant 0 : i32
    %c0_i32_0 = arith.constant 0 : i32
    %c0_i32_1 = arith.constant 0 : i32
    return %arg0, %c0_i32, %c0_i32_0 : i32, i32, i32
  }
  func.func @transform_1(%arg0: i32) -> (i32, i32, i32) {
    %c0_i32 = arith.constant 0 : i32
    %c0_i32_0 = arith.constant 0 : i32
    %c0_i32_1 = arith.constant 0 : i32
    %c0_i32_2 = arith.constant 0 : i32
    return %c0_i32, %c0_i32_0, %c0_i32_1 : i32, i32, i32
  }
  func.func @transform_2(%arg0: i32) -> (i32, i32) {
    %c0_i32 = arith.constant 0 : i32
    %c0_i32_0 = arith.constant 0 : i32
    %c0_i32_1 = arith.constant 0 : i32
    return %c0_i32, %c0_i32_0 : i32, i32
  }
  func.func @transform_3(%arg0: i32) -> (i32, i32, i32) {
    %c0_i32 = arith.constant 0 : i32
    %c0_i32_0 = arith.constant 0 : i32
    %c0_i32_1 = arith.constant 0 : i32
    return %arg0, %c0_i32, %c0_i32_0 : i32, i32, i32
  }
}

module attributes {stable_mosaic.version = 11 : i64} {
  func.func @_conv3x3_bias_relu_kernel(%arg0: i32, %arg1: memref<1x110x16xf32, #tpu.memory_space<vmem>>, %arg2: memref<9x16x64xbf16, #tpu.memory_space<vmem>>, %arg3: memref<1x64xf32, #tpu.memory_space<vmem>>, %arg4: memref<1x80x64xf32, #tpu.memory_space<vmem>>) attributes {dimension_semantics = [#tpu.dimension_semantics<parallel>], iteration_bounds = array<i64: 2>, scalar_prefetch = 0 : i64, scratch_operands = 0 : i64, tpu.core_type = #tpu.core_type<tc>, window_params = [{transform_indices = @transform_0, window_bounds = array<i64: 1, 110, 16>}, {pipeline_mode = #tpu.pipeline_mode<synchronous>, transform_indices = @transform_1, window_bounds = array<i64: 9, 16, 64>}, {pipeline_mode = #tpu.pipeline_mode<synchronous>, transform_indices = @transform_2, window_bounds = array<i64: 1, 64>}, {transform_indices = @transform_3, window_bounds = array<i64: 1, 80, 64>}]} {
    %cst = arith.constant 0.000000e+00 : f32
    %0 = vector.broadcast %cst : f32 to vector<80x64xf32>
    %c0 = arith.constant 0 : index
    %c0_0 = arith.constant 0 : index
    %c0_1 = arith.constant 0 : index
    %1 = vector.load %arg1[%c0, %c0_0, %c0_1] : memref<1x110x16xf32, #tpu.memory_space<vmem>>, vector<1x80x16xf32>
    %2 = vector.shape_cast %1 : vector<1x80x16xf32> to vector<80x16xf32>
    %3 = arith.truncf %2 : vector<80x16xf32> to vector<80x16xbf16>
    %c0_2 = arith.constant 0 : index
    %c0_3 = arith.constant 0 : index
    %c0_4 = arith.constant 0 : index
    %4 = vector.load %arg2[%c0_2, %c0_3, %c0_4] : memref<9x16x64xbf16, #tpu.memory_space<vmem>>, vector<1x16x64xbf16>
    %5 = vector.shape_cast %4 : vector<1x16x64xbf16> to vector<16x64xbf16>
    %cst_5 = arith.constant dense<0.000000e+00> : vector<80x64xf32>
    %6 = tpu.matmul %3, %5, %cst_5 {dimension_numbers = #tpu.dot_dimension_numbers<[1], [0], [0], [1], [0, 0, 1, 1], [], []>} : vector<80x16xbf16>, vector<16x64xbf16>, vector<80x64xf32> -> vector<80x64xf32>
    %7 = arith.addf %0, %6 : vector<80x64xf32>
    %c0_6 = arith.constant 0 : index
    %c1 = arith.constant 1 : index
    %c0_7 = arith.constant 0 : index
    %8 = vector.load %arg1[%c0_6, %c1, %c0_7] : memref<1x110x16xf32, #tpu.memory_space<vmem>>, vector<1x80x16xf32>
    %9 = vector.shape_cast %8 : vector<1x80x16xf32> to vector<80x16xf32>
    %10 = arith.truncf %9 : vector<80x16xf32> to vector<80x16xbf16>
    %c1_8 = arith.constant 1 : index
    %c0_9 = arith.constant 0 : index
    %c0_10 = arith.constant 0 : index
    %11 = vector.load %arg2[%c1_8, %c0_9, %c0_10] : memref<9x16x64xbf16, #tpu.memory_space<vmem>>, vector<1x16x64xbf16>
    %12 = vector.shape_cast %11 : vector<1x16x64xbf16> to vector<16x64xbf16>
    %cst_11 = arith.constant dense<0.000000e+00> : vector<80x64xf32>
    %13 = tpu.matmul %10, %12, %cst_11 {dimension_numbers = #tpu.dot_dimension_numbers<[1], [0], [0], [1], [0, 0, 1, 1], [], []>} : vector<80x16xbf16>, vector<16x64xbf16>, vector<80x64xf32> -> vector<80x64xf32>
    %14 = arith.addf %7, %13 : vector<80x64xf32>
    %c0_12 = arith.constant 0 : index
    %c2 = arith.constant 2 : index
    %c0_13 = arith.constant 0 : index
    %15 = vector.load %arg1[%c0_12, %c2, %c0_13] : memref<1x110x16xf32, #tpu.memory_space<vmem>>, vector<1x80x16xf32>
    %16 = vector.shape_cast %15 : vector<1x80x16xf32> to vector<80x16xf32>
    %17 = arith.truncf %16 : vector<80x16xf32> to vector<80x16xbf16>
    %c2_14 = arith.constant 2 : index
    %c0_15 = arith.constant 0 : index
    %c0_16 = arith.constant 0 : index
    %18 = vector.load %arg2[%c2_14, %c0_15, %c0_16] : memref<9x16x64xbf16, #tpu.memory_space<vmem>>, vector<1x16x64xbf16>
    %19 = vector.shape_cast %18 : vector<1x16x64xbf16> to vector<16x64xbf16>
    %cst_17 = arith.constant dense<0.000000e+00> : vector<80x64xf32>
    %20 = tpu.matmul %17, %19, %cst_17 {dimension_numbers = #tpu.dot_dimension_numbers<[1], [0], [0], [1], [0, 0, 1, 1], [], []>} : vector<80x16xbf16>, vector<16x64xbf16>, vector<80x64xf32> -> vector<80x64xf32>
    %21 = arith.addf %14, %20 : vector<80x64xf32>
    %c0_18 = arith.constant 0 : index
    %c10 = arith.constant 10 : index
    %c0_19 = arith.constant 0 : index
    %22 = vector.load %arg1[%c0_18, %c10, %c0_19] : memref<1x110x16xf32, #tpu.memory_space<vmem>>, vector<1x80x16xf32>
    %23 = vector.shape_cast %22 : vector<1x80x16xf32> to vector<80x16xf32>
    %24 = arith.truncf %23 : vector<80x16xf32> to vector<80x16xbf16>
    %c3 = arith.constant 3 : index
    %c0_20 = arith.constant 0 : index
    %c0_21 = arith.constant 0 : index
    %25 = vector.load %arg2[%c3, %c0_20, %c0_21] : memref<9x16x64xbf16, #tpu.memory_space<vmem>>, vector<1x16x64xbf16>
    %26 = vector.shape_cast %25 : vector<1x16x64xbf16> to vector<16x64xbf16>
    %cst_22 = arith.constant dense<0.000000e+00> : vector<80x64xf32>
    %27 = tpu.matmul %24, %26, %cst_22 {dimension_numbers = #tpu.dot_dimension_numbers<[1], [0], [0], [1], [0, 0, 1, 1], [], []>} : vector<80x16xbf16>, vector<16x64xbf16>, vector<80x64xf32> -> vector<80x64xf32>
    %28 = arith.addf %21, %27 : vector<80x64xf32>
    %c0_23 = arith.constant 0 : index
    %c11 = arith.constant 11 : index
    %c0_24 = arith.constant 0 : index
    %29 = vector.load %arg1[%c0_23, %c11, %c0_24] : memref<1x110x16xf32, #tpu.memory_space<vmem>>, vector<1x80x16xf32>
    %30 = vector.shape_cast %29 : vector<1x80x16xf32> to vector<80x16xf32>
    %31 = arith.truncf %30 : vector<80x16xf32> to vector<80x16xbf16>
    %c4 = arith.constant 4 : index
    %c0_25 = arith.constant 0 : index
    %c0_26 = arith.constant 0 : index
    %32 = vector.load %arg2[%c4, %c0_25, %c0_26] : memref<9x16x64xbf16, #tpu.memory_space<vmem>>, vector<1x16x64xbf16>
    %33 = vector.shape_cast %32 : vector<1x16x64xbf16> to vector<16x64xbf16>
    %cst_27 = arith.constant dense<0.000000e+00> : vector<80x64xf32>
    %34 = tpu.matmul %31, %33, %cst_27 {dimension_numbers = #tpu.dot_dimension_numbers<[1], [0], [0], [1], [0, 0, 1, 1], [], []>} : vector<80x16xbf16>, vector<16x64xbf16>, vector<80x64xf32> -> vector<80x64xf32>
    %35 = arith.addf %28, %34 : vector<80x64xf32>
    %c0_28 = arith.constant 0 : index
    %c12 = arith.constant 12 : index
    %c0_29 = arith.constant 0 : index
    %36 = vector.load %arg1[%c0_28, %c12, %c0_29] : memref<1x110x16xf32, #tpu.memory_space<vmem>>, vector<1x80x16xf32>
    %37 = vector.shape_cast %36 : vector<1x80x16xf32> to vector<80x16xf32>
    %38 = arith.truncf %37 : vector<80x16xf32> to vector<80x16xbf16>
    %c5 = arith.constant 5 : index
    %c0_30 = arith.constant 0 : index
    %c0_31 = arith.constant 0 : index
    %39 = vector.load %arg2[%c5, %c0_30, %c0_31] : memref<9x16x64xbf16, #tpu.memory_space<vmem>>, vector<1x16x64xbf16>
    %40 = vector.shape_cast %39 : vector<1x16x64xbf16> to vector<16x64xbf16>
    %cst_32 = arith.constant dense<0.000000e+00> : vector<80x64xf32>
    %41 = tpu.matmul %38, %40, %cst_32 {dimension_numbers = #tpu.dot_dimension_numbers<[1], [0], [0], [1], [0, 0, 1, 1], [], []>} : vector<80x16xbf16>, vector<16x64xbf16>, vector<80x64xf32> -> vector<80x64xf32>
    %42 = arith.addf %35, %41 : vector<80x64xf32>
    %c0_33 = arith.constant 0 : index
    %c20 = arith.constant 20 : index
    %c0_34 = arith.constant 0 : index
    %43 = vector.load %arg1[%c0_33, %c20, %c0_34] : memref<1x110x16xf32, #tpu.memory_space<vmem>>, vector<1x80x16xf32>
    %44 = vector.shape_cast %43 : vector<1x80x16xf32> to vector<80x16xf32>
    %45 = arith.truncf %44 : vector<80x16xf32> to vector<80x16xbf16>
    %c6 = arith.constant 6 : index
    %c0_35 = arith.constant 0 : index
    %c0_36 = arith.constant 0 : index
    %46 = vector.load %arg2[%c6, %c0_35, %c0_36] : memref<9x16x64xbf16, #tpu.memory_space<vmem>>, vector<1x16x64xbf16>
    %47 = vector.shape_cast %46 : vector<1x16x64xbf16> to vector<16x64xbf16>
    %cst_37 = arith.constant dense<0.000000e+00> : vector<80x64xf32>
    %48 = tpu.matmul %45, %47, %cst_37 {dimension_numbers = #tpu.dot_dimension_numbers<[1], [0], [0], [1], [0, 0, 1, 1], [], []>} : vector<80x16xbf16>, vector<16x64xbf16>, vector<80x64xf32> -> vector<80x64xf32>
    %49 = arith.addf %42, %48 : vector<80x64xf32>
    %c0_38 = arith.constant 0 : index
    %c21 = arith.constant 21 : index
    %c0_39 = arith.constant 0 : index
    %50 = vector.load %arg1[%c0_38, %c21, %c0_39] : memref<1x110x16xf32, #tpu.memory_space<vmem>>, vector<1x80x16xf32>
    %51 = vector.shape_cast %50 : vector<1x80x16xf32> to vector<80x16xf32>
    %52 = arith.truncf %51 : vector<80x16xf32> to vector<80x16xbf16>
    %c7 = arith.constant 7 : index
    %c0_40 = arith.constant 0 : index
    %c0_41 = arith.constant 0 : index
    %53 = vector.load %arg2[%c7, %c0_40, %c0_41] : memref<9x16x64xbf16, #tpu.memory_space<vmem>>, vector<1x16x64xbf16>
    %54 = vector.shape_cast %53 : vector<1x16x64xbf16> to vector<16x64xbf16>
    %cst_42 = arith.constant dense<0.000000e+00> : vector<80x64xf32>
    %55 = tpu.matmul %52, %54, %cst_42 {dimension_numbers = #tpu.dot_dimension_numbers<[1], [0], [0], [1], [0, 0, 1, 1], [], []>} : vector<80x16xbf16>, vector<16x64xbf16>, vector<80x64xf32> -> vector<80x64xf32>
    %56 = arith.addf %49, %55 : vector<80x64xf32>
    %c0_43 = arith.constant 0 : index
    %c22 = arith.constant 22 : index
    %c0_44 = arith.constant 0 : index
    %57 = vector.load %arg1[%c0_43, %c22, %c0_44] : memref<1x110x16xf32, #tpu.memory_space<vmem>>, vector<1x80x16xf32>
    %58 = vector.shape_cast %57 : vector<1x80x16xf32> to vector<80x16xf32>
    %59 = arith.truncf %58 : vector<80x16xf32> to vector<80x16xbf16>
    %c8 = arith.constant 8 : index
    %c0_45 = arith.constant 0 : index
    %c0_46 = arith.constant 0 : index
    %60 = vector.load %arg2[%c8, %c0_45, %c0_46] : memref<9x16x64xbf16, #tpu.memory_space<vmem>>, vector<1x16x64xbf16>
    %61 = vector.shape_cast %60 : vector<1x16x64xbf16> to vector<16x64xbf16>
    %cst_47 = arith.constant dense<0.000000e+00> : vector<80x64xf32>
    %62 = tpu.matmul %59, %61, %cst_47 {dimension_numbers = #tpu.dot_dimension_numbers<[1], [0], [0], [1], [0, 0, 1, 1], [], []>} : vector<80x16xbf16>, vector<16x64xbf16>, vector<80x64xf32> -> vector<80x64xf32>
    %63 = arith.addf %56, %62 : vector<80x64xf32>
    %c0_48 = arith.constant 0 : index
    %c0_49 = arith.constant 0 : index
    %64 = vector.load %arg3[%c0_48, %c0_49] : memref<1x64xf32, #tpu.memory_space<vmem>>, vector<1x64xf32>
    %65 = vector.broadcast %64 : vector<1x64xf32> to vector<80x64xf32>
    %66 = arith.addf %63, %65 : vector<80x64xf32>
    %cst_50 = arith.constant 0.000000e+00 : f32
    %67 = vector.broadcast %cst_50 : f32 to vector<80x64xf32>
    %68 = arith.maximumf %66, %67 : vector<80x64xf32>
    %c0_51 = arith.constant 0 : index
    %c0_52 = arith.constant 0 : index
    %c0_53 = arith.constant 0 : index
    %69 = vector.load %arg4[%c0_51, %c0_52, %c0_53] : memref<1x80x64xf32, #tpu.memory_space<vmem>>, vector<1x80x64xf32>
    %70 = vector.shape_cast %69 : vector<1x80x64xf32> to vector<80x64xf32>
    %71 = vector.shape_cast %68 : vector<80x64xf32> to vector<1x80x64xf32>
    tpu.vector_store %arg4[%c0_51, %c0_52, %c0_53], %71 {strides = array<i32>} : memref<1x80x64xf32, #tpu.memory_space<vmem>>, vector<1x80x64xf32>,
    return
  }
  func.func @transform_0(%arg0: i32) -> (i32, i32, i32) {
    %c0_i32 = arith.constant 0 : i32
    %c0_i32_0 = arith.constant 0 : i32
    %c0_i32_1 = arith.constant 0 : i32
    return %arg0, %c0_i32, %c0_i32_0 : i32, i32, i32
  }
  func.func @transform_1(%arg0: i32) -> (i32, i32, i32) {
    %c0_i32 = arith.constant 0 : i32
    %c0_i32_0 = arith.constant 0 : i32
    %c0_i32_1 = arith.constant 0 : i32
    %c0_i32_2 = arith.constant 0 : i32
    return %c0_i32, %c0_i32_0, %c0_i32_1 : i32, i32, i32
  }
  func.func @transform_2(%arg0: i32) -> (i32, i32) {
    %c0_i32 = arith.constant 0 : i32
    %c0_i32_0 = arith.constant 0 : i32
    %c0_i32_1 = arith.constant 0 : i32
    return %c0_i32, %c0_i32_0 : i32, i32
  }
  func.func @transform_3(%arg0: i32) -> (i32, i32, i32) {
    %c0_i32 = arith.constant 0 : i32
    %c0_i32_0 = arith.constant 0 : i32
    %c0_i32_1 = arith.constant 0 : i32
    return %arg0, %c0_i32, %c0_i32_0 : i32, i32, i32
  }
}

module attributes {stable_mosaic.version = 11 : i64} {
  func.func @_fused_head_kernel(%arg0: memref<2x1024xbf16, #tpu.memory_space<vmem>>, %arg1: memref<1024x256xbf16, #tpu.memory_space<vmem>>, %arg2: memref<1x256xf32, #tpu.memory_space<vmem>>, %arg3: memref<256x256xbf16, #tpu.memory_space<vmem>>, %arg4: memref<1x256xf32, #tpu.memory_space<vmem>>, %arg5: memref<256x256xbf16, #tpu.memory_space<vmem>>, %arg6: memref<1x256xf32, #tpu.memory_space<vmem>>, %arg7: memref<256x128xbf16, #tpu.memory_space<vmem>>, %arg8: memref<256x128xbf16, #tpu.memory_space<vmem>>, %arg9: memref<1x128xf32, #tpu.memory_space<vmem>>, %arg10: memref<2x128xf32, #tpu.memory_space<vmem>>) attributes {dimension_semantics = [], scalar_prefetch = 0 : i64, scratch_operands = 0 : i64, tpu.core_type = #tpu.core_type<tc>} {
    %c0 = arith.constant 0 : index
    %c0_0 = arith.constant 0 : index
    %0 = vector.load %arg0[%c0, %c0_0] : memref<2x1024xbf16, #tpu.memory_space<vmem>>, vector<2x1024xbf16>
    %c0_1 = arith.constant 0 : index
    %c0_2 = arith.constant 0 : index
    %1 = vector.load %arg1[%c0_1, %c0_2] : memref<1024x256xbf16, #tpu.memory_space<vmem>>, vector<1024x256xbf16>
    %cst = arith.constant dense<0.000000e+00> : vector<2x256xf32>
    %2 = tpu.matmul %0, %1, %cst {dimension_numbers = #tpu.dot_dimension_numbers<[1], [0], [0], [1], [0, 0, 1, 1], [], []>} : vector<2x1024xbf16>, vector<1024x256xbf16>, vector<2x256xf32> -> vector<2x256xf32>
    %c0_3 = arith.constant 0 : index
    %c0_4 = arith.constant 0 : index
    %3 = vector.load %arg2[%c0_3, %c0_4] : memref<1x256xf32, #tpu.memory_space<vmem>>, vector<1x256xf32>
    %4 = vector.broadcast %3 : vector<1x256xf32> to vector<2x256xf32>
    %5 = arith.addf %2, %4 : vector<2x256xf32>
    %cst_5 = arith.constant 0.000000e+00 : f32
    %6 = vector.broadcast %cst_5 : f32 to vector<2x256xf32>
    %7 = arith.maximumf %5, %6 : vector<2x256xf32>
    %8 = arith.truncf %7 : vector<2x256xf32> to vector<2x256xbf16>
    %c0_6 = arith.constant 0 : index
    %c0_7 = arith.constant 0 : index
    %9 = vector.load %arg3[%c0_6, %c0_7] : memref<256x256xbf16, #tpu.memory_space<vmem>>, vector<256x256xbf16>
    %cst_8 = arith.constant dense<0.000000e+00> : vector<2x256xf32>
    %10 = tpu.matmul %8, %9, %cst_8 {dimension_numbers = #tpu.dot_dimension_numbers<[1], [0], [0], [1], [0, 0, 1, 1], [], []>} : vector<2x256xbf16>, vector<256x256xbf16>, vector<2x256xf32> -> vector<2x256xf32>
    %c0_9 = arith.constant 0 : index
    %c0_10 = arith.constant 0 : index
    %11 = vector.load %arg4[%c0_9, %c0_10] : memref<1x256xf32, #tpu.memory_space<vmem>>, vector<1x256xf32>
    %12 = vector.broadcast %11 : vector<1x256xf32> to vector<2x256xf32>
    %13 = arith.addf %10, %12 : vector<2x256xf32>
    %cst_11 = arith.constant 0.000000e+00 : f32
    %14 = vector.broadcast %cst_11 : f32 to vector<2x256xf32>
    %15 = arith.maximumf %13, %14 : vector<2x256xf32>
    %c0_12 = arith.constant 0 : index
    %c0_13 = arith.constant 0 : index
    %16 = vector.load %arg5[%c0_12, %c0_13] : memref<256x256xbf16, #tpu.memory_space<vmem>>, vector<256x256xbf16>
    %cst_14 = arith.constant dense<0.000000e+00> : vector<2x256xf32>
    %17 = tpu.matmul %8, %16, %cst_14 {dimension_numbers = #tpu.dot_dimension_numbers<[1], [0], [0], [1], [0, 0, 1, 1], [], []>} : vector<2x256xbf16>, vector<256x256xbf16>, vector<2x256xf32> -> vector<2x256xf32>
    %c0_15 = arith.constant 0 : index
    %c0_16 = arith.constant 0 : index
    %18 = vector.load %arg6[%c0_15, %c0_16] : memref<1x256xf32, #tpu.memory_space<vmem>>, vector<1x256xf32>
    %19 = vector.broadcast %18 : vector<1x256xf32> to vector<2x256xf32>
    %20 = arith.addf %17, %19 : vector<2x256xf32>
    %cst_17 = arith.constant 0.000000e+00 : f32
    %21 = vector.broadcast %cst_17 : f32 to vector<2x256xf32>
    %22 = arith.maximumf %20, %21 : vector<2x256xf32>
    %23 = arith.truncf %15 : vector<2x256xf32> to vector<2x256xbf16>
    %c0_18 = arith.constant 0 : index
    %c0_19 = arith.constant 0 : index
    %24 = vector.load %arg7[%c0_18, %c0_19] : memref<256x128xbf16, #tpu.memory_space<vmem>>, vector<256x128xbf16>
    %cst_20 = arith.constant dense<0.000000e+00> : vector<2x128xf32>
    %25 = tpu.matmul %23, %24, %cst_20 {dimension_numbers = #tpu.dot_dimension_numbers<[1], [0], [0], [1], [0, 0, 1, 1], [], []>} : vector<2x256xbf16>, vector<256x128xbf16>, vector<2x128xf32> -> vector<2x128xf32>
    %26 = arith.truncf %22 : vector<2x256xf32> to vector<2x256xbf16>
    %c0_21 = arith.constant 0 : index
    %c0_22 = arith.constant 0 : index
    %27 = vector.load %arg8[%c0_21, %c0_22] : memref<256x128xbf16, #tpu.memory_space<vmem>>, vector<256x128xbf16>
    %cst_23 = arith.constant dense<0.000000e+00> : vector<2x128xf32>
    %28 = tpu.matmul %26, %27, %cst_23 {dimension_numbers = #tpu.dot_dimension_numbers<[1], [0], [0], [1], [0, 0, 1, 1], [], []>} : vector<2x256xbf16>, vector<256x128xbf16>, vector<2x128xf32> -> vector<2x128xf32>
    %29 = arith.addf %25, %28 : vector<2x128xf32>
    %c0_24 = arith.constant 0 : index
    %c0_25 = arith.constant 0 : index
    %30 = vector.load %arg9[%c0_24, %c0_25] : memref<1x128xf32, #tpu.memory_space<vmem>>, vector<1x128xf32>
    %31 = vector.broadcast %30 : vector<1x128xf32> to vector<2x128xf32>
    %32 = arith.addf %29, %31 : vector<2x128xf32>
    %c0_26 = arith.constant 0 : index
    %c0_27 = arith.constant 0 : index
    %33 = vector.load %arg10[%c0_26, %c0_27] : memref<2x128xf32, #tpu.memory_space<vmem>>, vector<2x128xf32>
    tpu.vector_store %arg10[%c0_26, %c0_27], %32 {strides = array<i32>} : memref<2x128xf32, #tpu.memory_space<vmem>>, vector<2x128xf32>,
    return
  }
}

</mosaic_0001>

<llo_original>
// kernel: vgg_forward.4
$region0: #{vgg_forward.4}
  #allocation0 [shape = 'u32[]', space=smem, size = 0x4, offset = 0x4, fixed_abs, tag = 'smem constant byte address 0x4 - core index']
  #allocation1 [shape = 'u32[72,128]{1,0:T(1,128)}', space=vmem, size = 0x9000, scoped, tag = 'internal scratch']
  %s0 = inlined_call_operand.vmem [shape: f32[2,110,16], index: 0, kind: input, shape index: {}]
  %s1 = inlined_call_operand.vmem [shape: bf16[9,16,64], index: 1, kind: input, shape index: {}]
  %s2 = inlined_call_operand.vmem [shape: f32[1,64], index: 2, kind: input, shape index: {}]
  %s3 = inlined_call_operand.vmem [shape: f32[2,80,64], index: 3, kind: output, shape index: {}]
  %s4 = sld [smem:[#allocation0]]
  $region45: #{vgg_forward.4} parent=0
    _
  %s6 = ssub.s32 1, %s4
  %s7 = scalar_select 0, %s6, %s4
  loop: start=0, step=1, limit=4
  $region2: #{vgg_forward.4} parent=0 // loop_pre_header
    _
  $region3: #{vgg_forward.4} parent=0 // loop_header
    %s9 = sphi 0, %s13
    %p10 = scmp.ge.s32.totalorder %s9, 4
    %s19 = sphi 0, %s21
    %s22 = sphi 0, %s19
    %s23 = sphi 0, %s22
    %s39 = sphi 0, %s23
    %s43 = sphi 0, %s43
    %s45 = sphi 0, %s43
    %s46 = sphi 0, %s45
    %s60 = sphi 0, %s46
    %s64 = sphi 0, %s64
    %s66 = sphi 0, %s64
    %s67 = sphi 0, %s66
    %s81 = sphi 0, %s67
    %s87 = sphi 0, %s89
    %s90 = sphi 0, %s87
    %s91 = sphi 0, %s90
    %s107 = sphi 0, %s91
  $region4: #{vgg_forward.4} parent=0 // loop_header_branch
    %12 = sbr.rel (%p10) target = $region8
  $region5: #{vgg_forward.4} parent=0 // loop_body
    %s14 = ssub.s32 %s9, 1
    %s15 = ssub.s32 %s9, 2
    %s16 = sadd.s32 %s9, 1
    %s17 = ssub.s32 %s9, %s16
    %p18 = scmp.eq.s32.totalorder %s17, 0
    %s20 = sadd.s32 %s19, 1
    %s21 = scalar_select %p18, %s19, %s20
    %p24 = pneg %p18
    %p25 = scmp.eq.s32.totalorder %s9, 1
    %p26 = por %p24, %p25
    %p27 = scmp.ne.s32.totalorder %s19, %s22
    %p28 = scmp.eq.s32.totalorder %s9, 0
    %p29 = por %p27, %p28
    %p30 = scmp.ne.s32.totalorder %s19, %s22
    %p31 = scmp.eq.s32.totalorder %s14, 1
    %p32 = por %p30, %p31
    %p33 = scmp.ne.s32.totalorder %s22, %s23
    %p34 = scmp.eq.s32.totalorder %s14, 0
    %p35 = por %p33, %p34
    %p36 = scmp.ne.s32.totalorder %s22, %s23
    %p37 = scmp.eq.s32.totalorder %s15, 1
    %p38 = por %p36, %p37
    %p40 = scmp.ne.s32.totalorder %s23, %s39
    %p41 = scmp.eq.s32.totalorder %s15, 0
    %p42 = por %p40, %p41
    %s44 = sadd.s32 %s43, 1
    %p47 = scmp.eq.s32.totalorder %s9, 1
    %p48 = scmp.ne.s32.totalorder %s43, %s45
    %p49 = scmp.eq.s32.totalorder %s9, 0
    %p50 = por %p48, %p49
    %p51 = scmp.ne.s32.totalorder %s43, %s45
    %p52 = scmp.eq.s32.totalorder %s14, 1
    %p53 = por %p51, %p52
    %p54 = scmp.ne.s32.totalorder %s45, %s46
    %p55 = scmp.eq.s32.totalorder %s14, 0
    %p56 = por %p54, %p55
    %p57 = scmp.ne.s32.totalorder %s45, %s46
    %p58 = scmp.eq.s32.totalorder %s15, 1
    %p59 = por %p57, %p58
    %p61 = scmp.ne.s32.totalorder %s46, %s60
    %p62 = scmp.eq.s32.totalorder %s15, 0
    %p63 = por %p61, %p62
    %s65 = sadd.s32 %s64, 1
    %p68 = scmp.eq.s32.totalorder %s9, 1
    %p69 = scmp.ne.s32.totalorder %s64, %s66
    %p70 = scmp.eq.s32.totalorder %s9, 0
    %p71 = por %p69, %p70
    %p72 = scmp.ne.s32.totalorder %s64, %s66
    %p73 = scmp.eq.s32.totalorder %s14, 1
    %p74 = por %p72, %p73
    %p75 = scmp.ne.s32.totalorder %s66, %s67
    %p76 = scmp.eq.s32.totalorder %s14, 0
    %p77 = por %p75, %p76
    %p78 = scmp.ne.s32.totalorder %s66, %s67
    %p79 = scmp.eq.s32.totalorder %s15, 1
    %p80 = por %p78, %p79
    %p82 = scmp.ne.s32.totalorder %s67, %s81
    %p83 = scmp.eq.s32.totalorder %s15, 0
    %p84 = por %p82, %p83
    %s85 = ssub.s32 %s9, %s16
    %p86 = scmp.eq.s32.totalorder %s85, 0
    %s88 = sadd.s32 %s87, 1
    %s89 = scalar_select %p86, %s87, %s88
    %p92 = pneg %p86
    %p93 = scmp.eq.s32.totalorder %s9, 1
    %p94 = por %p92, %p93
    %p95 = scmp.ne.s32.totalorder %s87, %s90
    %p96 = scmp.eq.s32.totalorder %s9, 0
    %p97 = por %p95, %p96
    %p98 = scmp.ne.s32.totalorder %s87, %s90
    %p99 = scmp.eq.s32.totalorder %s14, 1
    %p100 = por %p98, %p99
    %p101 = scmp.ne.s32.totalorder %s90, %s91
    %p102 = scmp.eq.s32.totalorder %s14, 0
    %p103 = por %p101, %p102
    %p104 = scmp.ne.s32.totalorder %s90, %s91
    %p105 = scmp.eq.s32.totalorder %s15, 1
    %p106 = por %p104, %p105
    %p108 = scmp.ne.s32.totalorder %s91, %s107
    %p109 = scmp.eq.s32.totalorder %s15, 0
    %p110 = por %p108, %p109
    %p111 = scmp.le.s32.totalorder 1, %s9
    %p112 = scmp.lt.s32.totalorder %s9, 3
    %p113 = pnand %p111, %p112
    %p114 = pneg %p113
    // Predicated region
    $region9: #{vgg_forward.4} parent=5 // pred_check
      _
    $region10: #{vgg_forward.4} parent=5 // pred_check_branch
      %116 = sbr.rel (%p113) target = $region12
    $region11: #{vgg_forward.4} parent=5 // pred_region
      %s117 = ssub.s32 %s9, 1
      // Predicated region
      $region13: #{vgg_forward.4} parent=11 // pred_check
        %p118 = pneg %p56
      $region14: #{vgg_forward.4} parent=11 // pred_check_branch
        %120 = sbr.rel (%p118) target = $region16
      $region15: #{vgg_forward.4} parent=11 // pred_region
        _
      $region16: #{vgg_forward.4} parent=11 // pred_fallthru
        _
      // Predicated region
      $region17: #{vgg_forward.4} parent=11 // pred_check
        %p121 = pneg %p77
      $region18: #{vgg_forward.4} parent=11 // pred_check_branch
        %123 = sbr.rel (%p121) target = $region20
      $region19: #{vgg_forward.4} parent=11 // pred_region
        _
      $region20: #{vgg_forward.4} parent=11 // pred_fallthru
        _
    $region12: #{vgg_forward.4} parent=5 // pred_fallthru
      _
    %p124 = scmp.lt.s32.totalorder %s9, 2
    // Predicated region
    $region21: #{vgg_forward.4} parent=5 // pred_check
      %p125 = pneg %p124
    $region22: #{vgg_forward.4} parent=5 // pred_check_branch
      %127 = sbr.rel (%p125) target = $region24
    $region23: #{vgg_forward.4} parent=5 // pred_region
      // Predicated region
      $region25: #{vgg_forward.4} parent=23 // pred_check
        %p128 = pneg %p29
      $region26: #{vgg_forward.4} parent=23 // pred_check_branch
        %130 = sbr.rel (%p128) target = $region28
      $region27: #{vgg_forward.4} parent=23 // pred_region
        %p131 = scmp.lt.s32.totalorder %s9, 1
        %s132 = scalar_select %p131, %s9, 1
        %s133 = smul.addr %s132, 14
        %s134 = smul.addr %s133, 8
        %s135 = scalar_lea.vmem %s0, %s134
      $region28: #{vgg_forward.4} parent=23 // pred_fallthru
        _
    $region24: #{vgg_forward.4} parent=5 // pred_fallthru
      _
    %p136 = scmp.le.s32.totalorder 1, %s9
    %p137 = scmp.lt.s32.totalorder %s9, 3
    %p138 = pnand %p136, %p137
    %p139 = pneg %p138
    // Predicated region
    $region29: #{vgg_forward.4} parent=5 // pred_check
      _
    $region30: #{vgg_forward.4} parent=5 // pred_check_branch
      %141 = sbr.rel (%p138) target = $region32
    $region31: #{vgg_forward.4} parent=5 // pred_region
      %s142 = ssub.s32 %s9, 1
      %p143 = scmp.lt.s32.totalorder %s14, 1
      %s144 = scalar_select %p143, %s14, 1
      %s145 = smul.addr %s144, 14
      %s146 = smul.addr %s145, 8
      %s147 = scalar_lea.vmem %s0, %s146
      %p148 = pneg %p35
      %p149 = pneg %p32
      %p150 = pneg %p56
      %p151 = pneg %p53
      %p152 = pneg %p77
      %p153 = pneg %p74
      %p154 = pneg %p103
      %p155 = pneg %p100
      %p156 = scmp.lt.s32.totalorder %s14, 1
      %s157 = scalar_select %p156, %s14, 1
      %s158 = smul.addr %s157, 10
      %s159 = smul.addr %s158, 8
      %s160 = scalar_lea.vmem %s3, %s159
      %p161 = scmp.lt.s32.totalorder %s14, 1
      %s162 = scalar_select %p161, %s14, 1
      %s163 = smul.addr %s162, 14
      %s164 = smul.addr %s163, 8
      %s165 = scalar_lea.vmem %s0, %s164
      %p166 = scmp.lt.s32.totalorder %s14, 1
      %s167 = scalar_select %p166, %s14, 1
      %s168 = smul.addr %s167, 10
      %s169 = smul.addr %s168, 8
      %s170 = scalar_lea.vmem %s3, %s169
      %v172 = vld [vmem:[%s165] sm:$0xff]
      %v173 = vld [vmem:[%s165 + $0x8] sm:$0xff]
      %v174 = vld [vmem:[%s165 + $0x10] sm:$0xff]
      %v175 = vld [vmem:[%s165 + $0x18] sm:$0xff]
      %v176 = vld [vmem:[%s165 + $0x20] sm:$0xff]
      %v177 = vld [vmem:[%s165 + $0x28] sm:$0xff]
      %v178 = vld [vmem:[%s165 + $0x30] sm:$0xff]
      %v179 = vld [vmem:[%s165 + $0x38] sm:$0xff]
      %v180 = vld [vmem:[%s165 + $0x40] sm:$0xff]
      %v181 = vld [vmem:[%s165 + $0x48] sm:$0xff]
      %v182 = vpack.c.bf16 %v173, %v172
      %v183 = vpack.c.bf16 %v175, %v174
      %v184 = vpack.c.bf16 %v177, %v176
      %v185 = vpack.c.bf16 %v179, %v178
      %v186 = vpack.c.bf16 %v181, %v180
      %v187 = vld [vmem:[%s1] sm:$0xf]
      %v188 = vld [vmem:[%s1 + $0x4] sm:$0xf]
      %v189 = vld [vmem:[%s165 + $0x1] sm:$0xff]
      %v190 = vld [vmem:[%s165 + $0x9] sm:$0xff]
      %v191 = vld [vmem:[%s165 + $0x11] sm:$0xff]
      %v192 = vld [vmem:[%s165 + $0x19] sm:$0xff]
      %v193 = vld [vmem:[%s165 + $0x21] sm:$0xff]
      %v194 = vld [vmem:[%s165 + $0x29] sm:$0xff]
      %v195 = vld [vmem:[%s165 + $0x31] sm:$0xff]
      %v196 = vld [vmem:[%s165 + $0x39] sm:$0xff]
      %v197 = vld [vmem:[%s165 + $0x41] sm:$0xff]
      %v198 = vld [vmem:[%s165 + $0x49] sm:$0xff]
      %v199 = vpack.c.bf16 %v190, %v189
      %v200 = vpack.c.bf16 %v192, %v191
      %v201 = vpack.c.bf16 %v194, %v193
      %v202 = vpack.c.bf16 %v196, %v195
      %v203 = vpack.c.bf16 %v198, %v197
      %s204 = scalar_lea.vmem %s1, 8
      %v205 = vld [vmem:[%s204] sm:$0xf]
      %v206 = vld [vmem:[%s204 + $0x4] sm:$0xf]
      %v209 = vunpack.c.l.b16 %v205
      %v210 = vunpack.c.l.b16 %v206
      %v211 = vpack.c.b16 %v210, %v209
      %vm213 = vcmask 130048
      %v215 = vsel %vm213, %v199, 0
      %v218 = vsel %vm213, %v200, 0
      %v221 = vsel %vm213, %v201, 0
      %v224 = vsel %vm213, %v202, 0
      %v227 = vsel %vm213, %v203, 0
      %229 = vmatpush.bf16.msra.mxu0 0
      %230 = vmatpush.bf16.msra.mxu0 0
      %231 = vmatpush.bf16.msra.mxu0 0
      %232 = vmatpush.bf16.msra.mxu0 0
      %233 = vmatpush.bf16.msra.mxu0 0
      %234 = vmatpush.bf16.msra.mxu0 0
      %235 = vmatpush.bf16.msra.mxu0 0
      %236 = vmatpush.bf16.msra.mxu0 %v211
      %237 = vmatmul.bf16.gmra.mxu0 %v215
      %v238 = vpop.f32.mrf.mxu0
      %v239 = vadd.f32 0.0, %v238
      %v240 = vpop.f32.mrf.mxu0
      %v241 = vadd.f32 0.0, %v240
      %242 = vmatmul.bf16.gmra.mxu0 %v218
      %v243 = vpop.f32.mrf.mxu0
      %v244 = vadd.f32 0.0, %v243
      %v245 = vpop.f32.mrf.mxu0
      %v246 = vadd.f32 0.0, %v245
      %247 = vmatmul.bf16.gmra.mxu0 %v221
      %v248 = vpop.f32.mrf.mxu0
      %v249 = vadd.f32 0.0, %v248
      %v250 = vpop.f32.mrf.mxu0
      %v251 = vadd.f32 0.0, %v250
      %252 = vmatmul.bf16.gmra.mxu0 %v224
      %v253 = vpop.f32.mrf.mxu0
      %v254 = vadd.f32 0.0, %v253
      %v255 = vpop.f32.mrf.mxu0
      %v256 = vadd.f32 0.0, %v255
      %257 = vmatmul.bf16.gmra.mxu0 %v227
      %v258 = vpop.f32.mrf.mxu0
      %v259 = vadd.f32 0.0, %v258
      %v260 = vpop.f32.mrf.mxu0
      %v261 = vadd.f32 0.0, %v260
      %262 = vdwg.mxu0
      %v265 = vunpack.c.l.b16 %v187
      %v266 = vunpack.c.l.b16 %v188
      %v267 = vpack.c.b16 %v266, %v265
      %v270 = vsel %vm213, %v182, 0
      %v273 = vsel %vm213, %v183, 0
      %v276 = vsel %vm213, %v184, 0
      %v279 = vsel %vm213, %v185, 0
      %v282 = vsel %vm213, %v186, 0
      %284 = vmatpush.bf16.msra.mxu0 0
      %285 = vmatpush.bf16.msra.mxu0 0
      %286 = vmatpush.bf16.msra.mxu0 0
      %287 = vmatpush.bf16.msra.mxu0 0
      %288 = vmatpush.bf16.msra.mxu0 0
      %289 = vmatpush.bf16.msra.mxu0 0
      %290 = vmatpush.bf16.msra.mxu0 0
      %291 = vmatpush.bf16.msra.mxu0 %v267
      %292 = vmatmul.bf16.gmra.mxu0 %v270
      %v293 = vpop.f32.mrf.mxu0
      %v294 = vadd.f32 %v239, %v293
      %v295 = vpop.f32.mrf.mxu0
      %v296 = vadd.f32 %v241, %v295
      %297 = vmatmul.bf16.gmra.mxu0 %v273
      %v298 = vpop.f32.mrf.mxu0
      %v299 = vadd.f32 %v244, %v298
      %v300 = vpop.f32.mrf.mxu0
      %v301 = vadd.f32 %v246, %v300
      %302 = vmatmul.bf16.gmra.mxu0 %v276
      %v303 = vpop.f32.mrf.mxu0
      %v304 = vadd.f32 %v249, %v303
      %v305 = vpop.f32.mrf.mxu0
      %v306 = vadd.f32 %v251, %v305
      %307 = vmatmul.bf16.gmra.mxu0 %v279
      %v308 = vpop.f32.mrf.mxu0
      %v309 = vadd.f32 %v254, %v308
      %v310 = vpop.f32.mrf.mxu0
      %v311 = vadd.f32 %v256, %v310
      %312 = vmatmul.bf16.gmra.mxu0 %v282
      %v313 = vpop.f32.mrf.mxu0
      %v314 = vadd.f32 %v259, %v313
      %v315 = vpop.f32.mrf.mxu0
      %v316 = vadd.f32 %v261, %v315
      %317 = vdwg.mxu0
      %v318 = vld [vmem:[%s165 + $0x2] sm:$0xff]
      %v319 = vld [vmem:[%s165 + $0xa] sm:$0xff]
      %v320 = vld [vmem:[%s165 + $0x12] sm:$0xff]
      %v321 = vld [vmem:[%s165 + $0x1a] sm:$0xff]
      %v322 = vld [vmem:[%s165 + $0x22] sm:$0xff]
      %v323 = vld [vmem:[%s165 + $0x2a] sm:$0xff]
      %v324 = vld [vmem:[%s165 + $0x32] sm:$0xff]
      %v325 = vld [vmem:[%s165 + $0x3a] sm:$0xff]
      %v326 = vld [vmem:[%s165 + $0x42] sm:$0xff]
      %v327 = vld [vmem:[%s165 + $0x4a] sm:$0xff]
      %v328 = vpack.c.bf16 %v319, %v318
      %v329 = vpack.c.bf16 %v321, %v320
      %v330 = vpack.c.bf16 %v323, %v322
      %v331 = vpack.c.bf16 %v325, %v324
      %v332 = vpack.c.bf16 %v327, %v326
      %s333 = scalar_lea.vmem %s1, 16
      %v334 = vld [vmem:[%s333] sm:$0xf]
      %v335 = vld [vmem:[%s333 + $0x4] sm:$0xf]
      %v338 = vunpack.c.l.b16 %v334
      %v339 = vunpack.c.l.b16 %v335
      %v340 = vpack.c.b16 %v339, %v338
      %v343 = vsel %vm213, %v328, 0
      %v346 = vsel %vm213, %v329, 0
      %v349 = vsel %vm213, %v330, 0
      %v352 = vsel %vm213, %v331, 0
      %v355 = vsel %vm213, %v332, 0
      %357 = vmatpush.bf16.msra.mxu0 0
      %358 = vmatpush.bf16.msra.mxu0 0
      %359 = vmatpush.bf16.msra.mxu0 0
      %360 = vmatpush.bf16.msra.mxu0 0
      %361 = vmatpush.bf16.msra.mxu0 0
      %362 = vmatpush.bf16.msra.mxu0 0
      %363 = vmatpush.bf16.msra.mxu0 0
      %364 = vmatpush.bf16.msra.mxu0 %v340
      %365 = vmatmul.bf16.gmra.mxu0 %v343
      %v366 = vpop.f32.mrf.mxu0
      %v367 = vadd.f32 0.0, %v366
      %v368 = vpop.f32.mrf.mxu0
      %v369 = vadd.f32 0.0, %v368
      %370 = vmatmul.bf16.gmra.mxu0 %v346
      %v371 = vpop.f32.mrf.mxu0
      %v372 = vadd.f32 0.0, %v371
      %v373 = vpop.f32.mrf.mxu0
      %v374 = vadd.f32 0.0, %v373
      %375 = vmatmul.bf16.gmra.mxu0 %v349
      %v376 = vpop.f32.mrf.mxu0
      %v377 = vadd.f32 0.0, %v376
      %v378 = vpop.f32.mrf.mxu0
      %v379 = vadd.f32 0.0, %v378
      %380 = vmatmul.bf16.gmra.mxu0 %v352
      %v381 = vpop.f32.mrf.mxu0
      %v382 = vadd.f32 0.0, %v381
      %v383 = vpop.f32.mrf.mxu0
      %v384 = vadd.f32 0.0, %v383
      %385 = vmatmul.bf16.gmra.mxu0 %v355
      %v386 = vpop.f32.mrf.mxu0
      %v387 = vadd.f32 0.0, %v386
      %v388 = vpop.f32.mrf.mxu0
      %v389 = vadd.f32 0.0, %v388
      %390 = vdwg.mxu0
      %v391 = vadd.f32 %v294, %v367
      %v392 = vadd.f32 %v296, %v369
      %v393 = vadd.f32 %v299, %v372
      %v394 = vadd.f32 %v301, %v374
      %v395 = vadd.f32 %v304, %v377
      %v396 = vadd.f32 %v306, %v379
      %v397 = vadd.f32 %v309, %v382
      %v398 = vadd.f32 %v311, %v384
      %v399 = vadd.f32 %v314, %v387
      %v400 = vadd.f32 %v316, %v389
      %v401 = vld [vmem:[%s165 + $0xa] sm:$0xff]
      %v402 = vld [vmem:[%s165 + $0x12] sm:$0xff]
      %v403 = vld [vmem:[%s165 + $0x1a] sm:$0xff]
      %v404 = vld [vmem:[%s165 + $0x22] sm:$0xff]
      %v405 = vld [vmem:[%s165 + $0x2a] sm:$0xff]
      %v406 = vld [vmem:[%s165 + $0x32] sm:$0xff]
      %v407 = vld [vmem:[%s165 + $0x3a] sm:$0xff]
      %v408 = vld [vmem:[%s165 + $0x42] sm:$0xff]
      %v409 = vld [vmem:[%s165 + $0x4a] sm:$0xff]
      %v410 = vld [vmem:[%s165 + $0x52] sm:$0xff]
      %v411 = vpack.c.bf16 %v402, %v401
      %v412 = vpack.c.bf16 %v404, %v403
      %v413 = vpack.c.bf16 %v406, %v405
      %v414 = vpack.c.bf16 %v408, %v407
      %v415 = vpack.c.bf16 %v410, %v409
      %s416 = scalar_lea.vmem %s1, 24
      %v417 = vld [vmem:[%s416] sm:$0xf]
      %v418 = vld [vmem:[%s416 + $0x4] sm:$0xf]
      %v421 = vunpack.c.l.b16 %v417
      %v422 = vunpack.c.l.b16 %v418
      %v423 = vpack.c.b16 %v422, %v421
      %v426 = vsel %vm213, %v411, 0
      %v429 = vsel %vm213, %v412, 0
      %v432 = vsel %vm213, %v413, 0
      %v435 = vsel %vm213, %v414, 0
      %v438 = vsel %vm213, %v415, 0
      %440 = vmatpush.bf16.msra.mxu0 0
      %441 = vmatpush.bf16.msra.mxu0 0
      %442 = vmatpush.bf16.msra.mxu0 0
      %443 = vmatpush.bf16.msra.mxu0 0
      %444 = vmatpush.bf16.msra.mxu0 0
      %445 = vmatpush.bf16.msra.mxu0 0
      %446 = vmatpush.bf16.msra.mxu0 0
      %447 = vmatpush.bf16.msra.mxu0 %v423
      %448 = vmatmul.bf16.gmra.mxu0 %v426
      %v449 = vpop.f32.mrf.mxu0
      %v450 = vadd.f32 0.0, %v449
      %v451 = vpop.f32.mrf.mxu0
      %v452 = vadd.f32 0.0, %v451
      %453 = vmatmul.bf16.gmra.mxu0 %v429
      %v454 = vpop.f32.mrf.mxu0
      %v455 = vadd.f32 0.0, %v454
      %v456 = vpop.f32.mrf.mxu0
      %v457 = vadd.f32 0.0, %v456
      %458 = vmatmul.bf16.gmra.mxu0 %v432
      %v459 = vpop.f32.mrf.mxu0
      %v460 = vadd.f32 0.0, %v459
      %v461 = vpop.f32.mrf.mxu0
      %v462 = vadd.f32 0.0, %v461
      %463 = vmatmul.bf16.gmra.mxu0 %v435
      %v464 = vpop.f32.mrf.mxu0
      %v465 = vadd.f32 0.0, %v464
      %v466 = vpop.f32.mrf.mxu0
      %v467 = vadd.f32 0.0, %v466
      %468 = vmatmul.bf16.gmra.mxu0 %v438
      %v469 = vpop.f32.mrf.mxu0
      %v470 = vadd.f32 0.0, %v469
      %v471 = vpop.f32.mrf.mxu0
      %v472 = vadd.f32 0.0, %v471
      %473 = vdwg.mxu0
      %v474 = vadd.f32 %v391, %v450
      %v475 = vadd.f32 %v392, %v452
      %v476 = vadd.f32 %v393, %v455
      %v477 = vadd.f32 %v394, %v457
      %v478 = vadd.f32 %v395, %v460
      %v479 = vadd.f32 %v396, %v462
      %v480 = vadd.f32 %v397, %v465
      %v481 = vadd.f32 %v398, %v467
      %v482 = vadd.f32 %v399, %v470
      %v483 = vadd.f32 %v400, %v472
      %v484 = vld [vmem:[%s165 + $0xb] sm:$0xff]
      %v485 = vld [vmem:[%s165 + $0x13] sm:$0xff]
      %v486 = vld [vmem:[%s165 + $0x1b] sm:$0xff]
      %v487 = vld [vmem:[%s165 + $0x23] sm:$0xff]
      %v488 = vld [vmem:[%s165 + $0x2b] sm:$0xff]
      %v489 = vld [vmem:[%s165 + $0x33] sm:$0xff]
      %v490 = vld [vmem:[%s165 + $0x3b] sm:$0xff]
      %v491 = vld [vmem:[%s165 + $0x43] sm:$0xff]
      %v492 = vld [vmem:[%s165 + $0x4b] sm:$0xff]
      %v493 = vld [vmem:[%s165 + $0x53] sm:$0xff]
      %v494 = vpack.c.bf16 %v485, %v484
      %v495 = vpack.c.bf16 %v487, %v486
      %v496 = vpack.c.bf16 %v489, %v488
      %v497 = vpack.c.bf16 %v491, %v490
      %v498 = vpack.c.bf16 %v493, %v492
      %s499 = scalar_lea.vmem %s1, 32
      %v500 = vld [vmem:[%s499] sm:$0xf]
      %v501 = vld [vmem:[%s499 + $0x4] sm:$0xf]
      %v504 = vunpack.c.l.b16 %v500
      %v505 = vunpack.c.l.b16 %v501
      %v506 = vpack.c.b16 %v505, %v504
      %v509 = vsel %vm213, %v494, 0
      %v512 = vsel %vm213, %v495, 0
      %v515 = vsel %vm213, %v496, 0
      %v518 = vsel %vm213, %v497, 0
      %v521 = vsel %vm213, %v498, 0
      %523 = vmatpush.bf16.msra.mxu0 0
      %524 = vmatpush.bf16.msra.mxu0 0
      %525 = vmatpush.bf16.msra.mxu0 0
      %526 = vmatpush.bf16.msra.mxu0 0
      %527 = vmatpush.bf16.msra.mxu0 0
      %528 = vmatpush.bf16.msra.mxu0 0
      %529 = vmatpush.bf16.msra.mxu0 0
      %530 = vmatpush.bf16.msra.mxu0 %v506
      %531 = vmatmul.bf16.gmra.mxu0 %v509
      %v532 = vpop.f32.mrf.mxu0
      %v533 = vadd.f32 0.0, %v532
      %v534 = vpop.f32.mrf.mxu0
      %v535 = vadd.f32 0.0, %v534
      %536 = vmatmul.bf16.gmra.mxu0 %v512
      %v537 = vpop.f32.mrf.mxu0
      %v538 = vadd.f32 0.0, %v537
      %v539 = vpop.f32.mrf.mxu0
      %v540 = vadd.f32 0.0, %v539
      %541 = vmatmul.bf16.gmra.mxu0 %v515
      %v542 = vpop.f32.mrf.mxu0
      %v543 = vadd.f32 0.0, %v542
      %v544 = vpop.f32.mrf.mxu0
      %v545 = vadd.f32 0.0, %v544
      %546 = vmatmul.bf16.gmra.mxu0 %v518
      %v547 = vpop.f32.mrf.mxu0
      %v548 = vadd.f32 0.0, %v547
      %v549 = vpop.f32.mrf.mxu0
      %v550 = vadd.f32 0.0, %v549
      %551 = vmatmul.bf16.gmra.mxu0 %v521
      %v552 = vpop.f32.mrf.mxu0
      %v553 = vadd.f32 0.0, %v552
      %v554 = vpop.f32.mrf.mxu0
      %v555 = vadd.f32 0.0, %v554
      %556 = vdwg.mxu0
      %v557 = vadd.f32 %v474, %v533
      %v558 = vadd.f32 %v475, %v535
      %v559 = vadd.f32 %v476, %v538
      %v560 = vadd.f32 %v477, %v540
      %v561 = vadd.f32 %v478, %v543
      %v562 = vadd.f32 %v479, %v545
      %v563 = vadd.f32 %v480, %v548
      %v564 = vadd.f32 %v481, %v550
      %v565 = vadd.f32 %v482, %v553
      %v566 = vadd.f32 %v483, %v555
      %v567 = vld [vmem:[%s165 + $0xc] sm:$0xff]
      %v568 = vld [vmem:[%s165 + $0x14] sm:$0xff]
      %v569 = vld [vmem:[%s165 + $0x1c] sm:$0xff]
      %v570 = vld [vmem:[%s165 + $0x24] sm:$0xff]
      %v571 = vld [vmem:[%s165 + $0x2c] sm:$0xff]
      %v572 = vld [vmem:[%s165 + $0x34] sm:$0xff]
      %v573 = vld [vmem:[%s165 + $0x3c] sm:$0xff]
      %v574 = vld [vmem:[%s165 + $0x44] sm:$0xff]
      %v575 = vld [vmem:[%s165 + $0x4c] sm:$0xff]
      %v576 = vld [vmem:[%s165 + $0x54] sm:$0xff]
      %v577 = vpack.c.bf16 %v568, %v567
      %v578 = vpack.c.bf16 %v570, %v569
      %v579 = vpack.c.bf16 %v572, %v571
      %v580 = vpack.c.bf16 %v574, %v573
      %v581 = vpack.c.bf16 %v576, %v575
      %s582 = scalar_lea.vmem %s1, 40
      %v583 = vld [vmem:[%s582] sm:$0xf]
      %v584 = vld [vmem:[%s582 + $0x4] sm:$0xf]
      %v587 = vunpack.c.l.b16 %v583
      %v588 = vunpack.c.l.b16 %v584
      %v589 = vpack.c.b16 %v588, %v587
      %v592 = vsel %vm213, %v577, 0
      %v595 = vsel %vm213, %v578, 0
      %v598 = vsel %vm213, %v579, 0
      %v601 = vsel %vm213, %v580, 0
      %v604 = vsel %vm213, %v581, 0
      %606 = vmatpush.bf16.msra.mxu0 0
      %607 = vmatpush.bf16.msra.mxu0 0
      %608 = vmatpush.bf16.msra.mxu0 0
      %609 = vmatpush.bf16.msra.mxu0 0
      %610 = vmatpush.bf16.msra.mxu0 0
      %611 = vmatpush.bf16.msra.mxu0 0
      %612 = vmatpush.bf16.msra.mxu0 0
      %613 = vmatpush.bf16.msra.mxu0 %v589
      %614 = vmatmul.bf16.gmra.mxu0 %v592
      %v615 = vpop.f32.mrf.mxu0
      %v616 = vadd.f32 0.0, %v615
      %v617 = vpop.f32.mrf.mxu0
      %v618 = vadd.f32 0.0, %v617
      %619 = vmatmul.bf16.gmra.mxu0 %v595
      %v620 = vpop.f32.mrf.mxu0
      %v621 = vadd.f32 0.0, %v620
      %v622 = vpop.f32.mrf.mxu0
      %v623 = vadd.f32 0.0, %v622
      %624 = vmatmul.bf16.gmra.mxu0 %v598
      %v625 = vpop.f32.mrf.mxu0
      %v626 = vadd.f32 0.0, %v625
      %v627 = vpop.f32.mrf.mxu0
      %v628 = vadd.f32 0.0, %v627
      %629 = vmatmul.bf16.gmra.mxu0 %v601
      %v630 = vpop.f32.mrf.mxu0
      %v631 = vadd.f32 0.0, %v630
      %v632 = vpop.f32.mrf.mxu0
      %v633 = vadd.f32 0.0, %v632
      %634 = vmatmul.bf16.gmra.mxu0 %v604
      %v635 = vpop.f32.mrf.mxu0
      %v636 = vadd.f32 0.0, %v635
      %v637 = vpop.f32.mrf.mxu0
      %v638 = vadd.f32 0.0, %v637
      %639 = vdwg.mxu0
      %v640 = vadd.f32 %v557, %v616
      %v641 = vadd.f32 %v558, %v618
      %v642 = vadd.f32 %v559, %v621
      %v643 = vadd.f32 %v560, %v623
      %v644 = vadd.f32 %v561, %v626
      %v645 = vadd.f32 %v562, %v628
      %v646 = vadd.f32 %v563, %v631
      %v647 = vadd.f32 %v564, %v633
      %v648 = vadd.f32 %v565, %v636
      %v649 = vadd.f32 %v566, %v638
      %v650 = vld [vmem:[%s165 + $0x14] sm:$0xff]
      %v651 = vld [vmem:[%s165 + $0x1c] sm:$0xff]
      %v652 = vld [vmem:[%s165 + $0x24] sm:$0xff]
      %v653 = vld [vmem:[%s165 + $0x2c] sm:$0xff]
      %v654 = vld [vmem:[%s165 + $0x34] sm:$0xff]
      %v655 = vld [vmem:[%s165 + $0x3c] sm:$0xff]
      %v656 = vld [vmem:[%s165 + $0x44] sm:$0xff]
      %v657 = vld [vmem:[%s165 + $0x4c] sm:$0xff]
      %v658 = vld [vmem:[%s165 + $0x54] sm:$0xff]
      %v659 = vld [vmem:[%s165 + $0x5c] sm:$0xff]
      %v660 = vpack.c.bf16 %v651, %v650
      %v661 = vpack.c.bf16 %v653, %v652
      %v662 = vpack.c.bf16 %v655, %v654
      %v663 = vpack.c.bf16 %v657, %v656
      %v664 = vpack.c.bf16 %v659, %v658
      %s665 = scalar_lea.vmem %s1, 48
      %v666 = vld [vmem:[%s665] sm:$0xf]
      %v667 = vld [vmem:[%s665 + $0x4] sm:$0xf]
      %v670 = vunpack.c.l.b16 %v666
      %v671 = vunpack.c.l.b16 %v667
      %v672 = vpack.c.b16 %v671, %v670
      %v675 = vsel %vm213, %v660, 0
      %v678 = vsel %vm213, %v661, 0
      %v681 = vsel %vm213, %v662, 0
      %v684 = vsel %vm213, %v663, 0
      %v687 = vsel %vm213, %v664, 0
      %689 = vmatpush.bf16.msra.mxu0 0
      %690 = vmatpush.bf16.msra.mxu0 0
      %691 = vmatpush.bf16.msra.mxu0 0
      %692 = vmatpush.bf16.msra.mxu0 0
      %693 = vmatpush.bf16.msra.mxu0 0
      %694 = vmatpush.bf16.msra.mxu0 0
      %695 = vmatpush.bf16.msra.mxu0 0
      %696 = vmatpush.bf16.msra.mxu0 %v672
      %697 = vmatmul.bf16.gmra.mxu0 %v675
      %v698 = vpop.f32.mrf.mxu0
      %v699 = vadd.f32 0.0, %v698
      %v700 = vpop.f32.mrf.mxu0
      %v701 = vadd.f32 0.0, %v700
      %702 = vmatmul.bf16.gmra.mxu0 %v678
      %v703 = vpop.f32.mrf.mxu0
      %v704 = vadd.f32 0.0, %v703
      %v705 = vpop.f32.mrf.mxu0
      %v706 = vadd.f32 0.0, %v705
      %707 = vmatmul.bf16.gmra.mxu0 %v681
      %v708 = vpop.f32.mrf.mxu0
      %v709 = vadd.f32 0.0, %v708
      %v710 = vpop.f32.mrf.mxu0
      %v711 = vadd.f32 0.0, %v710
      %712 = vmatmul.bf16.gmra.mxu0 %v684
      %v713 = vpop.f32.mrf.mxu0
      %v714 = vadd.f32 0.0, %v713
      %v715 = vpop.f32.mrf.mxu0
      %v716 = vadd.f32 0.0, %v715
      %717 = vmatmul.bf16.gmra.mxu0 %v687
      %v718 = vpop.f32.mrf.mxu0
      %v719 = vadd.f32 0.0, %v718
      %v720 = vpop.f32.mrf.mxu0
      %v721 = vadd.f32 0.0, %v720
      %722 = vdwg.mxu0
      %v723 = vadd.f32 %v640, %v699
      %v724 = vadd.f32 %v641, %v701
      %v725 = vadd.f32 %v642, %v704
      %v726 = vadd.f32 %v643, %v706
      %v727 = vadd.f32 %v644, %v709
      %v728 = vadd.f32 %v645, %v711
      %v729 = vadd.f32 %v646, %v714
      %v730 = vadd.f32 %v647, %v716
      %v731 = vadd.f32 %v648, %v719
      %v732 = vadd.f32 %v649, %v721
      %v733 = vld [vmem:[%s165 + $0x15] sm:$0xff]
      %v734 = vld [vmem:[%s165 + $0x1d] sm:$0xff]
      %v735 = vld [vmem:[%s165 + $0x25] sm:$0xff]
      %v736 = vld [vmem:[%s165 + $0x2d] sm:$0xff]
      %v737 = vld [vmem:[%s165 + $0x35] sm:$0xff]
      %v738 = vld [vmem:[%s165 + $0x3d] sm:$0xff]
      %v739 = vld [vmem:[%s165 + $0x45] sm:$0xff]
      %v740 = vld [vmem:[%s165 + $0x4d] sm:$0xff]
      %v741 = vld [vmem:[%s165 + $0x55] sm:$0xff]
      %v742 = vld [vmem:[%s165 + $0x5d] sm:$0xff]
      %v743 = vpack.c.bf16 %v734, %v733
      %v744 = vpack.c.bf16 %v736, %v735
      %v745 = vpack.c.bf16 %v738, %v737
      %v746 = vpack.c.bf16 %v740, %v739
      %v747 = vpack.c.bf16 %v742, %v741
      %s748 = scalar_lea.vmem %s1, 56
      %v749 = vld [vmem:[%s748] sm:$0xf]
      %v750 = vld [vmem:[%s748 + $0x4] sm:$0xf]
      %v753 = vunpack.c.l.b16 %v749
      %v754 = vunpack.c.l.b16 %v750
      %v755 = vpack.c.b16 %v754, %v753
      %v758 = vsel %vm213, %v743, 0
      %v761 = vsel %vm213, %v744, 0
      %v764 = vsel %vm213, %v745, 0
      %v767 = vsel %vm213, %v746, 0
      %v770 = vsel %vm213, %v747, 0
      %772 = vmatpush.bf16.msra.mxu0 0
      %773 = vmatpush.bf16.msra.mxu0 0
      %774 = vmatpush.bf16.msra.mxu0 0
      %775 = vmatpush.bf16.msra.mxu0 0
      %776 = vmatpush.bf16.msra.mxu0 0
      %777 = vmatpush.bf16.msra.mxu0 0
      %778 = vmatpush.bf16.msra.mxu0 0
      %779 = vmatpush.bf16.msra.mxu0 %v755
      %780 = vmatmul.bf16.gmra.mxu0 %v758
      %v781 = vpop.f32.mrf.mxu0
      %v782 = vadd.f32 0.0, %v781
      %v783 = vpop.f32.mrf.mxu0
      %v784 = vadd.f32 0.0, %v783
      %785 = vmatmul.bf16.gmra.mxu0 %v761
      %v786 = vpop.f32.mrf.mxu0
      %v787 = vadd.f32 0.0, %v786
      %v788 = vpop.f32.mrf.mxu0
      %v789 = vadd.f32 0.0, %v788
      %790 = vmatmul.bf16.gmra.mxu0 %v764
      %v791 = vpop.f32.mrf.mxu0
      %v792 = vadd.f32 0.0, %v791
      %v793 = vpop.f32.mrf.mxu0
      %v794 = vadd.f32 0.0, %v793
      %795 = vmatmul.bf16.gmra.mxu0 %v767
      %v796 = vpop.f32.mrf.mxu0
      %v797 = vadd.f32 0.0, %v796
      %v798 = vpop.f32.mrf.mxu0
      %v799 = vadd.f32 0.0, %v798
      %800 = vmatmul.bf16.gmra.mxu0 %v770
      %v801 = vpop.f32.mrf.mxu0
      %v802 = vadd.f32 0.0, %v801
      %v803 = vpop.f32.mrf.mxu0
      %v804 = vadd.f32 0.0, %v803
      %805 = vdwg.mxu0
      %v806 = vadd.f32 %v723, %v782
      %v807 = vadd.f32 %v724, %v784
      %v808 = vadd.f32 %v725, %v787
      %v809 = vadd.f32 %v726, %v789
      %v810 = vadd.f32 %v727, %v792
      %v811 = vadd.f32 %v728, %v794
      %v812 = vadd.f32 %v729, %v797
      %v813 = vadd.f32 %v730, %v799
      %v814 = vadd.f32 %v731, %v802
      %v815 = vadd.f32 %v732, %v804
      %v816 = vld [vmem:[%s165 + $0x16] sm:$0xff]
      %v817 = vld [vmem:[%s165 + $0x1e] sm:$0xff]
      %v818 = vld [vmem:[%s165 + $0x26] sm:$0xff]
      %v819 = vld [vmem:[%s165 + $0x2e] sm:$0xff]
      %v820 = vld [vmem:[%s165 + $0x36] sm:$0xff]
      %v821 = vld [vmem:[%s165 + $0x3e] sm:$0xff]
      %v822 = vld [vmem:[%s165 + $0x46] sm:$0xff]
      %v823 = vld [vmem:[%s165 + $0x4e] sm:$0xff]
      %v824 = vld [vmem:[%s165 + $0x56] sm:$0xff]
      %v825 = vld [vmem:[%s165 + $0x5e] sm:$0xff]
      %v826 = vpack.c.bf16 %v817, %v816
      %v827 = vpack.c.bf16 %v819, %v818
      %v828 = vpack.c.bf16 %v821, %v820
      %v829 = vpack.c.bf16 %v823, %v822
      %v830 = vpack.c.bf16 %v825, %v824
      %s831 = scalar_lea.vmem %s1, 64
      %v832 = vld [vmem:[%s831] sm:$0xf]
      %v833 = vld [vmem:[%s831 + $0x4] sm:$0xf]
      %v836 = vunpack.c.l.b16 %v832
      %v837 = vunpack.c.l.b16 %v833
      %v838 = vpack.c.b16 %v837, %v836
      %v841 = vsel %vm213, %v826, 0
      %v844 = vsel %vm213, %v827, 0
      %v847 = vsel %vm213, %v828, 0
      %v850 = vsel %vm213, %v829, 0
      %v853 = vsel %vm213, %v830, 0
      %855 = vmatpush.bf16.msra.mxu0 0
      %856 = vmatpush.bf16.msra.mxu0 0
      %857 = vmatpush.bf16.msra.mxu0 0
      %858 = vmatpush.bf16.msra.mxu0 0
      %859 = vmatpush.bf16.msra.mxu0 0
      %860 = vmatpush.bf16.msra.mxu0 0
      %861 = vmatpush.bf16.msra.mxu0 0
      %862 = vmatpush.bf16.msra.mxu0 %v838
      %863 = vmatmul.bf16.gmra.mxu0 %v841
      %v864 = vpop.f32.mrf.mxu0
      %v865 = vadd.f32 0.0, %v864
      %v866 = vpop.f32.mrf.mxu0
      %v867 = vadd.f32 0.0, %v866
      %868 = vmatmul.bf16.gmra.mxu0 %v844
      %v869 = vpop.f32.mrf.mxu0
      %v870 = vadd.f32 0.0, %v869
      %v871 = vpop.f32.mrf.mxu0
      %v872 = vadd.f32 0.0, %v871
      %873 = vmatmul.bf16.gmra.mxu0 %v847
      %v874 = vpop.f32.mrf.mxu0
      %v875 = vadd.f32 0.0, %v874
      %v876 = vpop.f32.mrf.mxu0
      %v877 = vadd.f32 0.0, %v876
      %878 = vmatmul.bf16.gmra.mxu0 %v850
      %v879 = vpop.f32.mrf.mxu0
      %v880 = vadd.f32 0.0, %v879
      %v881 = vpop.f32.mrf.mxu0
      %v882 = vadd.f32 0.0, %v881
      %883 = vmatmul.bf16.gmra.mxu0 %v853
      %v884 = vpop.f32.mrf.mxu0
      %v885 = vadd.f32 0.0, %v884
      %v886 = vpop.f32.mrf.mxu0
      %v887 = vadd.f32 0.0, %v886
      %888 = vdwg.mxu0
      %v889 = vadd.f32 %v806, %v865
      %v890 = vadd.f32 %v807, %v867
      %v891 = vadd.f32 %v808, %v870
      %v892 = vadd.f32 %v809, %v872
      %v893 = vadd.f32 %v810, %v875
      %v894 = vadd.f32 %v811, %v877
      %v895 = vadd.f32 %v812, %v880
      %v896 = vadd.f32 %v813, %v882
      %v897 = vadd.f32 %v814, %v885
      %v898 = vadd.f32 %v815, %v887
      %v899 = vld [vmem:[%s2] sm:$0x1]
      %v901 = vperm.slane %v899, 0
      %v903 = vadd.f32 %v889, %v901
      %v904 = vadd.f32 %v890, %v901
      %v905 = vadd.f32 %v891, %v901
      %v906 = vadd.f32 %v892, %v901
      %v907 = vadd.f32 %v893, %v901
      %v908 = vadd.f32 %v894, %v901
      %v909 = vadd.f32 %v895, %v901
      %v910 = vadd.f32 %v896, %v901
      %v911 = vadd.f32 %v897, %v901
      %v912 = vadd.f32 %v898, %v901
      %v913 = vmax.f32 %v903, 0.0
      %v914 = vmax.f32 %v904, 0.0
      %v915 = vmax.f32 %v905, 0.0
      %v916 = vmax.f32 %v906, 0.0
      %v917 = vmax.f32 %v907, 0.0
      %v918 = vmax.f32 %v908, 0.0
      %v919 = vmax.f32 %v909, 0.0
      %v920 = vmax.f32 %v910, 0.0
      %v921 = vmax.f32 %v911, 0.0
      %v922 = vmax.f32 %v912, 0.0
      %vm923 = vcmask 523264
      %924 = vst.msk [vmem:[%s170] sm:$0xff] %vm923, %v913
      %925 = vst.msk [vmem:[%s170 + $0x8] sm:$0xff] %vm923, %v914
      %926 = vst.msk [vmem:[%s170 + $0x10] sm:$0xff] %vm923, %v915
      %927 = vst.msk [vmem:[%s170 + $0x18] sm:$0xff] %vm923, %v916
      %928 = vst.msk [vmem:[%s170 + $0x20] sm:$0xff] %vm923, %v917
      %929 = vst.msk [vmem:[%s170 + $0x28] sm:$0xff] %vm923, %v918
      %930 = vst.msk [vmem:[%s170 + $0x30] sm:$0xff] %vm923, %v919
      %931 = vst.msk [vmem:[%s170 + $0x38] sm:$0xff] %vm923, %v920
      %932 = vst.msk [vmem:[%s170 + $0x40] sm:$0xff] %vm923, %v921
      %933 = vst.msk [vmem:[%s170 + $0x48] sm:$0xff] %vm923, %v922
      %p934 = scmp.lt.s32.totalorder %s14, 1
      %s935 = scalar_select %p934, %s14, 1
      %s936 = smul.addr %s935, 10
      %s937 = smul.addr %s936, 8
      %s938 = scalar_lea.vmem %s3, %s937
      // Predicated region
      $region33: #{vgg_forward.4} parent=31 // pred_check
        %p939 = pneg %p100
      $region34: #{vgg_forward.4} parent=31 // pred_check_branch
        %941 = sbr.rel (%p939) target = $region36
      $region35: #{vgg_forward.4} parent=31 // pred_region
        _
      $region36: #{vgg_forward.4} parent=31 // pred_fallthru
        _
    $region32: #{vgg_forward.4} parent=5 // pred_fallthru
      _
    %p942 = scmp.le.s32.totalorder 2, %s9
    // Predicated region
    $region37: #{vgg_forward.4} parent=5 // pred_check
      %p943 = pneg %p942
    $region38: #{vgg_forward.4} parent=5 // pred_check_branch
      %945 = sbr.rel (%p943) target = $region40
    $region39: #{vgg_forward.4} parent=5 // pred_region
      %s946 = ssub.s32 %s9, 2
      // Predicated region
      $region41: #{vgg_forward.4} parent=39 // pred_check
        %p947 = pneg %p106
      $region42: #{vgg_forward.4} parent=39 // pred_check_branch
        %949 = sbr.rel (%p947) target = $region44
      $region43: #{vgg_forward.4} parent=39 // pred_region
        %p950 = scmp.lt.s32.totalorder %s15, 1
        %s951 = scalar_select %p950, %s15, 1
        %s952 = smul.addr %s951, 10
        %s953 = smul.addr %s952, 8
        %s954 = scalar_lea.vmem %s3, %s953
      $region44: #{vgg_forward.4} parent=39 // pred_fallthru
        _
    $region40: #{vgg_forward.4} parent=5 // pred_fallthru
      _
  $region6: #{vgg_forward.4} parent=0 // loop_footer
    %s13 = sadd.s32 1, %s9
  $region7: #{vgg_forward.4} parent=0 // loop_footer_branch
    %8 = sbr.rel target = $region3
  $region8: #{vgg_forward.4} parent=0 // loop_exit
    _

// kernel: vgg_forward.3
$region0: #{vgg_forward.3}
  #allocation0 [shape = 'u32[]', space=smem, size = 0x4, offset = 0x4, fixed_abs, tag = 'smem constant byte address 0x4 - core index']
  #allocation1 [shape = 'u32[72,128]{1,0:T(1,128)}', space=vmem, size = 0x9000, scoped, tag = 'internal scratch']
  %s0 = inlined_call_operand.vmem [shape: f32[2,342,3], index: 0, kind: input, shape index: {}]
  %s1 = inlined_call_operand.vmem [shape: bf16[9,3,16], index: 1, kind: input, shape index: {}]
  %s2 = inlined_call_operand.vmem [shape: f32[1,16], index: 2, kind: input, shape index: {}]
  %s3 = inlined_call_operand.vmem [shape: f32[2,288,16], index: 3, kind: output, shape index: {}]
  %s4 = sld [smem:[#allocation0]]
  $region45: #{vgg_forward.3} parent=0
    _
  %s6 = ssub.s32 1, %s4
  %s7 = scalar_select 0, %s6, %s4
  loop: start=0, step=1, limit=4
  $region2: #{vgg_forward.3} parent=0 // loop_pre_header
    _
  $region3: #{vgg_forward.3} parent=0 // loop_header
    %s9 = sphi 0, %s13
    %p10 = scmp.ge.s32.totalorder %s9, 4
    %s19 = sphi 0, %s21
    %s22 = sphi 0, %s19
    %s23 = sphi 0, %s22
    %s39 = sphi 0, %s23
    %s43 = sphi 0, %s43
    %s45 = sphi 0, %s43
    %s46 = sphi 0, %s45
    %s60 = sphi 0, %s46
    %s64 = sphi 0, %s64
    %s66 = sphi 0, %s64
    %s67 = sphi 0, %s66
    %s81 = sphi 0, %s67
    %s87 = sphi 0, %s89
    %s90 = sphi 0, %s87
    %s91 = sphi 0, %s90
    %s107 = sphi 0, %s91
  $region4: #{vgg_forward.3} parent=0 // loop_header_branch
    %12 = sbr.rel (%p10) target = $region8
  $region5: #{vgg_forward.3} parent=0 // loop_body
    %s14 = ssub.s32 %s9, 1
    %s15 = ssub.s32 %s9, 2
    %s16 = sadd.s32 %s9, 1
    %s17 = ssub.s32 %s9, %s16
    %p18 = scmp.eq.s32.totalorder %s17, 0
    %s20 = sadd.s32 %s19, 1
    %s21 = scalar_select %p18, %s19, %s20
    %p24 = pneg %p18
    %p25 = scmp.eq.s32.totalorder %s9, 1
    %p26 = por %p24, %p25
    %p27 = scmp.ne.s32.totalorder %s19, %s22
    %p28 = scmp.eq.s32.totalorder %s9, 0
    %p29 = por %p27, %p28
    %p30 = scmp.ne.s32.totalorder %s19, %s22
    %p31 = scmp.eq.s32.totalorder %s14, 1
    %p32 = por %p30, %p31
    %p33 = scmp.ne.s32.totalorder %s22, %s23
    %p34 = scmp.eq.s32.totalorder %s14, 0
    %p35 = por %p33, %p34
    %p36 = scmp.ne.s32.totalorder %s22, %s23
    %p37 = scmp.eq.s32.totalorder %s15, 1
    %p38 = por %p36, %p37
    %p40 = scmp.ne.s32.totalorder %s23, %s39
    %p41 = scmp.eq.s32.totalorder %s15, 0
    %p42 = por %p40, %p41
    %s44 = sadd.s32 %s43, 1
    %p47 = scmp.eq.s32.totalorder %s9, 1
    %p48 = scmp.ne.s32.totalorder %s43, %s45
    %p49 = scmp.eq.s32.totalorder %s9, 0
    %p50 = por %p48, %p49
    %p51 = scmp.ne.s32.totalorder %s43, %s45
    %p52 = scmp.eq.s32.totalorder %s14, 1
    %p53 = por %p51, %p52
    %p54 = scmp.ne.s32.totalorder %s45, %s46
    %p55 = scmp.eq.s32.totalorder %s14, 0
    %p56 = por %p54, %p55
    %p57 = scmp.ne.s32.totalorder %s45, %s46
    %p58 = scmp.eq.s32.totalorder %s15, 1
    %p59 = por %p57, %p58
    %p61 = scmp.ne.s32.totalorder %s46, %s60
    %p62 = scmp.eq.s32.totalorder %s15, 0
    %p63 = por %p61, %p62
    %s65 = sadd.s32 %s64, 1
    %p68 = scmp.eq.s32.totalorder %s9, 1
    %p69 = scmp.ne.s32.totalorder %s64, %s66
    %p70 = scmp.eq.s32.totalorder %s9, 0
    %p71 = por %p69, %p70
    %p72 = scmp.ne.s32.totalorder %s64, %s66
    %p73 = scmp.eq.s32.totalorder %s14, 1
    %p74 = por %p72, %p73
    %p75 = scmp.ne.s32.totalorder %s66, %s67
    %p76 = scmp.eq.s32.totalorder %s14, 0
    %p77 = por %p75, %p76
    %p78 = scmp.ne.s32.totalorder %s66, %s67
    %p79 = scmp.eq.s32.totalorder %s15, 1
    %p80 = por %p78, %p79
    %p82 = scmp.ne.s32.totalorder %s67, %s81
    %p83 = scmp.eq.s32.totalorder %s15, 0
    %p84 = por %p82, %p83
    %s85 = ssub.s32 %s9, %s16
    %p86 = scmp.eq.s32.totalorder %s85, 0
    %s88 = sadd.s32 %s87, 1
    %s89 = scalar_select %p86, %s87, %s88
    %p92 = pneg %p86
    %p93 = scmp.eq.s32.totalorder %s9, 1
    %p94 = por %p92, %p93
    %p95 = scmp.ne.s32.totalorder %s87, %s90
    %p96 = scmp.eq.s32.totalorder %s9, 0
    %p97 = por %p95, %p96
    %p98 = scmp.ne.s32.totalorder %s87, %s90
    %p99 = scmp.eq.s32.totalorder %s14, 1
    %p100 = por %p98, %p99
    %p101 = scmp.ne.s32.totalorder %s90, %s91
    %p102 = scmp.eq.s32.totalorder %s14, 0
    %p103 = por %p101, %p102
    %p104 = scmp.ne.s32.totalorder %s90, %s91
    %p105 = scmp.eq.s32.totalorder %s15, 1
    %p106 = por %p104, %p105
    %p108 = scmp.ne.s32.totalorder %s91, %s107
    %p109 = scmp.eq.s32.totalorder %s15, 0
    %p110 = por %p108, %p109
    %p111 = scmp.le.s32.totalorder 1, %s9
    %p112 = scmp.lt.s32.totalorder %s9, 3
    %p113 = pnand %p111, %p112
    %p114 = pneg %p113
    // Predicated region
    $region9: #{vgg_forward.3} parent=5 // pred_check
      _
    $region10: #{vgg_forward.3} parent=5 // pred_check_branch
      %116 = sbr.rel (%p113) target = $region12
    $region11: #{vgg_forward.3} parent=5 // pred_region
      %s117 = ssub.s32 %s9, 1
      // Predicated region
      $region13: #{vgg_forward.3} parent=11 // pred_check
        %p118 = pneg %p56
      $region14: #{vgg_forward.3} parent=11 // pred_check_branch
        %120 = sbr.rel (%p118) target = $region16
      $region15: #{vgg_forward.3} parent=11 // pred_region
        _
      $region16: #{vgg_forward.3} parent=11 // pred_fallthru
        _
      // Predicated region
      $region17: #{vgg_forward.3} parent=11 // pred_check
        %p121 = pneg %p77
      $region18: #{vgg_forward.3} parent=11 // pred_check_branch
        %123 = sbr.rel (%p121) target = $region20
      $region19: #{vgg_forward.3} parent=11 // pred_region
        _
      $region20: #{vgg_forward.3} parent=11 // pred_fallthru
        _
    $region12: #{vgg_forward.3} parent=5 // pred_fallthru
      _
    %p124 = scmp.lt.s32.totalorder %s9, 2
    // Predicated region
    $region21: #{vgg_forward.3} parent=5 // pred_check
      %p125 = pneg %p124
    $region22: #{vgg_forward.3} parent=5 // pred_check_branch
      %127 = sbr.rel (%p125) target = $region24
    $region23: #{vgg_forward.3} parent=5 // pred_region
      // Predicated region
      $region25: #{vgg_forward.3} parent=23 // pred_check
        %p128 = pneg %p29
      $region26: #{vgg_forward.3} parent=23 // pred_check_branch
        %130 = sbr.rel (%p128) target = $region28
      $region27: #{vgg_forward.3} parent=23 // pred_region
        %p131 = scmp.lt.s32.totalorder %s9, 1
        %s132 = scalar_select %p131, %s9, 1
        %s133 = smul.addr %s132, 43
        %s134 = smul.addr %s133, 8
        %s135 = scalar_lea.vmem %s0, %s134
      $region28: #{vgg_forward.3} parent=23 // pred_fallthru
        _
    $region24: #{vgg_forward.3} parent=5 // pred_fallthru
      _
    %p136 = scmp.le.s32.totalorder 1, %s9
    %p137 = scmp.lt.s32.totalorder %s9, 3
    %p138 = pnand %p136, %p137
    %p139 = pneg %p138
    // Predicated region
    $region29: #{vgg_forward.3} parent=5 // pred_check
      _
    $region30: #{vgg_forward.3} parent=5 // pred_check_branch
      %141 = sbr.rel (%p138) target = $region32
    $region31: #{vgg_forward.3} parent=5 // pred_region
      %s142 = ssub.s32 %s9, 1
      %p143 = scmp.lt.s32.totalorder %s14, 1
      %s144 = scalar_select %p143, %s14, 1
      %s145 = smul.addr %s144, 43
      %s146 = smul.addr %s145, 8
      %s147 = scalar_lea.vmem %s0, %s146
      %p148 = pneg %p35
      %p149 = pneg %p32
      %p150 = pneg %p56
      %p151 = pneg %p53
      %p152 = pneg %p77
      %p153 = pneg %p74
      %p154 = pneg %p103
      %p155 = pneg %p100
      %p156 = scmp.lt.s32.totalorder %s14, 1
      %s157 = scalar_select %p156, %s14, 1
      %s158 = smul.addr %s157, 36
      %s159 = smul.addr %s158, 8
      %s160 = scalar_lea.vmem %s3, %s159
      %p161 = scmp.lt.s32.totalorder %s14, 1
      %s162 = scalar_select %p161, %s14, 1
      %s163 = smul.addr %s162, 43
      %s164 = smul.addr %s163, 8
      %s165 = scalar_lea.vmem %s0, %s164
      %p166 = scmp.lt.s32.totalorder %s14, 1
      %s167 = scalar_select %p166, %s14, 1
      %s168 = smul.addr %s167, 36
      %s169 = smul.addr %s168, 8
      %s170 = scalar_lea.vmem %s3, %s169
      %v172 = vld [vmem:[%s165] sm:$0xff]
      %v173 = vld [vmem:[%s165 + $0x8] sm:$0xff]
      %v174 = vld [vmem:[%s165 + $0x10] sm:$0xff]
      %v175 = vld [vmem:[%s165 + $0x18] sm:$0xff]
      %v176 = vld [vmem:[%s165 + $0x20] sm:$0xff]
      %v177 = vld [vmem:[%s165 + $0x28] sm:$0xff]
      %v178 = vld [vmem:[%s165 + $0x30] sm:$0xff]
      %v179 = vld [vmem:[%s165 + $0x38] sm:$0xff]
      %v180 = vld [vmem:[%s165 + $0x40] sm:$0xff]
      %v181 = vld [vmem:[%s165 + $0x48] sm:$0xff]
      %v182 = vld [vmem:[%s165 + $0x50] sm:$0xff]
      %v183 = vld [vmem:[%s165 + $0x58] sm:$0xff]
      %v184 = vld [vmem:[%s165 + $0x60] sm:$0xff]
      %v185 = vld [vmem:[%s165 + $0x68] sm:$0xff]
      %v186 = vld [vmem:[%s165 + $0x70] sm:$0xff]
      %v187 = vld [vmem:[%s165 + $0x78] sm:$0xff]
      %v188 = vld [vmem:[%s165 + $0x80] sm:$0xff]
      %v189 = vld [vmem:[%s165 + $0x88] sm:$0xff]
      %v190 = vld [vmem:[%s165 + $0x90] sm:$0xff]
      %v191 = vld [vmem:[%s165 + $0x98] sm:$0xff]
      %v192 = vld [vmem:[%s165 + $0xa0] sm:$0xff]
      %v193 = vld [vmem:[%s165 + $0xa8] sm:$0xff]
      %v194 = vld [vmem:[%s165 + $0xb0] sm:$0xff]
      %v195 = vld [vmem:[%s165 + $0xb8] sm:$0xff]
      %v196 = vld [vmem:[%s165 + $0xc0] sm:$0xff]
      %v197 = vld [vmem:[%s165 + $0xc8] sm:$0xff]
      %v198 = vld [vmem:[%s165 + $0xd0] sm:$0xff]
      %v199 = vld [vmem:[%s165 + $0xd8] sm:$0xff]
      %v200 = vld [vmem:[%s165 + $0xe0] sm:$0xff]
      %v201 = vld [vmem:[%s165 + $0xe8] sm:$0xff]
      %v202 = vld [vmem:[%s165 + $0xf0] sm:$0xff]
      %v203 = vld [vmem:[%s165 + $0xf8] sm:$0xff]
      %v204 = vld [vmem:[%s165 + $0x100] sm:$0xff]
      %v205 = vld [vmem:[%s165 + $0x108] sm:$0xff]
      %v206 = vld [vmem:[%s165 + $0x110] sm:$0xff]
      %v207 = vld [vmem:[%s165 + $0x118] sm:$0xff]
      %v208 = vpack.c.bf16 %v173, %v172
      %v209 = vpack.c.bf16 %v175, %v174
      %v210 = vpack.c.bf16 %v177, %v176
      %v211 = vpack.c.bf16 %v179, %v178
      %v212 = vpack.c.bf16 %v181, %v180
      %v213 = vpack.c.bf16 %v183, %v182
      %v214 = vpack.c.bf16 %v185, %v184
      %v215 = vpack.c.bf16 %v187, %v186
      %v216 = vpack.c.bf16 %v189, %v188
      %v217 = vpack.c.bf16 %v191, %v190
      %v218 = vpack.c.bf16 %v193, %v192
      %v219 = vpack.c.bf16 %v195, %v194
      %v220 = vpack.c.bf16 %v197, %v196
      %v221 = vpack.c.bf16 %v199, %v198
      %v222 = vpack.c.bf16 %v201, %v200
      %v223 = vpack.c.bf16 %v203, %v202
      %v224 = vpack.c.bf16 %v205, %v204
      %v225 = vpack.c.bf16 %v207, %v206
      %v226 = vld [vmem:[%s1] sm:$0x3]
      %v227 = vld [vmem:[%s165 + $0x1] sm:$0xff]
      %v228 = vld [vmem:[%s165 + $0x9] sm:$0xff]
      %v229 = vld [vmem:[%s165 + $0x11] sm:$0xff]
      %v230 = vld [vmem:[%s165 + $0x19] sm:$0xff]
      %v231 = vld [vmem:[%s165 + $0x21] sm:$0xff]
      %v232 = vld [vmem:[%s165 + $0x29] sm:$0xff]
      %v233 = vld [vmem:[%s165 + $0x31] sm:$0xff]
      %v234 = vld [vmem:[%s165 + $0x39] sm:$0xff]
      %v235 = vld [vmem:[%s165 + $0x41] sm:$0xff]
      %v236 = vld [vmem:[%s165 + $0x49] sm:$0xff]
      %v237 = vld [vmem:[%s165 + $0x51] sm:$0xff]
      %v238 = vld [vmem:[%s165 + $0x59] sm:$0xff]
      %v239 = vld [vmem:[%s165 + $0x61] sm:$0xff]
      %v240 = vld [vmem:[%s165 + $0x69] sm:$0xff]
      %v241 = vld [vmem:[%s165 + $0x71] sm:$0xff]
      %v242 = vld [vmem:[%s165 + $0x79] sm:$0xff]
      %v243 = vld [vmem:[%s165 + $0x81] sm:$0xff]
      %v244 = vld [vmem:[%s165 + $0x89] sm:$0xff]
      %v245 = vld [vmem:[%s165 + $0x91] sm:$0xff]
      %v246 = vld [vmem:[%s165 + $0x99] sm:$0xff]
      %v247 = vld [vmem:[%s165 + $0xa1] sm:$0xff]
      %v248 = vld [vmem:[%s165 + $0xa9] sm:$0xff]
      %v249 = vld [vmem:[%s165 + $0xb1] sm:$0xff]
      %v250 = vld [vmem:[%s165 + $0xb9] sm:$0xff]
      %v251 = vld [vmem:[%s165 + $0xc1] sm:$0xff]
      %v252 = vld [vmem:[%s165 + $0xc9] sm:$0xff]
      %v253 = vld [vmem:[%s165 + $0xd1] sm:$0xff]
      %v254 = vld [vmem:[%s165 + $0xd9] sm:$0xff]
      %v255 = vld [vmem:[%s165 + $0xe1] sm:$0xff]
      %v256 = vld [vmem:[%s165 + $0xe9] sm:$0xff]
      %v257 = vld [vmem:[%s165 + $0xf1] sm:$0xff]
      %v258 = vld [vmem:[%s165 + $0xf9] sm:$0xff]
      %v259 = vld [vmem:[%s165 + $0x101] sm:$0xff]
      %v260 = vld [vmem:[%s165 + $0x109] sm:$0xff]
      %v261 = vld [vmem:[%s165 + $0x111] sm:$0xff]
      %v262 = vld [vmem:[%s165 + $0x119] sm:$0xff]
      %v263 = vpack.c.bf16 %v228, %v227
      %v264 = vpack.c.bf16 %v230, %v229
      %v265 = vpack.c.bf16 %v232, %v231
      %v266 = vpack.c.bf16 %v234, %v233
      %v267 = vpack.c.bf16 %v236, %v235
      %v268 = vpack.c.bf16 %v238, %v237
      %v269 = vpack.c.bf16 %v240, %v239
      %v270 = vpack.c.bf16 %v242, %v241
      %v271 = vpack.c.bf16 %v244, %v243
      %v272 = vpack.c.bf16 %v246, %v245
      %v273 = vpack.c.bf16 %v248, %v247
      %v274 = vpack.c.bf16 %v250, %v249
      %v275 = vpack.c.bf16 %v252, %v251
      %v276 = vpack.c.bf16 %v254, %v253
      %v277 = vpack.c.bf16 %v256, %v255
      %v278 = vpack.c.bf16 %v258, %v257
      %v279 = vpack.c.bf16 %v260, %v259
      %v280 = vpack.c.bf16 %v262, %v261
      %s281 = scalar_lea.vmem %s1, 2
      %v282 = vld [vmem:[%s281] sm:$0x3]
      %vm283 = vcmask 23552
      %v285 = vsel %vm283, %v263, 0
      %v288 = vsel %vm283, %v264, 0
      %v291 = vsel %vm283, %v265, 0
      %v294 = vsel %vm283, %v266, 0
      %v297 = vsel %vm283, %v267, 0
      %v300 = vsel %vm283, %v268, 0
      %v303 = vsel %vm283, %v269, 0
      %v306 = vsel %vm283, %v270, 0
      %v309 = vsel %vm283, %v271, 0
      %v312 = vsel %vm283, %v272, 0
      %v315 = vsel %vm283, %v273, 0
      %v318 = vsel %vm283, %v274, 0
      %v321 = vsel %vm283, %v275, 0
      %v324 = vsel %vm283, %v276, 0
      %v327 = vsel %vm283, %v277, 0
      %v330 = vsel %vm283, %v278, 0
      %v333 = vsel %vm283, %v279, 0
      %v336 = vsel %vm283, %v280, 0
      %vm338 = vcmask 1040384
      %vm339 = vcmask 1041408
      %v340 = vsel %vm338, 4294967295, 65535
      %v341 = vsel %vm339, %v340, 0
      %v343 = vand.u32 %v282, %v341
      %345 = vmatpush.bf16.msra.mxu0 0
      %346 = vmatpush.bf16.msra.mxu0 0
      %347 = vmatpush.bf16.msra.mxu0 0
      %348 = vmatpush.bf16.msra.mxu0 0
      %349 = vmatpush.bf16.msra.mxu0 0
      %350 = vmatpush.bf16.msra.mxu0 0
      %351 = vmatpush.bf16.msra.mxu0 0
      %352 = vmatpush.bf16.msra.mxu0 %v343
      %353 = vmatmul.bf16.gmra.mxu0 %v285
      %v354 = vpop.f32.mrf.mxu0
      %v355 = vadd.f32 0.0, %v354
      %v356 = vpop.f32.mrf.mxu0
      %v357 = vadd.f32 0.0, %v356
      %358 = vmatmul.bf16.gmra.mxu0 %v288
      %v359 = vpop.f32.mrf.mxu0
      %v360 = vadd.f32 0.0, %v359
      %v361 = vpop.f32.mrf.mxu0
      %v362 = vadd.f32 0.0, %v361
      %363 = vmatmul.bf16.gmra.mxu0 %v291
      %v364 = vpop.f32.mrf.mxu0
      %v365 = vadd.f32 0.0, %v364
      %v366 = vpop.f32.mrf.mxu0
      %v367 = vadd.f32 0.0, %v366
      %368 = vmatmul.bf16.gmra.mxu0 %v294
      %v369 = vpop.f32.mrf.mxu0
      %v370 = vadd.f32 0.0, %v369
      %v371 = vpop.f32.mrf.mxu0
      %v372 = vadd.f32 0.0, %v371
      %373 = vmatmul.bf16.gmra.mxu0 %v297
      %v374 = vpop.f32.mrf.mxu0
      %v375 = vadd.f32 0.0, %v374
      %v376 = vpop.f32.mrf.mxu0
      %v377 = vadd.f32 0.0, %v376
      %378 = vmatmul.bf16.gmra.mxu0 %v300
      %v379 = vpop.f32.mrf.mxu0
      %v380 = vadd.f32 0.0, %v379
      %v381 = vpop.f32.mrf.mxu0
      %v382 = vadd.f32 0.0, %v381
      %383 = vmatmul.bf16.gmra.mxu0 %v303
      %v384 = vpop.f32.mrf.mxu0
      %v385 = vadd.f32 0.0, %v384
      %v386 = vpop.f32.mrf.mxu0
      %v387 = vadd.f32 0.0, %v386
      %388 = vmatmul.bf16.gmra.mxu0 %v306
      %v389 = vpop.f32.mrf.mxu0
      %v390 = vadd.f32 0.0, %v389
      %v391 = vpop.f32.mrf.mxu0
      %v392 = vadd.f32 0.0, %v391
      %393 = vmatmul.bf16.gmra.mxu0 %v309
      %v394 = vpop.f32.mrf.mxu0
      %v395 = vadd.f32 0.0, %v394
      %v396 = vpop.f32.mrf.mxu0
      %v397 = vadd.f32 0.0, %v396
      %398 = vmatmul.bf16.gmra.mxu0 %v312
      %v399 = vpop.f32.mrf.mxu0
      %v400 = vadd.f32 0.0, %v399
      %v401 = vpop.f32.mrf.mxu0
      %v402 = vadd.f32 0.0, %v401
      %403 = vmatmul.bf16.gmra.mxu0 %v315
      %v404 = vpop.f32.mrf.mxu0
      %v405 = vadd.f32 0.0, %v404
      %v406 = vpop.f32.mrf.mxu0
      %v407 = vadd.f32 0.0, %v406
      %408 = vmatmul.bf16.gmra.mxu0 %v318
      %v409 = vpop.f32.mrf.mxu0
      %v410 = vadd.f32 0.0, %v409
      %v411 = vpop.f32.mrf.mxu0
      %v412 = vadd.f32 0.0, %v411
      %413 = vmatmul.bf16.gmra.mxu0 %v321
      %v414 = vpop.f32.mrf.mxu0
      %v415 = vadd.f32 0.0, %v414
      %v416 = vpop.f32.mrf.mxu0
      %v417 = vadd.f32 0.0, %v416
      %418 = vmatmul.bf16.gmra.mxu0 %v324
      %v419 = vpop.f32.mrf.mxu0
      %v420 = vadd.f32 0.0, %v419
      %v421 = vpop.f32.mrf.mxu0
      %v422 = vadd.f32 0.0, %v421
      %423 = vmatmul.bf16.gmra.mxu0 %v327
      %v424 = vpop.f32.mrf.mxu0
      %v425 = vadd.f32 0.0, %v424
      %v426 = vpop.f32.mrf.mxu0
      %v427 = vadd.f32 0.0, %v426
      %428 = vmatmul.bf16.gmra.mxu0 %v330
      %v429 = vpop.f32.mrf.mxu0
      %v430 = vadd.f32 0.0, %v429
      %v431 = vpop.f32.mrf.mxu0
      %v432 = vadd.f32 0.0, %v431
      %433 = vmatmul.bf16.gmra.mxu0 %v333
      %v434 = vpop.f32.mrf.mxu0
      %v435 = vadd.f32 0.0, %v434
      %v436 = vpop.f32.mrf.mxu0
      %v437 = vadd.f32 0.0, %v436
      %438 = vmatmul.bf16.gmra.mxu0 %v336
      %v439 = vpop.f32.mrf.mxu0
      %v440 = vadd.f32 0.0, %v439
      %v441 = vpop.f32.mrf.mxu0
      %v442 = vadd.f32 0.0, %v441
      %443 = vdwg.mxu0
      %v445 = vsel %vm283, %v208, 0
      %v448 = vsel %vm283, %v209, 0
      %v451 = vsel %vm283, %v210, 0
      %v454 = vsel %vm283, %v211, 0
      %v457 = vsel %vm283, %v212, 0
      %v460 = vsel %vm283, %v213, 0
      %v463 = vsel %vm283, %v214, 0
      %v466 = vsel %vm283, %v215, 0
      %v469 = vsel %vm283, %v216, 0
      %v472 = vsel %vm283, %v217, 0
      %v475 = vsel %vm283, %v218, 0
      %v478 = vsel %vm283, %v219, 0
      %v481 = vsel %vm283, %v220, 0
      %v484 = vsel %vm283, %v221, 0
      %v487 = vsel %vm283, %v222, 0
      %v490 = vsel %vm283, %v223, 0
      %v493 = vsel %vm283, %v224, 0
      %v496 = vsel %vm283, %v225, 0
      %v499 = vand.u32 %v226, %v341
      %501 = vmatpush.bf16.msra.mxu0 0
      %502 = vmatpush.bf16.msra.mxu0 0
      %503 = vmatpush.bf16.msra.mxu0 0
      %504 = vmatpush.bf16.msra.mxu0 0
      %505 = vmatpush.bf16.msra.mxu0 0
      %506 = vmatpush.bf16.msra.mxu0 0
      %507 = vmatpush.bf16.msra.mxu0 0
      %508 = vmatpush.bf16.msra.mxu0 %v499
      %509 = vmatmul.bf16.gmra.mxu0 %v445
      %v510 = vpop.f32.mrf.mxu0
      %v511 = vadd.f32 %v355, %v510
      %v512 = vpop.f32.mrf.mxu0
      %v513 = vadd.f32 %v357, %v512
      %514 = vmatmul.bf16.gmra.mxu0 %v448
      %v515 = vpop.f32.mrf.mxu0
      %v516 = vadd.f32 %v360, %v515
      %v517 = vpop.f32.mrf.mxu0
      %v518 = vadd.f32 %v362, %v517
      %519 = vmatmul.bf16.gmra.mxu0 %v451
      %v520 = vpop.f32.mrf.mxu0
      %v521 = vadd.f32 %v365, %v520
      %v522 = vpop.f32.mrf.mxu0
      %v523 = vadd.f32 %v367, %v522
      %524 = vmatmul.bf16.gmra.mxu0 %v454
      %v525 = vpop.f32.mrf.mxu0
      %v526 = vadd.f32 %v370, %v525
      %v527 = vpop.f32.mrf.mxu0
      %v528 = vadd.f32 %v372, %v527
      %529 = vmatmul.bf16.gmra.mxu0 %v457
      %v530 = vpop.f32.mrf.mxu0
      %v531 = vadd.f32 %v375, %v530
      %v532 = vpop.f32.mrf.mxu0
      %v533 = vadd.f32 %v377, %v532
      %534 = vmatmul.bf16.gmra.mxu0 %v460
      %v535 = vpop.f32.mrf.mxu0
      %v536 = vadd.f32 %v380, %v535
      %v537 = vpop.f32.mrf.mxu0
      %v538 = vadd.f32 %v382, %v537
      %539 = vmatmul.bf16.gmra.mxu0 %v463
      %v540 = vpop.f32.mrf.mxu0
      %v541 = vadd.f32 %v385, %v540
      %v542 = vpop.f32.mrf.mxu0
      %v543 = vadd.f32 %v387, %v542
      %544 = vmatmul.bf16.gmra.mxu0 %v466
      %v545 = vpop.f32.mrf.mxu0
      %v546 = vadd.f32 %v390, %v545
      %v547 = vpop.f32.mrf.mxu0
      %v548 = vadd.f32 %v392, %v547
      %549 = vmatmul.bf16.gmra.mxu0 %v469
      %v550 = vpop.f32.mrf.mxu0
      %v551 = vadd.f32 %v395, %v550
      %v552 = vpop.f32.mrf.mxu0
      %v553 = vadd.f32 %v397, %v552
      %554 = vmatmul.bf16.gmra.mxu0 %v472
      %v555 = vpop.f32.mrf.mxu0
      %v556 = vadd.f32 %v400, %v555
      %v557 = vpop.f32.mrf.mxu0
      %v558 = vadd.f32 %v402, %v557
      %559 = vmatmul.bf16.gmra.mxu0 %v475
      %v560 = vpop.f32.mrf.mxu0
      %v561 = vadd.f32 %v405, %v560
      %v562 = vpop.f32.mrf.mxu0
      %v563 = vadd.f32 %v407, %v562
      %564 = vmatmul.bf16.gmra.mxu0 %v478
      %v565 = vpop.f32.mrf.mxu0
      %v566 = vadd.f32 %v410, %v565
      %v567 = vpop.f32.mrf.mxu0
      %v568 = vadd.f32 %v412, %v567
      %569 = vmatmul.bf16.gmra.mxu0 %v481
      %v570 = vpop.f32.mrf.mxu0
      %v571 = vadd.f32 %v415, %v570
      %v572 = vpop.f32.mrf.mxu0
      %v573 = vadd.f32 %v417, %v572
      %574 = vmatmul.bf16.gmra.mxu0 %v484
      %v575 = vpop.f32.mrf.mxu0
      %v576 = vadd.f32 %v420, %v575
      %v577 = vpop.f32.mrf.mxu0
      %v578 = vadd.f32 %v422, %v577
      %579 = vmatmul.bf16.gmra.mxu0 %v487
      %v580 = vpop.f32.mrf.mxu0
      %v581 = vadd.f32 %v425, %v580
      %v582 = vpop.f32.mrf.mxu0
      %v583 = vadd.f32 %v427, %v582
      %584 = vmatmul.bf16.gmra.mxu0 %v490
      %v585 = vpop.f32.mrf.mxu0
      %v586 = vadd.f32 %v430, %v585
      %v587 = vpop.f32.mrf.mxu0
      %v588 = vadd.f32 %v432, %v587
      %589 = vmatmul.bf16.gmra.mxu0 %v493
      %v590 = vpop.f32.mrf.mxu0
      %v591 = vadd.f32 %v435, %v590
      %v592 = vpop.f32.mrf.mxu0
      %v593 = vadd.f32 %v437, %v592
      %594 = vmatmul.bf16.gmra.mxu0 %v496
      %v595 = vpop.f32.mrf.mxu0
      %v596 = vadd.f32 %v440, %v595
      %v597 = vpop.f32.mrf.mxu0
      %v598 = vadd.f32 %v442, %v597
      %599 = vdwg.mxu0
      %v600 = vld [vmem:[%s165 + $0x2] sm:$0xff]
      %v601 = vld [vmem:[%s165 + $0xa] sm:$0xff]
      %v602 = vld [vmem:[%s165 + $0x12] sm:$0xff]
      %v603 = vld [vmem:[%s165 + $0x1a] sm:$0xff]
      %v604 = vld [vmem:[%s165 + $0x22] sm:$0xff]
      %v605 = vld [vmem:[%s165 + $0x2a] sm:$0xff]
      %v606 = vld [vmem:[%s165 + $0x32] sm:$0xff]
      %v607 = vld [vmem:[%s165 + $0x3a] sm:$0xff]
      %v608 = vld [vmem:[%s165 + $0x42] sm:$0xff]
      %v609 = vld [vmem:[%s165 + $0x4a] sm:$0xff]
      %v610 = vld [vmem:[%s165 + $0x52] sm:$0xff]
      %v611 = vld [vmem:[%s165 + $0x5a] sm:$0xff]
      %v612 = vld [vmem:[%s165 + $0x62] sm:$0xff]
      %v613 = vld [vmem:[%s165 + $0x6a] sm:$0xff]
      %v614 = vld [vmem:[%s165 + $0x72] sm:$0xff]
      %v615 = vld [vmem:[%s165 + $0x7a] sm:$0xff]
      %v616 = vld [vmem:[%s165 + $0x82] sm:$0xff]
      %v617 = vld [vmem:[%s165 + $0x8a] sm:$0xff]
      %v618 = vld [vmem:[%s165 + $0x92] sm:$0xff]
      %v619 = vld [vmem:[%s165 + $0x9a] sm:$0xff]
      %v620 = vld [vmem:[%s165 + $0xa2] sm:$0xff]
      %v621 = vld [vmem:[%s165 + $0xaa] sm:$0xff]
      %v622 = vld [vmem:[%s165 + $0xb2] sm:$0xff]
      %v623 = vld [vmem:[%s165 + $0xba] sm:$0xff]
      %v624 = vld [vmem:[%s165 + $0xc2] sm:$0xff]
      %v625 = vld [vmem:[%s165 + $0xca] sm:$0xff]
      %v626 = vld [vmem:[%s165 + $0xd2] sm:$0xff]
      %v627 = vld [vmem:[%s165 + $0xda] sm:$0xff]
      %v628 = vld [vmem:[%s165 + $0xe2] sm:$0xff]
      %v629 = vld [vmem:[%s165 + $0xea] sm:$0xff]
      %v630 = vld [vmem:[%s165 + $0xf2] sm:$0xff]
      %v631 = vld [vmem:[%s165 + $0xfa] sm:$0xff]
      %v632 = vld [vmem:[%s165 + $0x102] sm:$0xff]
      %v633 = vld [vmem:[%s165 + $0x10a] sm:$0xff]
      %v634 = vld [vmem:[%s165 + $0x112] sm:$0xff]
      %v635 = vld [vmem:[%s165 + $0x11a] sm:$0xff]
      %v636 = vpack.c.bf16 %v601, %v600
      %v637 = vpack.c.bf16 %v603, %v602
      %v638 = vpack.c.bf16 %v605, %v604
      %v639 = vpack.c.bf16 %v607, %v606
      %v640 = vpack.c.bf16 %v609, %v608
      %v641 = vpack.c.bf16 %v611, %v610
      %v642 = vpack.c.bf16 %v613, %v612
      %v643 = vpack.c.bf16 %v615, %v614
      %v644 = vpack.c.bf16 %v617, %v616
      %v645 = vpack.c.bf16 %v619, %v618
      %v646 = vpack.c.bf16 %v621, %v620
      %v647 = vpack.c.bf16 %v623, %v622
      %v648 = vpack.c.bf16 %v625, %v624
      %v649 = vpack.c.bf16 %v627, %v626
      %v650 = vpack.c.bf16 %v629, %v628
      %v651 = vpack.c.bf16 %v631, %v630
      %v652 = vpack.c.bf16 %v633, %v632
      %v653 = vpack.c.bf16 %v635, %v634
      %s654 = scalar_lea.vmem %s1, 4
      %v655 = vld [vmem:[%s654] sm:$0x3]
      %v657 = vsel %vm283, %v636, 0
      %v660 = vsel %vm283, %v637, 0
      %v663 = vsel %vm283, %v638, 0
      %v666 = vsel %vm283, %v639, 0
      %v669 = vsel %vm283, %v640, 0
      %v672 = vsel %vm283, %v641, 0
      %v675 = vsel %vm283, %v642, 0
      %v678 = vsel %vm283, %v643, 0
      %v681 = vsel %vm283, %v644, 0
      %v684 = vsel %vm283, %v645, 0
      %v687 = vsel %vm283, %v646, 0
      %v690 = vsel %vm283, %v647, 0
      %v693 = vsel %vm283, %v648, 0
      %v696 = vsel %vm283, %v649, 0
      %v699 = vsel %vm283, %v650, 0
      %v702 = vsel %vm283, %v651, 0
      %v705 = vsel %vm283, %v652, 0
      %v708 = vsel %vm283, %v653, 0
      %v711 = vand.u32 %v655, %v341
      %713 = vmatpush.bf16.msra.mxu0 0
      %714 = vmatpush.bf16.msra.mxu0 0
      %715 = vmatpush.bf16.msra.mxu0 0
      %716 = vmatpush.bf16.msra.mxu0 0
      %717 = vmatpush.bf16.msra.mxu0 0
      %718 = vmatpush.bf16.msra.mxu0 0
      %719 = vmatpush.bf16.msra.mxu0 0
      %720 = vmatpush.bf16.msra.mxu0 %v711
      %721 = vmatmul.bf16.gmra.mxu0 %v657
      %v722 = vpop.f32.mrf.mxu0
      %v723 = vadd.f32 0.0, %v722
      %v724 = vpop.f32.mrf.mxu0
      %v725 = vadd.f32 0.0, %v724
      %726 = vmatmul.bf16.gmra.mxu0 %v660
      %v727 = vpop.f32.mrf.mxu0
      %v728 = vadd.f32 0.0, %v727
      %v729 = vpop.f32.mrf.mxu0
      %v730 = vadd.f32 0.0, %v729
      %731 = vmatmul.bf16.gmra.mxu0 %v663
      %v732 = vpop.f32.mrf.mxu0
      %v733 = vadd.f32 0.0, %v732
      %v734 = vpop.f32.mrf.mxu0
      %v735 = vadd.f32 0.0, %v734
      %736 = vmatmul.bf16.gmra.mxu0 %v666
      %v737 = vpop.f32.mrf.mxu0
      %v738 = vadd.f32 0.0, %v737
      %v739 = vpop.f32.mrf.mxu0
      %v740 = vadd.f32 0.0, %v739
      %741 = vmatmul.bf16.gmra.mxu0 %v669
      %v742 = vpop.f32.mrf.mxu0
      %v743 = vadd.f32 0.0, %v742
      %v744 = vpop.f32.mrf.mxu0
      %v745 = vadd.f32 0.0, %v744
      %746 = vmatmul.bf16.gmra.mxu0 %v672
      %v747 = vpop.f32.mrf.mxu0
      %v748 = vadd.f32 0.0, %v747
      %v749 = vpop.f32.mrf.mxu0
      %v750 = vadd.f32 0.0, %v749
      %751 = vmatmul.bf16.gmra.mxu0 %v675
      %v752 = vpop.f32.mrf.mxu0
      %v753 = vadd.f32 0.0, %v752
      %v754 = vpop.f32.mrf.mxu0
      %v755 = vadd.f32 0.0, %v754
      %756 = vmatmul.bf16.gmra.mxu0 %v678
      %v757 = vpop.f32.mrf.mxu0
      %v758 = vadd.f32 0.0, %v757
      %v759 = vpop.f32.mrf.mxu0
      %v760 = vadd.f32 0.0, %v759
      %761 = vmatmul.bf16.gmra.mxu0 %v681
      %v762 = vpop.f32.mrf.mxu0
      %v763 = vadd.f32 0.0, %v762
      %v764 = vpop.f32.mrf.mxu0
      %v765 = vadd.f32 0.0, %v764
      %766 = vmatmul.bf16.gmra.mxu0 %v684
      %v767 = vpop.f32.mrf.mxu0
      %v768 = vadd.f32 0.0, %v767
      %v769 = vpop.f32.mrf.mxu0
      %v770 = vadd.f32 0.0, %v769
      %771 = vmatmul.bf16.gmra.mxu0 %v687
      %v772 = vpop.f32.mrf.mxu0
      %v773 = vadd.f32 0.0, %v772
      %v774 = vpop.f32.mrf.mxu0
      %v775 = vadd.f32 0.0, %v774
      %776 = vmatmul.bf16.gmra.mxu0 %v690
      %v777 = vpop.f32.mrf.mxu0
      %v778 = vadd.f32 0.0, %v777
      %v779 = vpop.f32.mrf.mxu0
      %v780 = vadd.f32 0.0, %v779
      %781 = vmatmul.bf16.gmra.mxu0 %v693
      %v782 = vpop.f32.mrf.mxu0
      %v783 = vadd.f32 0.0, %v782
      %v784 = vpop.f32.mrf.mxu0
      %v785 = vadd.f32 0.0, %v784
      %786 = vmatmul.bf16.gmra.mxu0 %v696
      %v787 = vpop.f32.mrf.mxu0
      %v788 = vadd.f32 0.0, %v787
      %v789 = vpop.f32.mrf.mxu0
      %v790 = vadd.f32 0.0, %v789
      %791 = vmatmul.bf16.gmra.mxu0 %v699
      %v792 = vpop.f32.mrf.mxu0
      %v793 = vadd.f32 0.0, %v792
      %v794 = vpop.f32.mrf.mxu0
      %v795 = vadd.f32 0.0, %v794
      %796 = vmatmul.bf16.gmra.mxu0 %v702
      %v797 = vpop.f32.mrf.mxu0
      %v798 = vadd.f32 0.0, %v797
      %v799 = vpop.f32.mrf.mxu0
      %v800 = vadd.f32 0.0, %v799
      %801 = vmatmul.bf16.gmra.mxu0 %v705
      %v802 = vpop.f32.mrf.mxu0
      %v803 = vadd.f32 0.0, %v802
      %v804 = vpop.f32.mrf.mxu0
      %v805 = vadd.f32 0.0, %v804
      %806 = vmatmul.bf16.gmra.mxu0 %v708
      %v807 = vpop.f32.mrf.mxu0
      %v808 = vadd.f32 0.0, %v807
      %v809 = vpop.f32.mrf.mxu0
      %v810 = vadd.f32 0.0, %v809
      %811 = vdwg.mxu0
      %v812 = vadd.f32 %v511, %v723
      %v813 = vadd.f32 %v513, %v725
      %v814 = vadd.f32 %v516, %v728
      %v815 = vadd.f32 %v518, %v730
      %v816 = vadd.f32 %v521, %v733
      %v817 = vadd.f32 %v523, %v735
      %v818 = vadd.f32 %v526, %v738
      %v819 = vadd.f32 %v528, %v740
      %v820 = vadd.f32 %v531, %v743
      %v821 = vadd.f32 %v533, %v745
      %v822 = vadd.f32 %v536, %v748
      %v823 = vadd.f32 %v538, %v750
      %v824 = vadd.f32 %v541, %v753
      %v825 = vadd.f32 %v543, %v755
      %v826 = vadd.f32 %v546, %v758
      %v827 = vadd.f32 %v548, %v760
      %v828 = vadd.f32 %v551, %v763
      %v829 = vadd.f32 %v553, %v765
      %v830 = vadd.f32 %v556, %v768
      %v831 = vadd.f32 %v558, %v770
      %v832 = vadd.f32 %v561, %v773
      %v833 = vadd.f32 %v563, %v775
      %v834 = vadd.f32 %v566, %v778
      %v835 = vadd.f32 %v568, %v780
      %v836 = vadd.f32 %v571, %v783
      %v837 = vadd.f32 %v573, %v785
      %v838 = vadd.f32 %v576, %v788
      %v839 = vadd.f32 %v578, %v790
      %v840 = vadd.f32 %v581, %v793
      %v841 = vadd.f32 %v583, %v795
      %v842 = vadd.f32 %v586, %v798
      %v843 = vadd.f32 %v588, %v800
      %v844 = vadd.f32 %v591, %v803
      %v845 = vadd.f32 %v593, %v805
      %v846 = vadd.f32 %v596, %v808
      %v847 = vadd.f32 %v598, %v810
      %v848 = vld [vmem:[%s165 + $0x12] sm:$0xff]
      %v849 = vld [vmem:[%s165 + $0x1a] sm:$0xff]
      %v850 = vld [vmem:[%s165 + $0x22] sm:$0xff]
      %v851 = vld [vmem:[%s165 + $0x2a] sm:$0xff]
      %v852 = vld [vmem:[%s165 + $0x32] sm:$0xff]
      %v853 = vld [vmem:[%s165 + $0x3a] sm:$0xff]
      %v854 = vld [vmem:[%s165 + $0x42] sm:$0xff]
      %v855 = vld [vmem:[%s165 + $0x4a] sm:$0xff]
      %v856 = vld [vmem:[%s165 + $0x52] sm:$0xff]
      %v857 = vld [vmem:[%s165 + $0x5a] sm:$0xff]
      %v858 = vld [vmem:[%s165 + $0x62] sm:$0xff]
      %v859 = vld [vmem:[%s165 + $0x6a] sm:$0xff]
      %v860 = vld [vmem:[%s165 + $0x72] sm:$0xff]
      %v861 = vld [vmem:[%s165 + $0x7a] sm:$0xff]
      %v862 = vld [vmem:[%s165 + $0x82] sm:$0xff]
      %v863 = vld [vmem:[%s165 + $0x8a] sm:$0xff]
      %v864 = vld [vmem:[%s165 + $0x92] sm:$0xff]
      %v865 = vld [vmem:[%s165 + $0x9a] sm:$0xff]
      %v866 = vld [vmem:[%s165 + $0xa2] sm:$0xff]
      %v867 = vld [vmem:[%s165 + $0xaa] sm:$0xff]
      %v868 = vld [vmem:[%s165 + $0xb2] sm:$0xff]
      %v869 = vld [vmem:[%s165 + $0xba] sm:$0xff]
      %v870 = vld [vmem:[%s165 + $0xc2] sm:$0xff]
      %v871 = vld [vmem:[%s165 + $0xca] sm:$0xff]
      %v872 = vld [vmem:[%s165 + $0xd2] sm:$0xff]
      %v873 = vld [vmem:[%s165 + $0xda] sm:$0xff]
      %v874 = vld [vmem:[%s165 + $0xe2] sm:$0xff]
      %v875 = vld [vmem:[%s165 + $0xea] sm:$0xff]
      %v876 = vld [vmem:[%s165 + $0xf2] sm:$0xff]
      %v877 = vld [vmem:[%s165 + $0xfa] sm:$0xff]
      %v878 = vld [vmem:[%s165 + $0x102] sm:$0xff]
      %v879 = vld [vmem:[%s165 + $0x10a] sm:$0xff]
      %v880 = vld [vmem:[%s165 + $0x112] sm:$0xff]
      %v881 = vld [vmem:[%s165 + $0x11a] sm:$0xff]
      %v882 = vld [vmem:[%s165 + $0x122] sm:$0xff]
      %v883 = vld [vmem:[%s165 + $0x12a] sm:$0xff]
      %v884 = vpack.c.bf16 %v849, %v848
      %v885 = vpack.c.bf16 %v851, %v850
      %v886 = vpack.c.bf16 %v853, %v852
      %v887 = vpack.c.bf16 %v855, %v854
      %v888 = vpack.c.bf16 %v857, %v856
      %v889 = vpack.c.bf16 %v859, %v858
      %v890 = vpack.c.bf16 %v861, %v860
      %v891 = vpack.c.bf16 %v863, %v862
      %v892 = vpack.c.bf16 %v865, %v864
      %v893 = vpack.c.bf16 %v867, %v866
      %v894 = vpack.c.bf16 %v869, %v868
      %v895 = vpack.c.bf16 %v871, %v870
      %v896 = vpack.c.bf16 %v873, %v872
      %v897 = vpack.c.bf16 %v875, %v874
      %v898 = vpack.c.bf16 %v877, %v876
      %v899 = vpack.c.bf16 %v879, %v878
      %v900 = vpack.c.bf16 %v881, %v880
      %v901 = vpack.c.bf16 %v883, %v882
      %s902 = scalar_lea.vmem %s1, 6
      %v903 = vld [vmem:[%s902] sm:$0x3]
      %v905 = vsel %vm283, %v884, 0
      %v908 = vsel %vm283, %v885, 0
      %v911 = vsel %vm283, %v886, 0
      %v914 = vsel %vm283, %v887, 0
      %v917 = vsel %vm283, %v888, 0
      %v920 = vsel %vm283, %v889, 0
      %v923 = vsel %vm283, %v890, 0
      %v926 = vsel %vm283, %v891, 0
      %v929 = vsel %vm283, %v892, 0
      %v932 = vsel %vm283, %v893, 0
      %v935 = vsel %vm283, %v894, 0
      %v938 = vsel %vm283, %v895, 0
      %v941 = vsel %vm283, %v896, 0
      %v944 = vsel %vm283, %v897, 0
      %v947 = vsel %vm283, %v898, 0
      %v950 = vsel %vm283, %v899, 0
      %v953 = vsel %vm283, %v900, 0
      %v956 = vsel %vm283, %v901, 0
      %v959 = vand.u32 %v903, %v341
      %961 = vmatpush.bf16.msra.mxu0 0
      %962 = vmatpush.bf16.msra.mxu0 0
      %963 = vmatpush.bf16.msra.mxu0 0
      %964 = vmatpush.bf16.msra.mxu0 0
      %965 = vmatpush.bf16.msra.mxu0 0
      %966 = vmatpush.bf16.msra.mxu0 0
      %967 = vmatpush.bf16.msra.mxu0 0
      %968 = vmatpush.bf16.msra.mxu0 %v959
      %969 = vmatmul.bf16.gmra.mxu0 %v905
      %v970 = vpop.f32.mrf.mxu0
      %v971 = vadd.f32 0.0, %v970
      %v972 = vpop.f32.mrf.mxu0
      %v973 = vadd.f32 0.0, %v972
      %974 = vmatmul.bf16.gmra.mxu0 %v908
      %v975 = vpop.f32.mrf.mxu0
      %v976 = vadd.f32 0.0, %v975
      %v977 = vpop.f32.mrf.mxu0
      %v978 = vadd.f32 0.0, %v977
      %979 = vmatmul.bf16.gmra.mxu0 %v911
      %v980 = vpop.f32.mrf.mxu0
      %v981 = vadd.f32 0.0, %v980
      %v982 = vpop.f32.mrf.mxu0
      %v983 = vadd.f32 0.0, %v982
      %984 = vmatmul.bf16.gmra.mxu0 %v914
      %v985 = vpop.f32.mrf.mxu0
      %v986 = vadd.f32 0.0, %v985
      %v987 = vpop.f32.mrf.mxu0
      %v988 = vadd.f32 0.0, %v987
      %989 = vmatmul.bf16.gmra.mxu0 %v917
      %v990 = vpop.f32.mrf.mxu0
      %v991 = vadd.f32 0.0, %v990
      %v992 = vpop.f32.mrf.mxu0
      %v993 = vadd.f32 0.0, %v992
      %994 = vmatmul.bf16.gmra.mxu0 %v920
      %v995 = vpop.f32.mrf.mxu0
      %v996 = vadd.f32 0.0, %v995
      %v997 = vpop.f32.mrf.mxu0
      %v998 = vadd.f32 0.0, %v997
      %999 = vmatmul.bf16.gmra.mxu0 %v923
      %v1000 = vpop.f32.mrf.mxu0
      %v1001 = vadd.f32 0.0, %v1000
      %v1002 = vpop.f32.mrf.mxu0
      %v1003 = vadd.f32 0.0, %v1002
      %1004 = vmatmul.bf16.gmra.mxu0 %v926
      %v1005 = vpop.f32.mrf.mxu0
      %v1006 = vadd.f32 0.0, %v1005
      %v1007 = vpop.f32.mrf.mxu0
      %v1008 = vadd.f32 0.0, %v1007
      %1009 = vmatmul.bf16.gmra.mxu0 %v929
      %v1010 = vpop.f32.mrf.mxu0
      %v1011 = vadd.f32 0.0, %v1010
      %v1012 = vpop.f32.mrf.mxu0
      %v1013 = vadd.f32 0.0, %v1012
      %1014 = vmatmul.bf16.gmra.mxu0 %v932
      %v1015 = vpop.f32.mrf.mxu0
      %v1016 = vadd.f32 0.0, %v1015
      %v1017 = vpop.f32.mrf.mxu0
      %v1018 = vadd.f32 0.0, %v1017
      %1019 = vmatmul.bf16.gmra.mxu0 %v935
      %v1020 = vpop.f32.mrf.mxu0
      %v1021 = vadd.f32 0.0, %v1020
      %v1022 = vpop.f32.mrf.mxu0
      %v1023 = vadd.f32 0.0, %v1022
      %1024 = vmatmul.bf16.gmra.mxu0 %v938
      %v1025 = vpop.f32.mrf.mxu0
      %v1026 = vadd.f32 0.0, %v1025
      %v1027 = vpop.f32.mrf.mxu0
      %v1028 = vadd.f32 0.0, %v1027
      %1029 = vmatmul.bf16.gmra.mxu0 %v941
      %v1030 = vpop.f32.mrf.mxu0
      %v1031 = vadd.f32 0.0, %v1030
      %v1032 = vpop.f32.mrf.mxu0
      %v1033 = vadd.f32 0.0, %v1032
      %1034 = vmatmul.bf16.gmra.mxu0 %v944
      %v1035 = vpop.f32.mrf.mxu0
      %v1036 = vadd.f32 0.0, %v1035
      %v1037 = vpop.f32.mrf.mxu0
      %v1038 = vadd.f32 0.0, %v1037
      %1039 = vmatmul.bf16.gmra.mxu0 %v947
      %v1040 = vpop.f32.mrf.mxu0
      %v1041 = vadd.f32 0.0, %v1040
      %v1042 = vpop.f32.mrf.mxu0
      %v1043 = vadd.f32 0.0, %v1042
      %1044 = vmatmul.bf16.gmra.mxu0 %v950
      %v1045 = vpop.f32.mrf.mxu0
      %v1046 = vadd.f32 0.0, %v1045
      %v1047 = vpop.f32.mrf.mxu0
      %v1048 = vadd.f32 0.0, %v1047
      %1049 = vmatmul.bf16.gmra.mxu0 %v953
      %v1050 = vpop.f32.mrf.mxu0
      %v1051 = vadd.f32 0.0, %v1050
      %v1052 = vpop.f32.mrf.mxu0
      %v1053 = vadd.f32 0.0, %v1052
      %1054 = vmatmul.bf16.gmra.mxu0 %v956
      %v1055 = vpop.f32.mrf.mxu0
      %v1056 = vadd.f32 0.0, %v1055
      %v1057 = vpop.f32.mrf.mxu0
      %v1058 = vadd.f32 0.0, %v1057
      %1059 = vdwg.mxu0
      %v1060 = vadd.f32 %v812, %v971
      %v1061 = vadd.f32 %v813, %v973
      %v1062 = vadd.f32 %v814, %v976
      %v1063 = vadd.f32 %v815, %v978
      %v1064 = vadd.f32 %v816, %v981
      %v1065 = vadd.f32 %v817, %v983
      %v1066 = vadd.f32 %v818, %v986
      %v1067 = vadd.f32 %v819, %v988
      %v1068 = vadd.f32 %v820, %v991
      %v1069 = vadd.f32 %v821, %v993
      %v1070 = vadd.f32 %v822, %v996
      %v1071 = vadd.f32 %v823, %v998
      %v1072 = vadd.f32 %v824, %v1001
      %v1073 = vadd.f32 %v825, %v1003
      %v1074 = vadd.f32 %v826, %v1006
      %v1075 = vadd.f32 %v827, %v1008
      %v1076 = vadd.f32 %v828, %v1011
      %v1077 = vadd.f32 %v829, %v1013
      %v1078 = vadd.f32 %v830, %v1016
      %v1079 = vadd.f32 %v831, %v1018
      %v1080 = vadd.f32 %v832, %v1021
      %v1081 = vadd.f32 %v833, %v1023
      %v1082 = vadd.f32 %v834, %v1026
      %v1083 = vadd.f32 %v835, %v1028
      %v1084 = vadd.f32 %v836, %v1031
      %v1085 = vadd.f32 %v837, %v1033
      %v1086 = vadd.f32 %v838, %v1036
      %v1087 = vadd.f32 %v839, %v1038
      %v1088 = vadd.f32 %v840, %v1041
      %v1089 = vadd.f32 %v841, %v1043
      %v1090 = vadd.f32 %v842, %v1046
      %v1091 = vadd.f32 %v843, %v1048
      %v1092 = vadd.f32 %v844, %v1051
      %v1093 = vadd.f32 %v845, %v1053
      %v1094 = vadd.f32 %v846, %v1056
      %v1095 = vadd.f32 %v847, %v1058
      %v1096 = vld [vmem:[%s165 + $0x13] sm:$0xff]
      %v1097 = vld [vmem:[%s165 + $0x1b] sm:$0xff]
      %v1098 = vld [vmem:[%s165 + $0x23] sm:$0xff]
      %v1099 = vld [vmem:[%s165 + $0x2b] sm:$0xff]
      %v1100 = vld [vmem:[%s165 + $0x33] sm:$0xff]
      %v1101 = vld [vmem:[%s165 + $0x3b] sm:$0xff]
      %v1102 = vld [vmem:[%s165 + $0x43] sm:$0xff]
      %v1103 = vld [vmem:[%s165 + $0x4b] sm:$0xff]
      %v1104 = vld [vmem:[%s165 + $0x53] sm:$0xff]
      %v1105 = vld [vmem:[%s165 + $0x5b] sm:$0xff]
      %v1106 = vld [vmem:[%s165 + $0x63] sm:$0xff]
      %v1107 = vld [vmem:[%s165 + $0x6b] sm:$0xff]
      %v1108 = vld [vmem:[%s165 + $0x73] sm:$0xff]
      %v1109 = vld [vmem:[%s165 + $0x7b] sm:$0xff]
      %v1110 = vld [vmem:[%s165 + $0x83] sm:$0xff]
      %v1111 = vld [vmem:[%s165 + $0x8b] sm:$0xff]
      %v1112 = vld [vmem:[%s165 + $0x93] sm:$0xff]
      %v1113 = vld [vmem:[%s165 + $0x9b] sm:$0xff]
      %v1114 = vld [vmem:[%s165 + $0xa3] sm:$0xff]
      %v1115 = vld [vmem:[%s165 + $0xab] sm:$0xff]
      %v1116 = vld [vmem:[%s165 + $0xb3] sm:$0xff]
      %v1117 = vld [vmem:[%s165 + $0xbb] sm:$0xff]
      %v1118 = vld [vmem:[%s165 + $0xc3] sm:$0xff]
      %v1119 = vld [vmem:[%s165 + $0xcb] sm:$0xff]
      %v1120 = vld [vmem:[%s165 + $0xd3] sm:$0xff]
      %v1121 = vld [vmem:[%s165 + $0xdb] sm:$0xff]
      %v1122 = vld [vmem:[%s165 + $0xe3] sm:$0xff]
      %v1123 = vld [vmem:[%s165 + $0xeb] sm:$0xff]
      %v1124 = vld [vmem:[%s165 + $0xf3] sm:$0xff]
      %v1125 = vld [vmem:[%s165 + $0xfb] sm:$0xff]
      %v1126 = vld [vmem:[%s165 + $0x103] sm:$0xff]
      %v1127 = vld [vmem:[%s165 + $0x10b] sm:$0xff]
      %v1128 = vld [vmem:[%s165 + $0x113] sm:$0xff]
      %v1129 = vld [vmem:[%s165 + $0x11b] sm:$0xff]
      %v1130 = vld [vmem:[%s165 + $0x123] sm:$0xff]
      %v1131 = vld [vmem:[%s165 + $0x12b] sm:$0xff]
      %v1132 = vpack.c.bf16 %v1097, %v1096
      %v1133 = vpack.c.bf16 %v1099, %v1098
      %v1134 = vpack.c.bf16 %v1101, %v1100
      %v1135 = vpack.c.bf16 %v1103, %v1102
      %v1136 = vpack.c.bf16 %v1105, %v1104
      %v1137 = vpack.c.bf16 %v1107, %v1106
      %v1138 = vpack.c.bf16 %v1109, %v1108
      %v1139 = vpack.c.bf16 %v1111, %v1110
      %v1140 = vpack.c.bf16 %v1113, %v1112
      %v1141 = vpack.c.bf16 %v1115, %v1114
      %v1142 = vpack.c.bf16 %v1117, %v1116
      %v1143 = vpack.c.bf16 %v1119, %v1118
      %v1144 = vpack.c.bf16 %v1121, %v1120
      %v1145 = vpack.c.bf16 %v1123, %v1122
      %v1146 = vpack.c.bf16 %v1125, %v1124
      %v1147 = vpack.c.bf16 %v1127, %v1126
      %v1148 = vpack.c.bf16 %v1129, %v1128
      %v1149 = vpack.c.bf16 %v1131, %v1130
      %s1150 = scalar_lea.vmem %s1, 8
      %v1151 = vld [vmem:[%s1150] sm:$0x3]
      %v1153 = vsel %vm283, %v1132, 0
      %v1156 = vsel %vm283, %v1133, 0
      %v1159 = vsel %vm283, %v1134, 0
      %v1162 = vsel %vm283, %v1135, 0
      %v1165 = vsel %vm283, %v1136, 0
      %v1168 = vsel %vm283, %v1137, 0
      %v1171 = vsel %vm283, %v1138, 0
      %v1174 = vsel %vm283, %v1139, 0
      %v1177 = vsel %vm283, %v1140, 0
      %v1180 = vsel %vm283, %v1141, 0
      %v1183 = vsel %vm283, %v1142, 0
      %v1186 = vsel %vm283, %v1143, 0
      %v1189 = vsel %vm283, %v1144, 0
      %v1192 = vsel %vm283, %v1145, 0
      %v1195 = vsel %vm283, %v1146, 0
      %v1198 = vsel %vm283, %v1147, 0
      %v1201 = vsel %vm283, %v1148, 0
      %v1204 = vsel %vm283, %v1149, 0
      %v1207 = vand.u32 %v1151, %v341
      %1209 = vmatpush.bf16.msra.mxu0 0
      %1210 = vmatpush.bf16.msra.mxu0 0
      %1211 = vmatpush.bf16.msra.mxu0 0
      %1212 = vmatpush.bf16.msra.mxu0 0
      %1213 = vmatpush.bf16.msra.mxu0 0
      %1214 = vmatpush.bf16.msra.mxu0 0
      %1215 = vmatpush.bf16.msra.mxu0 0
      %1216 = vmatpush.bf16.msra.mxu0 %v1207
      %1217 = vmatmul.bf16.gmra.mxu0 %v1153
      %v1218 = vpop.f32.mrf.mxu0
      %v1219 = vadd.f32 0.0, %v1218
      %v1220 = vpop.f32.mrf.mxu0
      %v1221 = vadd.f32 0.0, %v1220
      %1222 = vmatmul.bf16.gmra.mxu0 %v1156
      %v1223 = vpop.f32.mrf.mxu0
      %v1224 = vadd.f32 0.0, %v1223
      %v1225 = vpop.f32.mrf.mxu0
      %v1226 = vadd.f32 0.0, %v1225
      %1227 = vmatmul.bf16.gmra.mxu0 %v1159
      %v1228 = vpop.f32.mrf.mxu0
      %v1229 = vadd.f32 0.0, %v1228
      %v1230 = vpop.f32.mrf.mxu0
      %v1231 = vadd.f32 0.0, %v1230
      %1232 = vmatmul.bf16.gmra.mxu0 %v1162
      %v1233 = vpop.f32.mrf.mxu0
      %v1234 = vadd.f32 0.0, %v1233
      %v1235 = vpop.f32.mrf.mxu0
      %v1236 = vadd.f32 0.0, %v1235
      %1237 = vmatmul.bf16.gmra.mxu0 %v1165
      %v1238 = vpop.f32.mrf.mxu0
      %v1239 = vadd.f32 0.0, %v1238
      %v1240 = vpop.f32.mrf.mxu0
      %v1241 = vadd.f32 0.0, %v1240
      %1242 = vmatmul.bf16.gmra.mxu0 %v1168
      %v1243 = vpop.f32.mrf.mxu0
      %v1244 = vadd.f32 0.0, %v1243
      %v1245 = vpop.f32.mrf.mxu0
      %v1246 = vadd.f32 0.0, %v1245
      %1247 = vmatmul.bf16.gmra.mxu0 %v1171
      %v1248 = vpop.f32.mrf.mxu0
      %v1249 = vadd.f32 0.0, %v1248
      %v1250 = vpop.f32.mrf.mxu0
      %v1251 = vadd.f32 0.0, %v1250
      %1252 = vmatmul.bf16.gmra.mxu0 %v1174
      %v1253 = vpop.f32.mrf.mxu0
      %v1254 = vadd.f32 0.0, %v1253
      %v1255 = vpop.f32.mrf.mxu0
      %v1256 = vadd.f32 0.0, %v1255
      %1257 = vmatmul.bf16.gmra.mxu0 %v1177
      %v1258 = vpop.f32.mrf.mxu0
      %v1259 = vadd.f32 0.0, %v1258
      %v1260 = vpop.f32.mrf.mxu0
      %v1261 = vadd.f32 0.0, %v1260
      %1262 = vmatmul.bf16.gmra.mxu0 %v1180
      %v1263 = vpop.f32.mrf.mxu0
      %v1264 = vadd.f32 0.0, %v1263
      %v1265 = vpop.f32.mrf.mxu0
      %v1266 = vadd.f32 0.0, %v1265
      %1267 = vmatmul.bf16.gmra.mxu0 %v1183
      %v1268 = vpop.f32.mrf.mxu0
      %v1269 = vadd.f32 0.0, %v1268
      %v1270 = vpop.f32.mrf.mxu0
      %v1271 = vadd.f32 0.0, %v1270
      %1272 = vmatmul.bf16.gmra.mxu0 %v1186
      %v1273 = vpop.f32.mrf.mxu0
      %v1274 = vadd.f32 0.0, %v1273
      %v1275 = vpop.f32.mrf.mxu0
      %v1276 = vadd.f32 0.0, %v1275
      %1277 = vmatmul.bf16.gmra.mxu0 %v1189
      %v1278 = vpop.f32.mrf.mxu0
      %v1279 = vadd.f32 0.0, %v1278
      %v1280 = vpop.f32.mrf.mxu0
      %v1281 = vadd.f32 0.0, %v1280
      %1282 = vmatmul.bf16.gmra.mxu0 %v1192
      %v1283 = vpop.f32.mrf.mxu0
      %v1284 = vadd.f32 0.0, %v1283
      %v1285 = vpop.f32.mrf.mxu0
      %v1286 = vadd.f32 0.0, %v1285
      %1287 = vmatmul.bf16.gmra.mxu0 %v1195
      %v1288 = vpop.f32.mrf.mxu0
      %v1289 = vadd.f32 0.0, %v1288
      %v1290 = vpop.f32.mrf.mxu0
      %v1291 = vadd.f32 0.0, %v1290
      %1292 = vmatmul.bf16.gmra.mxu0 %v1198
      %v1293 = vpop.f32.mrf.mxu0
      %v1294 = vadd.f32 0.0, %v1293
      %v1295 = vpop.f32.mrf.mxu0
      %v1296 = vadd.f32 0.0, %v1295
      %1297 = vmatmul.bf16.gmra.mxu0 %v1201
      %v1298 = vpop.f32.mrf.mxu0
      %v1299 = vadd.f32 0.0, %v1298
      %v1300 = vpop.f32.mrf.mxu0
      %v1301 = vadd.f32 0.0, %v1300
      %1302 = vmatmul.bf16.gmra.mxu0 %v1204
      %v1303 = vpop.f32.mrf.mxu0
      %v1304 = vadd.f32 0.0, %v1303
      %v1305 = vpop.f32.mrf.mxu0
      %v1306 = vadd.f32 0.0, %v1305
      %1307 = vdwg.mxu0
      %v1308 = vadd.f32 %v1060, %v1219
      %v1309 = vadd.f32 %v1061, %v1221
      %v1310 = vadd.f32 %v1062, %v1224
      %v1311 = vadd.f32 %v1063, %v1226
      %v1312 = vadd.f32 %v1064, %v1229
      %v1313 = vadd.f32 %v1065, %v1231
      %v1314 = vadd.f32 %v1066, %v1234
      %v1315 = vadd.f32 %v1067, %v1236
      %v1316 = vadd.f32 %v1068, %v1239
      %v1317 = vadd.f32 %v1069, %v1241
      %v1318 = vadd.f32 %v1070, %v1244
      %v1319 = vadd.f32 %v1071, %v1246
      %v1320 = vadd.f32 %v1072, %v1249
      %v1321 = vadd.f32 %v1073, %v1251
      %v1322 = vadd.f32 %v1074, %v1254
      %v1323 = vadd.f32 %v1075, %v1256
      %v1324 = vadd.f32 %v1076, %v1259
      %v1325 = vadd.f32 %v1077, %v1261
      %v1326 = vadd.f32 %v1078, %v1264
      %v1327 = vadd.f32 %v1079, %v1266
      %v1328 = vadd.f32 %v1080, %v1269
      %v1329 = vadd.f32 %v1081, %v1271
      %v1330 = vadd.f32 %v1082, %v1274
      %v1331 = vadd.f32 %v1083, %v1276
      %v1332 = vadd.f32 %v1084, %v1279
      %v1333 = vadd.f32 %v1085, %v1281
      %v1334 = vadd.f32 %v1086, %v1284
      %v1335 = vadd.f32 %v1087, %v1286
      %v1336 = vadd.f32 %v1088, %v1289
      %v1337 = vadd.f32 %v1089, %v1291
      %v1338 = vadd.f32 %v1090, %v1294
      %v1339 = vadd.f32 %v1091, %v1296
      %v1340 = vadd.f32 %v1092, %v1299
      %v1341 = vadd.f32 %v1093, %v1301
      %v1342 = vadd.f32 %v1094, %v1304
      %v1343 = vadd.f32 %v1095, %v1306
      %v1344 = vld [vmem:[%s165 + $0x14] sm:$0xff]
      %v1345 = vld [vmem:[%s165 + $0x1c] sm:$0xff]
      %v1346 = vld [vmem:[%s165 + $0x24] sm:$0xff]
      %v1347 = vld [vmem:[%s165 + $0x2c] sm:$0xff]
      %v1348 = vld [vmem:[%s165 + $0x34] sm:$0xff]
      %v1349 = vld [vmem:[%s165 + $0x3c] sm:$0xff]
      %v1350 = vld [vmem:[%s165 + $0x44] sm:$0xff]
      %v1351 = vld [vmem:[%s165 + $0x4c] sm:$0xff]
      %v1352 = vld [vmem:[%s165 + $0x54] sm:$0xff]
      %v1353 = vld [vmem:[%s165 + $0x5c] sm:$0xff]
      %v1354 = vld [vmem:[%s165 + $0x64] sm:$0xff]
      %v1355 = vld [vmem:[%s165 + $0x6c] sm:$0xff]
      %v1356 = vld [vmem:[%s165 + $0x74] sm:$0xff]
      %v1357 = vld [vmem:[%s165 + $0x7c] sm:$0xff]
      %v1358 = vld [vmem:[%s165 + $0x84] sm:$0xff]
      %v1359 = vld [vmem:[%s165 + $0x8c] sm:$0xff]
      %v1360 = vld [vmem:[%s165 + $0x94] sm:$0xff]
      %v1361 = vld [vmem:[%s165 + $0x9c] sm:$0xff]
      %v1362 = vld [vmem:[%s165 + $0xa4] sm:$0xff]
      %v1363 = vld [vmem:[%s165 + $0xac] sm:$0xff]
      %v1364 = vld [vmem:[%s165 + $0xb4] sm:$0xff]
      %v1365 = vld [vmem:[%s165 + $0xbc] sm:$0xff]
      %v1366 = vld [vmem:[%s165 + $0xc4] sm:$0xff]
      %v1367 = vld [vmem:[%s165 + $0xcc] sm:$0xff]
      %v1368 = vld [vmem:[%s165 + $0xd4] sm:$0xff]
      %v1369 = vld [vmem:[%s165 + $0xdc] sm:$0xff]
      %v1370 = vld [vmem:[%s165 + $0xe4] sm:$0xff]
      %v1371 = vld [vmem:[%s165 + $0xec] sm:$0xff]
      %v1372 = vld [vmem:[%s165 + $0xf4] sm:$0xff]
      %v1373 = vld [vmem:[%s165 + $0xfc] sm:$0xff]
      %v1374 = vld [vmem:[%s165 + $0x104] sm:$0xff]
      %v1375 = vld [vmem:[%s165 + $0x10c] sm:$0xff]
      %v1376 = vld [vmem:[%s165 + $0x114] sm:$0xff]
      %v1377 = vld [vmem:[%s165 + $0x11c] sm:$0xff]
      %v1378 = vld [vmem:[%s165 + $0x124] sm:$0xff]
      %v1379 = vld [vmem:[%s165 + $0x12c] sm:$0xff]
      %v1380 = vpack.c.bf16 %v1345, %v1344
      %v1381 = vpack.c.bf16 %v1347, %v1346
      %v1382 = vpack.c.bf16 %v1349, %v1348
      %v1383 = vpack.c.bf16 %v1351, %v1350
      %v1384 = vpack.c.bf16 %v1353, %v1352
      %v1385 = vpack.c.bf16 %v1355, %v1354
      %v1386 = vpack.c.bf16 %v1357, %v1356
      %v1387 = vpack.c.bf16 %v1359, %v1358
      %v1388 = vpack.c.bf16 %v1361, %v1360
      %v1389 = vpack.c.bf16 %v1363, %v1362
      %v1390 = vpack.c.bf16 %v1365, %v1364
      %v1391 = vpack.c.bf16 %v1367, %v1366
      %v1392 = vpack.c.bf16 %v1369, %v1368
      %v1393 = vpack.c.bf16 %v1371, %v1370
      %v1394 = vpack.c.bf16 %v1373, %v1372
      %v1395 = vpack.c.bf16 %v1375, %v1374
      %v1396 = vpack.c.bf16 %v1377, %v1376
      %v1397 = vpack.c.bf16 %v1379, %v1378
      %s1398 = scalar_lea.vmem %s1, 10
      %v1399 = vld [vmem:[%s1398] sm:$0x3]
      %v1401 = vsel %vm283, %v1380, 0
      %v1404 = vsel %vm283, %v1381, 0
      %v1407 = vsel %vm283, %v1382, 0
      %v1410 = vsel %vm283, %v1383, 0
      %v1413 = vsel %vm283, %v1384, 0
      %v1416 = vsel %vm283, %v1385, 0
      %v1419 = vsel %vm283, %v1386, 0
      %v1422 = vsel %vm283, %v1387, 0
      %v1425 = vsel %vm283, %v1388, 0
      %v1428 = vsel %vm283, %v1389, 0
      %v1431 = vsel %vm283, %v1390, 0
      %v1434 = vsel %vm283, %v1391, 0
      %v1437 = vsel %vm283, %v1392, 0
      %v1440 = vsel %vm283, %v1393, 0
      %v1443 = vsel %vm283, %v1394, 0
      %v1446 = vsel %vm283, %v1395, 0
      %v1449 = vsel %vm283, %v1396, 0
      %v1452 = vsel %vm283, %v1397, 0
      %v1455 = vand.u32 %v1399, %v341
      %1457 = vmatpush.bf16.msra.mxu0 0
      %1458 = vmatpush.bf16.msra.mxu0 0
      %1459 = vmatpush.bf16.msra.mxu0 0
      %1460 = vmatpush.bf16.msra.mxu0 0
      %1461 = vmatpush.bf16.msra.mxu0 0
      %1462 = vmatpush.bf16.msra.mxu0 0
      %1463 = vmatpush.bf16.msra.mxu0 0
      %1464 = vmatpush.bf16.msra.mxu0 %v1455
      %1465 = vmatmul.bf16.gmra.mxu0 %v1401
      %v1466 = vpop.f32.mrf.mxu0
      %v1467 = vadd.f32 0.0, %v1466
      %v1468 = vpop.f32.mrf.mxu0
      %v1469 = vadd.f32 0.0, %v1468
      %1470 = vmatmul.bf16.gmra.mxu0 %v1404
      %v1471 = vpop.f32.mrf.mxu0
      %v1472 = vadd.f32 0.0, %v1471
      %v1473 = vpop.f32.mrf.mxu0
      %v1474 = vadd.f32 0.0, %v1473
      %1475 = vmatmul.bf16.gmra.mxu0 %v1407
      %v1476 = vpop.f32.mrf.mxu0
      %v1477 = vadd.f32 0.0, %v1476
      %v1478 = vpop.f32.mrf.mxu0
      %v1479 = vadd.f32 0.0, %v1478
      %1480 = vmatmul.bf16.gmra.mxu0 %v1410
      %v1481 = vpop.f32.mrf.mxu0
      %v1482 = vadd.f32 0.0, %v1481
      %v1483 = vpop.f32.mrf.mxu0
      %v1484 = vadd.f32 0.0, %v1483
      %1485 = vmatmul.bf16.gmra.mxu0 %v1413
      %v1486 = vpop.f32.mrf.mxu0
      %v1487 = vadd.f32 0.0, %v1486
      %v1488 = vpop.f32.mrf.mxu0
      %v1489 = vadd.f32 0.0, %v1488
      %1490 = vmatmul.bf16.gmra.mxu0 %v1416
      %v1491 = vpop.f32.mrf.mxu0
      %v1492 = vadd.f32 0.0, %v1491
      %v1493 = vpop.f32.mrf.mxu0
      %v1494 = vadd.f32 0.0, %v1493
      %1495 = vmatmul.bf16.gmra.mxu0 %v1419
      %v1496 = vpop.f32.mrf.mxu0
      %v1497 = vadd.f32 0.0, %v1496
      %v1498 = vpop.f32.mrf.mxu0
      %v1499 = vadd.f32 0.0, %v1498
      %1500 = vmatmul.bf16.gmra.mxu0 %v1422
      %v1501 = vpop.f32.mrf.mxu0
      %v1502 = vadd.f32 0.0, %v1501
      %v1503 = vpop.f32.mrf.mxu0
      %v1504 = vadd.f32 0.0, %v1503
      %1505 = vmatmul.bf16.gmra.mxu0 %v1425
      %v1506 = vpop.f32.mrf.mxu0
      %v1507 = vadd.f32 0.0, %v1506
      %v1508 = vpop.f32.mrf.mxu0
      %v1509 = vadd.f32 0.0, %v1508
      %1510 = vmatmul.bf16.gmra.mxu0 %v1428
      %v1511 = vpop.f32.mrf.mxu0
      %v1512 = vadd.f32 0.0, %v1511
      %v1513 = vpop.f32.mrf.mxu0
      %v1514 = vadd.f32 0.0, %v1513
      %1515 = vmatmul.bf16.gmra.mxu0 %v1431
      %v1516 = vpop.f32.mrf.mxu0
      %v1517 = vadd.f32 0.0, %v1516
      %v1518 = vpop.f32.mrf.mxu0
      %v1519 = vadd.f32 0.0, %v1518
      %1520 = vmatmul.bf16.gmra.mxu0 %v1434
      %v1521 = vpop.f32.mrf.mxu0
      %v1522 = vadd.f32 0.0, %v1521
      %v1523 = vpop.f32.mrf.mxu0
      %v1524 = vadd.f32 0.0, %v1523
      %1525 = vmatmul.bf16.gmra.mxu0 %v1437
      %v1526 = vpop.f32.mrf.mxu0
      %v1527 = vadd.f32 0.0, %v1526
      %v1528 = vpop.f32.mrf.mxu0
      %v1529 = vadd.f32 0.0, %v1528
      %1530 = vmatmul.bf16.gmra.mxu0 %v1440
      %v1531 = vpop.f32.mrf.mxu0
      %v1532 = vadd.f32 0.0, %v1531
      %v1533 = vpop.f32.mrf.mxu0
      %v1534 = vadd.f32 0.0, %v1533
      %1535 = vmatmul.bf16.gmra.mxu0 %v1443
      %v1536 = vpop.f32.mrf.mxu0
      %v1537 = vadd.f32 0.0, %v1536
      %v1538 = vpop.f32.mrf.mxu0
      %v1539 = vadd.f32 0.0, %v1538
      %1540 = vmatmul.bf16.gmra.mxu0 %v1446
      %v1541 = vpop.f32.mrf.mxu0
      %v1542 = vadd.f32 0.0, %v1541
      %v1543 = vpop.f32.mrf.mxu0
      %v1544 = vadd.f32 0.0, %v1543
      %1545 = vmatmul.bf16.gmra.mxu0 %v1449
      %v1546 = vpop.f32.mrf.mxu0
      %v1547 = vadd.f32 0.0, %v1546
      %v1548 = vpop.f32.mrf.mxu0
      %v1549 = vadd.f32 0.0, %v1548
      %1550 = vmatmul.bf16.gmra.mxu0 %v1452
      %v1551 = vpop.f32.mrf.mxu0
      %v1552 = vadd.f32 0.0, %v1551
      %v1553 = vpop.f32.mrf.mxu0
      %v1554 = vadd.f32 0.0, %v1553
      %1555 = vdwg.mxu0
      %v1556 = vadd.f32 %v1308, %v1467
      %v1557 = vadd.f32 %v1309, %v1469
      %v1558 = vadd.f32 %v1310, %v1472
      %v1559 = vadd.f32 %v1311, %v1474
      %v1560 = vadd.f32 %v1312, %v1477
      %v1561 = vadd.f32 %v1313, %v1479
      %v1562 = vadd.f32 %v1314, %v1482
      %v1563 = vadd.f32 %v1315, %v1484
      %v1564 = vadd.f32 %v1316, %v1487
      %v1565 = vadd.f32 %v1317, %v1489
      %v1566 = vadd.f32 %v1318, %v1492
      %v1567 = vadd.f32 %v1319, %v1494
      %v1568 = vadd.f32 %v1320, %v1497
      %v1569 = vadd.f32 %v1321, %v1499
      %v1570 = vadd.f32 %v1322, %v1502
      %v1571 = vadd.f32 %v1323, %v1504
      %v1572 = vadd.f32 %v1324, %v1507
      %v1573 = vadd.f32 %v1325, %v1509
      %v1574 = vadd.f32 %v1326, %v1512
      %v1575 = vadd.f32 %v1327, %v1514
      %v1576 = vadd.f32 %v1328, %v1517
      %v1577 = vadd.f32 %v1329, %v1519
      %v1578 = vadd.f32 %v1330, %v1522
      %v1579 = vadd.f32 %v1331, %v1524
      %v1580 = vadd.f32 %v1332, %v1527
      %v1581 = vadd.f32 %v1333, %v1529
      %v1582 = vadd.f32 %v1334, %v1532
      %v1583 = vadd.f32 %v1335, %v1534
      %v1584 = vadd.f32 %v1336, %v1537
      %v1585 = vadd.f32 %v1337, %v1539
      %v1586 = vadd.f32 %v1338, %v1542
      %v1587 = vadd.f32 %v1339, %v1544
      %v1588 = vadd.f32 %v1340, %v1547
      %v1589 = vadd.f32 %v1341, %v1549
      %v1590 = vadd.f32 %v1342, %v1552
      %v1591 = vadd.f32 %v1343, %v1554
      %v1592 = vld [vmem:[%s165 + $0x24] sm:$0xff]
      %v1593 = vld [vmem:[%s165 + $0x2c] sm:$0xff]
      %v1594 = vld [vmem:[%s165 + $0x34] sm:$0xff]
      %v1595 = vld [vmem:[%s165 + $0x3c] sm:$0xff]
      %v1596 = vld [vmem:[%s165 + $0x44] sm:$0xff]
      %v1597 = vld [vmem:[%s165 + $0x4c] sm:$0xff]
      %v1598 = vld [vmem:[%s165 + $0x54] sm:$0xff]
      %v1599 = vld [vmem:[%s165 + $0x5c] sm:$0xff]
      %v1600 = vld [vmem:[%s165 + $0x64] sm:$0xff]
      %v1601 = vld [vmem:[%s165 + $0x6c] sm:$0xff]
      %v1602 = vld [vmem:[%s165 + $0x74] sm:$0xff]
      %v1603 = vld [vmem:[%s165 + $0x7c] sm:$0xff]
      %v1604 = vld [vmem:[%s165 + $0x84] sm:$0xff]
      %v1605 = vld [vmem:[%s165 + $0x8c] sm:$0xff]
      %v1606 = vld [vmem:[%s165 + $0x94] sm:$0xff]
      %v1607 = vld [vmem:[%s165 + $0x9c] sm:$0xff]
      %v1608 = vld [vmem:[%s165 + $0xa4] sm:$0xff]
      %v1609 = vld [vmem:[%s165 + $0xac] sm:$0xff]
      %v1610 = vld [vmem:[%s165 + $0xb4] sm:$0xff]
      %v1611 = vld [vmem:[%s165 + $0xbc] sm:$0xff]
      %v1612 = vld [vmem:[%s165 + $0xc4] sm:$0xff]
      %v1613 = vld [vmem:[%s165 + $0xcc] sm:$0xff]
      %v1614 = vld [vmem:[%s165 + $0xd4] sm:$0xff]
      %v1615 = vld [vmem:[%s165 + $0xdc] sm:$0xff]
      %v1616 = vld [vmem:[%s165 + $0xe4] sm:$0xff]
      %v1617 = vld [vmem:[%s165 + $0xec] sm:$0xff]
      %v1618 = vld [vmem:[%s165 + $0xf4] sm:$0xff]
      %v1619 = vld [vmem:[%s165 + $0xfc] sm:$0xff]
      %v1620 = vld [vmem:[%s165 + $0x104] sm:$0xff]
      %v1621 = vld [vmem:[%s165 + $0x10c] sm:$0xff]
      %v1622 = vld [vmem:[%s165 + $0x114] sm:$0xff]
      %v1623 = vld [vmem:[%s165 + $0x11c] sm:$0xff]
      %v1624 = vld [vmem:[%s165 + $0x124] sm:$0xff]
      %v1625 = vld [vmem:[%s165 + $0x12c] sm:$0xff]
      %v1626 = vld [vmem:[%s165 + $0x134] sm:$0xff]
      %v1627 = vld [vmem:[%s165 + $0x13c] sm:$0xff]
      %v1628 = vpack.c.bf16 %v1593, %v1592
      %v1629 = vpack.c.bf16 %v1595, %v1594
      %v1630 = vpack.c.bf16 %v1597, %v1596
      %v1631 = vpack.c.bf16 %v1599, %v1598
      %v1632 = vpack.c.bf16 %v1601, %v1600
      %v1633 = vpack.c.bf16 %v1603, %v1602
      %v1634 = vpack.c.bf16 %v1605, %v1604
      %v1635 = vpack.c.bf16 %v1607, %v1606
      %v1636 = vpack.c.bf16 %v1609, %v1608
      %v1637 = vpack.c.bf16 %v1611, %v1610
      %v1638 = vpack.c.bf16 %v1613, %v1612
      %v1639 = vpack.c.bf16 %v1615, %v1614
      %v1640 = vpack.c.bf16 %v1617, %v1616
      %v1641 = vpack.c.bf16 %v1619, %v1618
      %v1642 = vpack.c.bf16 %v1621, %v1620
      %v1643 = vpack.c.bf16 %v1623, %v1622
      %v1644 = vpack.c.bf16 %v1625, %v1624
      %v1645 = vpack.c.bf16 %v1627, %v1626
      %s1646 = scalar_lea.vmem %s1, 12
      %v1647 = vld [vmem:[%s1646] sm:$0x3]
      %v1649 = vsel %vm283, %v1628, 0
      %v1652 = vsel %vm283, %v1629, 0
      %v1655 = vsel %vm283, %v1630, 0
      %v1658 = vsel %vm283, %v1631, 0
      %v1661 = vsel %vm283, %v1632, 0
      %v1664 = vsel %vm283, %v1633, 0
      %v1667 = vsel %vm283, %v1634, 0
      %v1670 = vsel %vm283, %v1635, 0
      %v1673 = vsel %vm283, %v1636, 0
      %v1676 = vsel %vm283, %v1637, 0
      %v1679 = vsel %vm283, %v1638, 0
      %v1682 = vsel %vm283, %v1639, 0
      %v1685 = vsel %vm283, %v1640, 0
      %v1688 = vsel %vm283, %v1641, 0
      %v1691 = vsel %vm283, %v1642, 0
      %v1694 = vsel %vm283, %v1643, 0
      %v1697 = vsel %vm283, %v1644, 0
      %v1700 = vsel %vm283, %v1645, 0
      %v1703 = vand.u32 %v1647, %v341
      %1705 = vmatpush.bf16.msra.mxu0 0
      %1706 = vmatpush.bf16.msra.mxu0 0
      %1707 = vmatpush.bf16.msra.mxu0 0
      %1708 = vmatpush.bf16.msra.mxu0 0
      %1709 = vmatpush.bf16.msra.mxu0 0
      %1710 = vmatpush.bf16.msra.mxu0 0
      %1711 = vmatpush.bf16.msra.mxu0 0
      %1712 = vmatpush.bf16.msra.mxu0 %v1703
      %1713 = vmatmul.bf16.gmra.mxu0 %v1649
      %v1714 = vpop.f32.mrf.mxu0
      %v1715 = vadd.f32 0.0, %v1714
      %v1716 = vpop.f32.mrf.mxu0
      %v1717 = vadd.f32 0.0, %v1716
      %1718 = vmatmul.bf16.gmra.mxu0 %v1652
      %v1719 = vpop.f32.mrf.mxu0
      %v1720 = vadd.f32 0.0, %v1719
      %v1721 = vpop.f32.mrf.mxu0
      %v1722 = vadd.f32 0.0, %v1721
      %1723 = vmatmul.bf16.gmra.mxu0 %v1655
      %v1724 = vpop.f32.mrf.mxu0
      %v1725 = vadd.f32 0.0, %v1724
      %v1726 = vpop.f32.mrf.mxu0
      %v1727 = vadd.f32 0.0, %v1726
      %1728 = vmatmul.bf16.gmra.mxu0 %v1658
      %v1729 = vpop.f32.mrf.mxu0
      %v1730 = vadd.f32 0.0, %v1729
      %v1731 = vpop.f32.mrf.mxu0
      %v1732 = vadd.f32 0.0, %v1731
      %1733 = vmatmul.bf16.gmra.mxu0 %v1661
      %v1734 = vpop.f32.mrf.mxu0
      %v1735 = vadd.f32 0.0, %v1734
      %v1736 = vpop.f32.mrf.mxu0
      %v1737 = vadd.f32 0.0, %v1736
      %1738 = vmatmul.bf16.gmra.mxu0 %v1664
      %v1739 = vpop.f32.mrf.mxu0
      %v1740 = vadd.f32 0.0, %v1739
      %v1741 = vpop.f32.mrf.mxu0
      %v1742 = vadd.f32 0.0, %v1741
      %1743 = vmatmul.bf16.gmra.mxu0 %v1667
      %v1744 = vpop.f32.mrf.mxu0
      %v1745 = vadd.f32 0.0, %v1744
      %v1746 = vpop.f32.mrf.mxu0
      %v1747 = vadd.f32 0.0, %v1746
      %1748 = vmatmul.bf16.gmra.mxu0 %v1670
      %v1749 = vpop.f32.mrf.mxu0
      %v1750 = vadd.f32 0.0, %v1749
      %v1751 = vpop.f32.mrf.mxu0
      %v1752 = vadd.f32 0.0, %v1751
      %1753 = vmatmul.bf16.gmra.mxu0 %v1673
      %v1754 = vpop.f32.mrf.mxu0
      %v1755 = vadd.f32 0.0, %v1754
      %v1756 = vpop.f32.mrf.mxu0
      %v1757 = vadd.f32 0.0, %v1756
      %1758 = vmatmul.bf16.gmra.mxu0 %v1676
      %v1759 = vpop.f32.mrf.mxu0
      %v1760 = vadd.f32 0.0, %v1759
      %v1761 = vpop.f32.mrf.mxu0
      %v1762 = vadd.f32 0.0, %v1761
      %1763 = vmatmul.bf16.gmra.mxu0 %v1679
      %v1764 = vpop.f32.mrf.mxu0
      %v1765 = vadd.f32 0.0, %v1764
      %v1766 = vpop.f32.mrf.mxu0
      %v1767 = vadd.f32 0.0, %v1766
      %1768 = vmatmul.bf16.gmra.mxu0 %v1682
      %v1769 = vpop.f32.mrf.mxu0
      %v1770 = vadd.f32 0.0, %v1769
      %v1771 = vpop.f32.mrf.mxu0
      %v1772 = vadd.f32 0.0, %v1771
      %1773 = vmatmul.bf16.gmra.mxu0 %v1685
      %v1774 = vpop.f32.mrf.mxu0
      %v1775 = vadd.f32 0.0, %v1774
      %v1776 = vpop.f32.mrf.mxu0
      %v1777 = vadd.f32 0.0, %v1776
      %1778 = vmatmul.bf16.gmra.mxu0 %v1688
      %v1779 = vpop.f32.mrf.mxu0
      %v1780 = vadd.f32 0.0, %v1779
      %v1781 = vpop.f32.mrf.mxu0
      %v1782 = vadd.f32 0.0, %v1781
      %1783 = vmatmul.bf16.gmra.mxu0 %v1691
      %v1784 = vpop.f32.mrf.mxu0
      %v1785 = vadd.f32 0.0, %v1784
      %v1786 = vpop.f32.mrf.mxu0
      %v1787 = vadd.f32 0.0, %v1786
      %1788 = vmatmul.bf16.gmra.mxu0 %v1694
      %v1789 = vpop.f32.mrf.mxu0
      %v1790 = vadd.f32 0.0, %v1789
      %v1791 = vpop.f32.mrf.mxu0
      %v1792 = vadd.f32 0.0, %v1791
      %1793 = vmatmul.bf16.gmra.mxu0 %v1697
      %v1794 = vpop.f32.mrf.mxu0
      %v1795 = vadd.f32 0.0, %v1794
      %v1796 = vpop.f32.mrf.mxu0
      %v1797 = vadd.f32 0.0, %v1796
      %1798 = vmatmul.bf16.gmra.mxu0 %v1700
      %v1799 = vpop.f32.mrf.mxu0
      %v1800 = vadd.f32 0.0, %v1799
      %v1801 = vpop.f32.mrf.mxu0
      %v1802 = vadd.f32 0.0, %v1801
      %1803 = vdwg.mxu0
      %v1804 = vadd.f32 %v1556, %v1715
      %v1805 = vadd.f32 %v1557, %v1717
      %v1806 = vadd.f32 %v1558, %v1720
      %v1807 = vadd.f32 %v1559, %v1722
      %v1808 = vadd.f32 %v1560, %v1725
      %v1809 = vadd.f32 %v1561, %v1727
      %v1810 = vadd.f32 %v1562, %v1730
      %v1811 = vadd.f32 %v1563, %v1732
      %v1812 = vadd.f32 %v1564, %v1735
      %v1813 = vadd.f32 %v1565, %v1737
      %v1814 = vadd.f32 %v1566, %v1740
      %v1815 = vadd.f32 %v1567, %v1742
      %v1816 = vadd.f32 %v1568, %v1745
      %v1817 = vadd.f32 %v1569, %v1747
      %v1818 = vadd.f32 %v1570, %v1750
      %v1819 = vadd.f32 %v1571, %v1752
      %v1820 = vadd.f32 %v1572, %v1755
      %v1821 = vadd.f32 %v1573, %v1757
      %v1822 = vadd.f32 %v1574, %v1760
      %v1823 = vadd.f32 %v1575, %v1762
      %v1824 = vadd.f32 %v1576, %v1765
      %v1825 = vadd.f32 %v1577, %v1767
      %v1826 = vadd.f32 %v1578, %v1770
      %v1827 = vadd.f32 %v1579, %v1772
      %v1828 = vadd.f32 %v1580, %v1775
      %v1829 = vadd.f32 %v1581, %v1777
      %v1830 = vadd.f32 %v1582, %v1780
      %v1831 = vadd.f32 %v1583, %v1782
      %v1832 = vadd.f32 %v1584, %v1785
      %v1833 = vadd.f32 %v1585, %v1787
      %v1834 = vadd.f32 %v1586, %v1790
      %v1835 = vadd.f32 %v1587, %v1792
      %v1836 = vadd.f32 %v1588, %v1795
      %v1837 = vadd.f32 %v1589, %v1797
      %v1838 = vadd.f32 %v1590, %v1800
      %v1839 = vadd.f32 %v1591, %v1802
      %v1840 = vld [vmem:[%s165 + $0x25] sm:$0xff]
      %v1841 = vld [vmem:[%s165 + $0x2d] sm:$0xff]
      %v1842 = vld [vmem:[%s165 + $0x35] sm:$0xff]
      %v1843 = vld [vmem:[%s165 + $0x3d] sm:$0xff]
      %v1844 = vld [vmem:[%s165 + $0x45] sm:$0xff]
      %v1845 = vld [vmem:[%s165 + $0x4d] sm:$0xff]
      %v1846 = vld [vmem:[%s165 + $0x55] sm:$0xff]
      %v1847 = vld [vmem:[%s165 + $0x5d] sm:$0xff]
      %v1848 = vld [vmem:[%s165 + $0x65] sm:$0xff]
      %v1849 = vld [vmem:[%s165 + $0x6d] sm:$0xff]
      %v1850 = vld [vmem:[%s165 + $0x75] sm:$0xff]
      %v1851 = vld [vmem:[%s165 + $0x7d] sm:$0xff]
      %v1852 = vld [vmem:[%s165 + $0x85] sm:$0xff]
      %v1853 = vld [vmem:[%s165 + $0x8d] sm:$0xff]
      %v1854 = vld [vmem:[%s165 + $0x95] sm:$0xff]
      %v1855 = vld [vmem:[%s165 + $0x9d] sm:$0xff]
      %v1856 = vld [vmem:[%s165 + $0xa5] sm:$0xff]
      %v1857 = vld [vmem:[%s165 + $0xad] sm:$0xff]
      %v1858 = vld [vmem:[%s165 + $0xb5] sm:$0xff]
      %v1859 = vld [vmem:[%s165 + $0xbd] sm:$0xff]
      %v1860 = vld [vmem:[%s165 + $0xc5] sm:$0xff]
      %v1861 = vld [vmem:[%s165 + $0xcd] sm:$0xff]
      %v1862 = vld [vmem:[%s165 + $0xd5] sm:$0xff]
      %v1863 = vld [vmem:[%s165 + $0xdd] sm:$0xff]
      %v1864 = vld [vmem:[%s165 + $0xe5] sm:$0xff]
      %v1865 = vld [vmem:[%s165 + $0xed] sm:$0xff]
      %v1866 = vld [vmem:[%s165 + $0xf5] sm:$0xff]
      %v1867 = vld [vmem:[%s165 + $0xfd] sm:$0xff]
      %v1868 = vld [vmem:[%s165 + $0x105] sm:$0xff]
      %v1869 = vld [vmem:[%s165 + $0x10d] sm:$0xff]
      %v1870 = vld [vmem:[%s165 + $0x115] sm:$0xff]
      %v1871 = vld [vmem:[%s165 + $0x11d] sm:$0xff]
      %v1872 = vld [vmem:[%s165 + $0x125] sm:$0xff]
      %v1873 = vld [vmem:[%s165 + $0x12d] sm:$0xff]
      %v1874 = vld [vmem:[%s165 + $0x135] sm:$0xff]
      %v1875 = vld [vmem:[%s165 + $0x13d] sm:$0xff]
      %v1876 = vpack.c.bf16 %v1841, %v1840
      %v1877 = vpack.c.bf16 %v1843, %v1842
      %v1878 = vpack.c.bf16 %v1845, %v1844
      %v1879 = vpack.c.bf16 %v1847, %v1846
      %v1880 = vpack.c.bf16 %v1849, %v1848
      %v1881 = vpack.c.bf16 %v1851, %v1850
      %v1882 = vpack.c.bf16 %v1853, %v1852
      %v1883 = vpack.c.bf16 %v1855, %v1854
      %v1884 = vpack.c.bf16 %v1857, %v1856
      %v1885 = vpack.c.bf16 %v1859, %v1858
      %v1886 = vpack.c.bf16 %v1861, %v1860
      %v1887 = vpack.c.bf16 %v1863, %v1862
      %v1888 = vpack.c.bf16 %v1865, %v1864
      %v1889 = vpack.c.bf16 %v1867, %v1866
      %v1890 = vpack.c.bf16 %v1869, %v1868
      %v1891 = vpack.c.bf16 %v1871, %v1870
      %v1892 = vpack.c.bf16 %v1873, %v1872
      %v1893 = vpack.c.bf16 %v1875, %v1874
      %s1894 = scalar_lea.vmem %s1, 14
      %v1895 = vld [vmem:[%s1894] sm:$0x3]
      %v1897 = vsel %vm283, %v1876, 0
      %v1900 = vsel %vm283, %v1877, 0
      %v1903 = vsel %vm283, %v1878, 0
      %v1906 = vsel %vm283, %v1879, 0
      %v1909 = vsel %vm283, %v1880, 0
      %v1912 = vsel %vm283, %v1881, 0
      %v1915 = vsel %vm283, %v1882, 0
      %v1918 = vsel %vm283, %v1883, 0
      %v1921 = vsel %vm283, %v1884, 0
      %v1924 = vsel %vm283, %v1885, 0
      %v1927 = vsel %vm283, %v1886, 0
      %v1930 = vsel %vm283, %v1887, 0
      %v1933 = vsel %vm283, %v1888, 0
      %v1936 = vsel %vm283, %v1889, 0
      %v1939 = vsel %vm283, %v1890, 0
      %v1942 = vsel %vm283, %v1891, 0
      %v1945 = vsel %vm283, %v1892, 0
      %v1948 = vsel %vm283, %v1893, 0
      %v1951 = vand.u32 %v1895, %v341
      %1953 = vmatpush.bf16.msra.mxu0 0
      %1954 = vmatpush.bf16.msra.mxu0 0
      %1955 = vmatpush.bf16.msra.mxu0 0
      %1956 = vmatpush.bf16.msra.mxu0 0
      %1957 = vmatpush.bf16.msra.mxu0 0
      %1958 = vmatpush.bf16.msra.mxu0 0
      %1959 = vmatpush.bf16.msra.mxu0 0
      %1960 = vmatpush.bf16.msra.mxu0 %v1951
      %1961 = vmatmul.bf16.gmra.mxu0 %v1897
      %v1962 = vpop.f32.mrf.mxu0
      %v1963 = vadd.f32 0.0, %v1962
      %v1964 = vpop.f32.mrf.mxu0
      %v1965 = vadd.f32 0.0, %v1964
      %1966 = vmatmul.bf16.gmra.mxu0 %v1900
      %v1967 = vpop.f32.mrf.mxu0
      %v1968 = vadd.f32 0.0, %v1967
      %v1969 = vpop.f32.mrf.mxu0
      %v1970 = vadd.f32 0.0, %v1969
      %1971 = vmatmul.bf16.gmra.mxu0 %v1903
      %v1972 = vpop.f32.mrf.mxu0
      %v1973 = vadd.f32 0.0, %v1972
      %v1974 = vpop.f32.mrf.mxu0
      %v1975 = vadd.f32 0.0, %v1974
      %1976 = vmatmul.bf16.gmra.mxu0 %v1906
      %v1977 = vpop.f32.mrf.mxu0
      %v1978 = vadd.f32 0.0, %v1977
      %v1979 = vpop.f32.mrf.mxu0
      %v1980 = vadd.f32 0.0, %v1979
      %1981 = vmatmul.bf16.gmra.mxu0 %v1909
      %v1982 = vpop.f32.mrf.mxu0
      %v1983 = vadd.f32 0.0, %v1982
      %v1984 = vpop.f32.mrf.mxu0
      %v1985 = vadd.f32 0.0, %v1984
      %1986 = vmatmul.bf16.gmra.mxu0 %v1912
      %v1987 = vpop.f32.mrf.mxu0
      %v1988 = vadd.f32 0.0, %v1987
      %v1989 = vpop.f32.mrf.mxu0
      %v1990 = vadd.f32 0.0, %v1989
      %1991 = vmatmul.bf16.gmra.mxu0 %v1915
      %v1992 = vpop.f32.mrf.mxu0
      %v1993 = vadd.f32 0.0, %v1992
      %v1994 = vpop.f32.mrf.mxu0
      %v1995 = vadd.f32 0.0, %v1994
      %1996 = vmatmul.bf16.gmra.mxu0 %v1918
      %v1997 = vpop.f32.mrf.mxu0
      %v1998 = vadd.f32 0.0, %v1997
      %v1999 = vpop.f32.mrf.mxu0
      %v2000 = vadd.f32 0.0, %v1999
      %2001 = vmatmul.bf16.gmra.mxu0 %v1921
      %v2002 = vpop.f32.mrf.mxu0
      %v2003 = vadd.f32 0.0, %v2002
      %v2004 = vpop.f32.mrf.mxu0
      %v2005 = vadd.f32 0.0, %v2004
      %2006 = vmatmul.bf16.gmra.mxu0 %v1924
      %v2007 = vpop.f32.mrf.mxu0
      %v2008 = vadd.f32 0.0, %v2007
      %v2009 = vpop.f32.mrf.mxu0
      %v2010 = vadd.f32 0.0, %v2009
      %2011 = vmatmul.bf16.gmra.mxu0 %v1927
      %v2012 = vpop.f32.mrf.mxu0
      %v2013 = vadd.f32 0.0, %v2012
      %v2014 = vpop.f32.mrf.mxu0
      %v2015 = vadd.f32 0.0, %v2014
      %2016 = vmatmul.bf16.gmra.mxu0 %v1930
      %v2017 = vpop.f32.mrf.mxu0
      %v2018 = vadd.f32 0.0, %v2017
      %v2019 = vpop.f32.mrf.mxu0
      %v2020 = vadd.f32 0.0, %v2019
      %2021 = vmatmul.bf16.gmra.mxu0 %v1933
      %v2022 = vpop.f32.mrf.mxu0
      %v2023 = vadd.f32 0.0, %v2022
      %v2024 = vpop.f32.mrf.mxu0
      %v2025 = vadd.f32 0.0, %v2024
      %2026 = vmatmul.bf16.gmra.mxu0 %v1936
      %v2027 = vpop.f32.mrf.mxu0
      %v2028 = vadd.f32 0.0, %v2027
      %v2029 = vpop.f32.mrf.mxu0
      %v2030 = vadd.f32 0.0, %v2029
      %2031 = vmatmul.bf16.gmra.mxu0 %v1939
      %v2032 = vpop.f32.mrf.mxu0
      %v2033 = vadd.f32 0.0, %v2032
      %v2034 = vpop.f32.mrf.mxu0
      %v2035 = vadd.f32 0.0, %v2034
      %2036 = vmatmul.bf16.gmra.mxu0 %v1942
      %v2037 = vpop.f32.mrf.mxu0
      %v2038 = vadd.f32 0.0, %v2037
      %v2039 = vpop.f32.mrf.mxu0
      %v2040 = vadd.f32 0.0, %v2039
      %2041 = vmatmul.bf16.gmra.mxu0 %v1945
      %v2042 = vpop.f32.mrf.mxu0
      %v2043 = vadd.f32 0.0, %v2042
      %v2044 = vpop.f32.mrf.mxu0
      %v2045 = vadd.f32 0.0, %v2044
      %2046 = vmatmul.bf16.gmra.mxu0 %v1948
      %v2047 = vpop.f32.mrf.mxu0
      %v2048 = vadd.f32 0.0, %v2047
      %v2049 = vpop.f32.mrf.mxu0
      %v2050 = vadd.f32 0.0, %v2049
      %2051 = vdwg.mxu0
      %v2052 = vadd.f32 %v1804, %v1963
      %v2053 = vadd.f32 %v1805, %v1965
      %v2054 = vadd.f32 %v1806, %v1968
      %v2055 = vadd.f32 %v1807, %v1970
      %v2056 = vadd.f32 %v1808, %v1973
      %v2057 = vadd.f32 %v1809, %v1975
      %v2058 = vadd.f32 %v1810, %v1978
      %v2059 = vadd.f32 %v1811, %v1980
      %v2060 = vadd.f32 %v1812, %v1983
      %v2061 = vadd.f32 %v1813, %v1985
      %v2062 = vadd.f32 %v1814, %v1988
      %v2063 = vadd.f32 %v1815, %v1990
      %v2064 = vadd.f32 %v1816, %v1993
      %v2065 = vadd.f32 %v1817, %v1995
      %v2066 = vadd.f32 %v1818, %v1998
      %v2067 = vadd.f32 %v1819, %v2000
      %v2068 = vadd.f32 %v1820, %v2003
      %v2069 = vadd.f32 %v1821, %v2005
      %v2070 = vadd.f32 %v1822, %v2008
      %v2071 = vadd.f32 %v1823, %v2010
      %v2072 = vadd.f32 %v1824, %v2013
      %v2073 = vadd.f32 %v1825, %v2015
      %v2074 = vadd.f32 %v1826, %v2018
      %v2075 = vadd.f32 %v1827, %v2020
      %v2076 = vadd.f32 %v1828, %v2023
      %v2077 = vadd.f32 %v1829, %v2025
      %v2078 = vadd.f32 %v1830, %v2028
      %v2079 = vadd.f32 %v1831, %v2030
      %v2080 = vadd.f32 %v1832, %v2033
      %v2081 = vadd.f32 %v1833, %v2035
      %v2082 = vadd.f32 %v1834, %v2038
      %v2083 = vadd.f32 %v1835, %v2040
      %v2084 = vadd.f32 %v1836, %v2043
      %v2085 = vadd.f32 %v1837, %v2045
      %v2086 = vadd.f32 %v1838, %v2048
      %v2087 = vadd.f32 %v1839, %v2050
      %v2088 = vld [vmem:[%s165 + $0x26] sm:$0xff]
      %v2089 = vld [vmem:[%s165 + $0x2e] sm:$0xff]
      %v2090 = vld [vmem:[%s165 + $0x36] sm:$0xff]
      %v2091 = vld [vmem:[%s165 + $0x3e] sm:$0xff]
      %v2092 = vld [vmem:[%s165 + $0x46] sm:$0xff]
      %v2093 = vld [vmem:[%s165 + $0x4e] sm:$0xff]
      %v2094 = vld [vmem:[%s165 + $0x56] sm:$0xff]
      %v2095 = vld [vmem:[%s165 + $0x5e] sm:$0xff]
      %v2096 = vld [vmem:[%s165 + $0x66] sm:$0xff]
      %v2097 = vld [vmem:[%s165 + $0x6e] sm:$0xff]
      %v2098 = vld [vmem:[%s165 + $0x76] sm:$0xff]
      %v2099 = vld [vmem:[%s165 + $0x7e] sm:$0xff]
      %v2100 = vld [vmem:[%s165 + $0x86] sm:$0xff]
      %v2101 = vld [vmem:[%s165 + $0x8e] sm:$0xff]
      %v2102 = vld [vmem:[%s165 + $0x96] sm:$0xff]
      %v2103 = vld [vmem:[%s165 + $0x9e] sm:$0xff]
      %v2104 = vld [vmem:[%s165 + $0xa6] sm:$0xff]
      %v2105 = vld [vmem:[%s165 + $0xae] sm:$0xff]
      %v2106 = vld [vmem:[%s165 + $0xb6] sm:$0xff]
      %v2107 = vld [vmem:[%s165 + $0xbe] sm:$0xff]
      %v2108 = vld [vmem:[%s165 + $0xc6] sm:$0xff]
      %v2109 = vld [vmem:[%s165 + $0xce] sm:$0xff]
      %v2110 = vld [vmem:[%s165 + $0xd6] sm:$0xff]
      %v2111 = vld [vmem:[%s165 + $0xde] sm:$0xff]
      %v2112 = vld [vmem:[%s165 + $0xe6] sm:$0xff]
      %v2113 = vld [vmem:[%s165 + $0xee] sm:$0xff]
      %v2114 = vld [vmem:[%s165 + $0xf6] sm:$0xff]
      %v2115 = vld [vmem:[%s165 + $0xfe] sm:$0xff]
      %v2116 = vld [vmem:[%s165 + $0x106] sm:$0xff]
      %v2117 = vld [vmem:[%s165 + $0x10e] sm:$0xff]
      %v2118 = vld [vmem:[%s165 + $0x116] sm:$0xff]
      %v2119 = vld [vmem:[%s165 + $0x11e] sm:$0xff]
      %v2120 = vld [vmem:[%s165 + $0x126] sm:$0xff]
      %v2121 = vld [vmem:[%s165 + $0x12e] sm:$0xff]
      %v2122 = vld [vmem:[%s165 + $0x136] sm:$0xff]
      %v2123 = vld [vmem:[%s165 + $0x13e] sm:$0xff]
      %v2124 = vpack.c.bf16 %v2089, %v2088
      %v2125 = vpack.c.bf16 %v2091, %v2090
      %v2126 = vpack.c.bf16 %v2093, %v2092
      %v2127 = vpack.c.bf16 %v2095, %v2094
      %v2128 = vpack.c.bf16 %v2097, %v2096
      %v2129 = vpack.c.bf16 %v2099, %v2098
      %v2130 = vpack.c.bf16 %v2101, %v2100
      %v2131 = vpack.c.bf16 %v2103, %v2102
      %v2132 = vpack.c.bf16 %v2105, %v2104
      %v2133 = vpack.c.bf16 %v2107, %v2106
      %v2134 = vpack.c.bf16 %v2109, %v2108
      %v2135 = vpack.c.bf16 %v2111, %v2110
      %v2136 = vpack.c.bf16 %v2113, %v2112
      %v2137 = vpack.c.bf16 %v2115, %v2114
      %v2138 = vpack.c.bf16 %v2117, %v2116
      %v2139 = vpack.c.bf16 %v2119, %v2118
      %v2140 = vpack.c.bf16 %v2121, %v2120
      %v2141 = vpack.c.bf16 %v2123, %v2122
      %s2142 = scalar_lea.vmem %s1, 16
      %v2143 = vld [vmem:[%s2142] sm:$0x3]
      %v2145 = vsel %vm283, %v2124, 0
      %v2148 = vsel %vm283, %v2125, 0
      %v2151 = vsel %vm283, %v2126, 0
      %v2154 = vsel %vm283, %v2127, 0
      %v2157 = vsel %vm283, %v2128, 0
      %v2160 = vsel %vm283, %v2129, 0
      %v2163 = vsel %vm283, %v2130, 0
      %v2166 = vsel %vm283, %v2131, 0
      %v2169 = vsel %vm283, %v2132, 0
      %v2172 = vsel %vm283, %v2133, 0
      %v2175 = vsel %vm283, %v2134, 0
      %v2178 = vsel %vm283, %v2135, 0
      %v2181 = vsel %vm283, %v2136, 0
      %v2184 = vsel %vm283, %v2137, 0
      %v2187 = vsel %vm283, %v2138, 0
      %v2190 = vsel %vm283, %v2139, 0
      %v2193 = vsel %vm283, %v2140, 0
      %v2196 = vsel %vm283, %v2141, 0
      %v2199 = vand.u32 %v2143, %v341
      %2201 = vmatpush.bf16.msra.mxu0 0
      %2202 = vmatpush.bf16.msra.mxu0 0
      %2203 = vmatpush.bf16.msra.mxu0 0
      %2204 = vmatpush.bf16.msra.mxu0 0
      %2205 = vmatpush.bf16.msra.mxu0 0
      %2206 = vmatpush.bf16.msra.mxu0 0
      %2207 = vmatpush.bf16.msra.mxu0 0
      %2208 = vmatpush.bf16.msra.mxu0 %v2199
      %2209 = vmatmul.bf16.gmra.mxu0 %v2145
      %v2210 = vpop.f32.mrf.mxu0
      %v2211 = vadd.f32 0.0, %v2210
      %v2212 = vpop.f32.mrf.mxu0
      %v2213 = vadd.f32 0.0, %v2212
      %2214 = vmatmul.bf16.gmra.mxu0 %v2148
      %v2215 = vpop.f32.mrf.mxu0
      %v2216 = vadd.f32 0.0, %v2215
      %v2217 = vpop.f32.mrf.mxu0
      %v2218 = vadd.f32 0.0, %v2217
      %2219 = vmatmul.bf16.gmra.mxu0 %v2151
      %v2220 = vpop.f32.mrf.mxu0
      %v2221 = vadd.f32 0.0, %v2220
      %v2222 = vpop.f32.mrf.mxu0
      %v2223 = vadd.f32 0.0, %v2222
      %2224 = vmatmul.bf16.gmra.mxu0 %v2154
      %v2225 = vpop.f32.mrf.mxu0
      %v2226 = vadd.f32 0.0, %v2225
      %v2227 = vpop.f32.mrf.mxu0
      %v2228 = vadd.f32 0.0, %v2227
      %2229 = vmatmul.bf16.gmra.mxu0 %v2157
      %v2230 = vpop.f32.mrf.mxu0
      %v2231 = vadd.f32 0.0, %v2230
      %v2232 = vpop.f32.mrf.mxu0
      %v2233 = vadd.f32 0.0, %v2232
      %2234 = vmatmul.bf16.gmra.mxu0 %v2160
      %v2235 = vpop.f32.mrf.mxu0
      %v2236 = vadd.f32 0.0, %v2235
      %v2237 = vpop.f32.mrf.mxu0
      %v2238 = vadd.f32 0.0, %v2237
      %2239 = vmatmul.bf16.gmra.mxu0 %v2163
      %v2240 = vpop.f32.mrf.mxu0
      %v2241 = vadd.f32 0.0, %v2240
      %v2242 = vpop.f32.mrf.mxu0
      %v2243 = vadd.f32 0.0, %v2242
      %2244 = vmatmul.bf16.gmra.mxu0 %v2166
      %v2245 = vpop.f32.mrf.mxu0
      %v2246 = vadd.f32 0.0, %v2245
      %v2247 = vpop.f32.mrf.mxu0
      %v2248 = vadd.f32 0.0, %v2247
      %2249 = vmatmul.bf16.gmra.mxu0 %v2169
      %v2250 = vpop.f32.mrf.mxu0
      %v2251 = vadd.f32 0.0, %v2250
      %v2252 = vpop.f32.mrf.mxu0
      %v2253 = vadd.f32 0.0, %v2252
      %2254 = vmatmul.bf16.gmra.mxu0 %v2172
      %v2255 = vpop.f32.mrf.mxu0
      %v2256 = vadd.f32 0.0, %v2255
      %v2257 = vpop.f32.mrf.mxu0
      %v2258 = vadd.f32 0.0, %v2257
      %2259 = vmatmul.bf16.gmra.mxu0 %v2175
      %v2260 = vpop.f32.mrf.mxu0
      %v2261 = vadd.f32 0.0, %v2260
      %v2262 = vpop.f32.mrf.mxu0
      %v2263 = vadd.f32 0.0, %v2262
      %2264 = vmatmul.bf16.gmra.mxu0 %v2178
      %v2265 = vpop.f32.mrf.mxu0
      %v2266 = vadd.f32 0.0, %v2265
      %v2267 = vpop.f32.mrf.mxu0
      %v2268 = vadd.f32 0.0, %v2267
      %2269 = vmatmul.bf16.gmra.mxu0 %v2181
      %v2270 = vpop.f32.mrf.mxu0
      %v2271 = vadd.f32 0.0, %v2270
      %v2272 = vpop.f32.mrf.mxu0
      %v2273 = vadd.f32 0.0, %v2272
      %2274 = vmatmul.bf16.gmra.mxu0 %v2184
      %v2275 = vpop.f32.mrf.mxu0
      %v2276 = vadd.f32 0.0, %v2275
      %v2277 = vpop.f32.mrf.mxu0
      %v2278 = vadd.f32 0.0, %v2277
      %2279 = vmatmul.bf16.gmra.mxu0 %v2187
      %v2280 = vpop.f32.mrf.mxu0
      %v2281 = vadd.f32 0.0, %v2280
      %v2282 = vpop.f32.mrf.mxu0
      %v2283 = vadd.f32 0.0, %v2282
      %2284 = vmatmul.bf16.gmra.mxu0 %v2190
      %v2285 = vpop.f32.mrf.mxu0
      %v2286 = vadd.f32 0.0, %v2285
      %v2287 = vpop.f32.mrf.mxu0
      %v2288 = vadd.f32 0.0, %v2287
      %2289 = vmatmul.bf16.gmra.mxu0 %v2193
      %v2290 = vpop.f32.mrf.mxu0
      %v2291 = vadd.f32 0.0, %v2290
      %v2292 = vpop.f32.mrf.mxu0
      %v2293 = vadd.f32 0.0, %v2292
      %2294 = vmatmul.bf16.gmra.mxu0 %v2196
      %v2295 = vpop.f32.mrf.mxu0
      %v2296 = vadd.f32 0.0, %v2295
      %v2297 = vpop.f32.mrf.mxu0
      %v2298 = vadd.f32 0.0, %v2297
      %2299 = vdwg.mxu0
      %v2300 = vadd.f32 %v2052, %v2211
      %v2301 = vadd.f32 %v2053, %v2213
      %v2302 = vadd.f32 %v2054, %v2216
      %v2303 = vadd.f32 %v2055, %v2218
      %v2304 = vadd.f32 %v2056, %v2221
      %v2305 = vadd.f32 %v2057, %v2223
      %v2306 = vadd.f32 %v2058, %v2226
      %v2307 = vadd.f32 %v2059, %v2228
      %v2308 = vadd.f32 %v2060, %v2231
      %v2309 = vadd.f32 %v2061, %v2233
      %v2310 = vadd.f32 %v2062, %v2236
      %v2311 = vadd.f32 %v2063, %v2238
      %v2312 = vadd.f32 %v2064, %v2241
      %v2313 = vadd.f32 %v2065, %v2243
      %v2314 = vadd.f32 %v2066, %v2246
      %v2315 = vadd.f32 %v2067, %v2248
      %v2316 = vadd.f32 %v2068, %v2251
      %v2317 = vadd.f32 %v2069, %v2253
      %v2318 = vadd.f32 %v2070, %v2256
      %v2319 = vadd.f32 %v2071, %v2258
      %v2320 = vadd.f32 %v2072, %v2261
      %v2321 = vadd.f32 %v2073, %v2263
      %v2322 = vadd.f32 %v2074, %v2266
      %v2323 = vadd.f32 %v2075, %v2268
      %v2324 = vadd.f32 %v2076, %v2271
      %v2325 = vadd.f32 %v2077, %v2273
      %v2326 = vadd.f32 %v2078, %v2276
      %v2327 = vadd.f32 %v2079, %v2278
      %v2328 = vadd.f32 %v2080, %v2281
      %v2329 = vadd.f32 %v2081, %v2283
      %v2330 = vadd.f32 %v2082, %v2286
      %v2331 = vadd.f32 %v2083, %v2288
      %v2332 = vadd.f32 %v2084, %v2291
      %v2333 = vadd.f32 %v2085, %v2293
      %v2334 = vadd.f32 %v2086, %v2296
      %v2335 = vadd.f32 %v2087, %v2298
      %v2336 = vld [vmem:[%s2] sm:$0x1]
      %v2338 = vperm.slane %v2336, 0
      %v2340 = vadd.f32 %v2300, %v2338
      %v2341 = vadd.f32 %v2301, %v2338
      %v2342 = vadd.f32 %v2302, %v2338
      %v2343 = vadd.f32 %v2303, %v2338
      %v2344 = vadd.f32 %v2304, %v2338
      %v2345 = vadd.f32 %v2305, %v2338
      %v2346 = vadd.f32 %v2306, %v2338
      %v2347 = vadd.f32 %v2307, %v2338
      %v2348 = vadd.f32 %v2308, %v2338
      %v2349 = vadd.f32 %v2309, %v2338
      %v2350 = vadd.f32 %v2310, %v2338
      %v2351 = vadd.f32 %v2311, %v2338
      %v2352 = vadd.f32 %v2312, %v2338
      %v2353 = vadd.f32 %v2313, %v2338
      %v2354 = vadd.f32 %v2314, %v2338
      %v2355 = vadd.f32 %v2315, %v2338
      %v2356 = vadd.f32 %v2316, %v2338
      %v2357 = vadd.f32 %v2317, %v2338
      %v2358 = vadd.f32 %v2318, %v2338
      %v2359 = vadd.f32 %v2319, %v2338
      %v2360 = vadd.f32 %v2320, %v2338
      %v2361 = vadd.f32 %v2321, %v2338
      %v2362 = vadd.f32 %v2322, %v2338
      %v2363 = vadd.f32 %v2323, %v2338
      %v2364 = vadd.f32 %v2324, %v2338
      %v2365 = vadd.f32 %v2325, %v2338
      %v2366 = vadd.f32 %v2326, %v2338
      %v2367 = vadd.f32 %v2327, %v2338
      %v2368 = vadd.f32 %v2328, %v2338
      %v2369 = vadd.f32 %v2329, %v2338
      %v2370 = vadd.f32 %v2330, %v2338
      %v2371 = vadd.f32 %v2331, %v2338
      %v2372 = vadd.f32 %v2332, %v2338
      %v2373 = vadd.f32 %v2333, %v2338
      %v2374 = vadd.f32 %v2334, %v2338
      %v2375 = vadd.f32 %v2335, %v2338
      %v2376 = vmax.f32 %v2340, 0.0
      %v2377 = vmax.f32 %v2341, 0.0
      %v2378 = vmax.f32 %v2342, 0.0
      %v2379 = vmax.f32 %v2343, 0.0
      %v2380 = vmax.f32 %v2344, 0.0
      %v2381 = vmax.f32 %v2345, 0.0
      %v2382 = vmax.f32 %v2346, 0.0
      %v2383 = vmax.f32 %v2347, 0.0
      %v2384 = vmax.f32 %v2348, 0.0
      %v2385 = vmax.f32 %v2349, 0.0
      %v2386 = vmax.f32 %v2350, 0.0
      %v2387 = vmax.f32 %v2351, 0.0
      %v2388 = vmax.f32 %v2352, 0.0
      %v2389 = vmax.f32 %v2353, 0.0
      %v2390 = vmax.f32 %v2354, 0.0
      %v2391 = vmax.f32 %v2355, 0.0
      %v2392 = vmax.f32 %v2356, 0.0
      %v2393 = vmax.f32 %v2357, 0.0
      %v2394 = vmax.f32 %v2358, 0.0
      %v2395 = vmax.f32 %v2359, 0.0
      %v2396 = vmax.f32 %v2360, 0.0
      %v2397 = vmax.f32 %v2361, 0.0
      %v2398 = vmax.f32 %v2362, 0.0
      %v2399 = vmax.f32 %v2363, 0.0
      %v2400 = vmax.f32 %v2364, 0.0
      %v2401 = vmax.f32 %v2365, 0.0
      %v2402 = vmax.f32 %v2366, 0.0
      %v2403 = vmax.f32 %v2367, 0.0
      %v2404 = vmax.f32 %v2368, 0.0
      %v2405 = vmax.f32 %v2369, 0.0
      %v2406 = vmax.f32 %v2370, 0.0
      %v2407 = vmax.f32 %v2371, 0.0
      %v2408 = vmax.f32 %v2372, 0.0
      %v2409 = vmax.f32 %v2373, 0.0
      %v2410 = vmax.f32 %v2374, 0.0
      %v2411 = vmax.f32 %v2375, 0.0
      %vm2412 = vcmask 130048
      %2413 = vst.msk [vmem:[%s170] sm:$0xff] %vm2412, %v2376
      %2414 = vst.msk [vmem:[%s170 + $0x8] sm:$0xff] %vm2412, %v2377
      %2415 = vst.msk [vmem:[%s170 + $0x10] sm:$0xff] %vm2412, %v2378
      %2416 = vst.msk [vmem:[%s170 + $0x18] sm:$0xff] %vm2412, %v2379
      %2417 = vst.msk [vmem:[%s170 + $0x20] sm:$0xff] %vm2412, %v2380
      %2418 = vst.msk [vmem:[%s170 + $0x28] sm:$0xff] %vm2412, %v2381
      %2419 = vst.msk [vmem:[%s170 + $0x30] sm:$0xff] %vm2412, %v2382
      %2420 = vst.msk [vmem:[%s170 + $0x38] sm:$0xff] %vm2412, %v2383
      %2421 = vst.msk [vmem:[%s170 + $0x40] sm:$0xff] %vm2412, %v2384
      %2422 = vst.msk [vmem:[%s170 + $0x48] sm:$0xff] %vm2412, %v2385
      %2423 = vst.msk [vmem:[%s170 + $0x50] sm:$0xff] %vm2412, %v2386
      %2424 = vst.msk [vmem:[%s170 + $0x58] sm:$0xff] %vm2412, %v2387
      %2425 = vst.msk [vmem:[%s170 + $0x60] sm:$0xff] %vm2412, %v2388
      %2426 = vst.msk [vmem:[%s170 + $0x68] sm:$0xff] %vm2412, %v2389
      %2427 = vst.msk [vmem:[%s170 + $0x70] sm:$0xff] %vm2412, %v2390
      %2428 = vst.msk [vmem:[%s170 + $0x78] sm:$0xff] %vm2412, %v2391
      %2429 = vst.msk [vmem:[%s170 + $0x80] sm:$0xff] %vm2412, %v2392
      %2430 = vst.msk [vmem:[%s170 + $0x88] sm:$0xff] %vm2412, %v2393
      %2431 = vst.msk [vmem:[%s170 + $0x90] sm:$0xff] %vm2412, %v2394
      %2432 = vst.msk [vmem:[%s170 + $0x98] sm:$0xff] %vm2412, %v2395
      %2433 = vst.msk [vmem:[%s170 + $0xa0] sm:$0xff] %vm2412, %v2396
      %2434 = vst.msk [vmem:[%s170 + $0xa8] sm:$0xff] %vm2412, %v2397
      %2435 = vst.msk [vmem:[%s170 + $0xb0] sm:$0xff] %vm2412, %v2398
      %2436 = vst.msk [vmem:[%s170 + $0xb8] sm:$0xff] %vm2412, %v2399
      %2437 = vst.msk [vmem:[%s170 + $0xc0] sm:$0xff] %vm2412, %v2400
      %2438 = vst.msk [vmem:[%s170 + $0xc8] sm:$0xff] %vm2412, %v2401
      %2439 = vst.msk [vmem:[%s170 + $0xd0] sm:$0xff] %vm2412, %v2402
      %2440 = vst.msk [vmem:[%s170 + $0xd8] sm:$0xff] %vm2412, %v2403
      %2441 = vst.msk [vmem:[%s170 + $0xe0] sm:$0xff] %vm2412, %v2404
      %2442 = vst.msk [vmem:[%s170 + $0xe8] sm:$0xff] %vm2412, %v2405
      %2443 = vst.msk [vmem:[%s170 + $0xf0] sm:$0xff] %vm2412, %v2406
      %2444 = vst.msk [vmem:[%s170 + $0xf8] sm:$0xff] %vm2412, %v2407
      %2445 = vst.msk [vmem:[%s170 + $0x100] sm:$0xff] %vm2412, %v2408
      %2446 = vst.msk [vmem:[%s170 + $0x108] sm:$0xff] %vm2412, %v2409
      %2447 = vst.msk [vmem:[%s170 + $0x110] sm:$0xff] %vm2412, %v2410
      %2448 = vst.msk [vmem:[%s170 + $0x118] sm:$0xff] %vm2412, %v2411
      %p2449 = scmp.lt.s32.totalorder %s14, 1
      %s2450 = scalar_select %p2449, %s14, 1
      %s2451 = smul.addr %s2450, 36
      %s2452 = smul.addr %s2451, 8
      %s2453 = scalar_lea.vmem %s3, %s2452
      // Predicated region
      $region33: #{vgg_forward.3} parent=31 // pred_check
        %p2454 = pneg %p100
      $region34: #{vgg_forward.3} parent=31 // pred_check_branch
        %2456 = sbr.rel (%p2454) target = $region36
      $region35: #{vgg_forward.3} parent=31 // pred_region
        _
      $region36: #{vgg_forward.3} parent=31 // pred_fallthru
        _
    $region32: #{vgg_forward.3} parent=5 // pred_fallthru
      _
    %p2457 = scmp.le.s32.totalorder 2, %s9
    // Predicated region
    $region37: #{vgg_forward.3} parent=5 // pred_check
      %p2458 = pneg %p2457
    $region38: #{vgg_forward.3} parent=5 // pred_check_branch
      %2460 = sbr.rel (%p2458) target = $region40
    $region39: #{vgg_forward.3} parent=5 // pred_region
      %s2461 = ssub.s32 %s9, 2
      // Predicated region
      $region41: #{vgg_forward.3} parent=39 // pred_check
        %p2462 = pneg %p106
      $region42: #{vgg_forward.3} parent=39 // pred_check_branch
        %2464 = sbr.rel (%p2462) target = $region44
      $region43: #{vgg_forward.3} parent=39 // pred_region
        %p2465 = scmp.lt.s32.totalorder %s15, 1
        %s2466 = scalar_select %p2465, %s15, 1
        %s2467 = smul.addr %s2466, 36
        %s2468 = smul.addr %s2467, 8
        %s2469 = scalar_lea.vmem %s3, %s2468
      $region44: #{vgg_forward.3} parent=39 // pred_fallthru
        _
    $region40: #{vgg_forward.3} parent=5 // pred_fallthru
      _
  $region6: #{vgg_forward.3} parent=0 // loop_footer
    %s13 = sadd.s32 1, %s9
  $region7: #{vgg_forward.3} parent=0 // loop_footer_branch
    %8 = sbr.rel target = $region3
  $region8: #{vgg_forward.3} parent=0 // loop_exit
    _

// kernel: vgg_forward.5
$region0: #{vgg_forward.5}
  #allocation0 [shape = 'u32[]', space=smem, size = 0x4, offset = 0x4, fixed_abs, tag = 'smem constant byte address 0x4 - core index']
  #allocation1 [shape = 'u32[72,128]{1,0:T(1,128)}', space=vmem, size = 0x9000, scoped, tag = 'internal scratch']
  %s0 = inlined_call_operand.vmem [shape: bf16[2,1024], index: 0, kind: input, shape index: {}]
  %s1 = inlined_call_operand.vmem [shape: bf16[1024,256], index: 1, kind: input, shape index: {}]
  %s2 = inlined_call_operand.vmem [shape: f32[1,256], index: 2, kind: input, shape index: {}]
  %s3 = inlined_call_operand.vmem [shape: bf16[256,256], index: 3, kind: input, shape index: {}]
  %s4 = inlined_call_operand.vmem [shape: f32[1,256], index: 4, kind: input, shape index: {}]
  %s5 = inlined_call_operand.vmem [shape: bf16[256,256], index: 5, kind: input, shape index: {}]
  %s6 = inlined_call_operand.vmem [shape: f32[1,256], index: 6, kind: input, shape index: {}]
  %s7 = inlined_call_operand.vmem [shape: bf16[256,128], index: 7, kind: input, shape index: {}]
  %s8 = inlined_call_operand.vmem [shape: bf16[256,128], index: 8, kind: input, shape index: {}]
  %s9 = inlined_call_operand.vmem [shape: f32[1,128], index: 9, kind: input, shape index: {}]
  %s10 = inlined_call_operand.vmem [shape: f32[2,128], index: 10, kind: output, shape index: {}]
  %s11 = sld [smem:[#allocation0]]
  $region50: #{vgg_forward.5} parent=0
    _
  %s13 = ssub.s32 1, %s11
  %s14 = scalar_select 0, %s13, %s11
  // Predicated region
  $region2: #{vgg_forward.5} parent=0 // pred_check
    _
  $region3: #{vgg_forward.5} parent=0 // pred_check_branch
    %16 = sbr.rel (0) target = $region5
  $region4: #{vgg_forward.5} parent=0 // pred_region
    _
  $region5: #{vgg_forward.5} parent=0 // pred_fallthru
    _
  // Predicated region
  $region6: #{vgg_forward.5} parent=0 // pred_check
    _
  $region7: #{vgg_forward.5} parent=0 // pred_check_branch
    %18 = sbr.rel (0) target = $region9
  $region8: #{vgg_forward.5} parent=0 // pred_region
    _
  $region9: #{vgg_forward.5} parent=0 // pred_fallthru
    _
  // Predicated region
  $region10: #{vgg_forward.5} parent=0 // pred_check
    _
  $region11: #{vgg_forward.5} parent=0 // pred_check_branch
    %20 = sbr.rel (0) target = $region13
  $region12: #{vgg_forward.5} parent=0 // pred_region
    _
  $region13: #{vgg_forward.5} parent=0 // pred_fallthru
    _
  // Predicated region
  $region14: #{vgg_forward.5} parent=0 // pred_check
    _
  $region15: #{vgg_forward.5} parent=0 // pred_check_branch
    %22 = sbr.rel (0) target = $region17
  $region16: #{vgg_forward.5} parent=0 // pred_region
    _
  $region17: #{vgg_forward.5} parent=0 // pred_fallthru
    _
  // Predicated region
  $region18: #{vgg_forward.5} parent=0 // pred_check
    _
  $region19: #{vgg_forward.5} parent=0 // pred_check_branch
    %24 = sbr.rel (0) target = $region21
  $region20: #{vgg_forward.5} parent=0 // pred_region
    _
  $region21: #{vgg_forward.5} parent=0 // pred_fallthru
    _
  // Predicated region
  $region22: #{vgg_forward.5} parent=0 // pred_check
    _
  $region23: #{vgg_forward.5} parent=0 // pred_check_branch
    %26 = sbr.rel (0) target = $region25
  $region24: #{vgg_forward.5} parent=0 // pred_region
    _
  $region25: #{vgg_forward.5} parent=0 // pred_fallthru
    _
  // Predicated region
  $region26: #{vgg_forward.5} parent=0 // pred_check
    _
  $region27: #{vgg_forward.5} parent=0 // pred_check_branch
    %28 = sbr.rel (0) target = $region29
  $region28: #{vgg_forward.5} parent=0 // pred_region
    _
  $region29: #{vgg_forward.5} parent=0 // pred_fallthru
    _
  // Predicated region
  $region30: #{vgg_forward.5} parent=0 // pred_check
    _
  $region31: #{vgg_forward.5} parent=0 // pred_check_branch
    %30 = sbr.rel (0) target = $region33
  $region32: #{vgg_forward.5} parent=0 // pred_region
    _
  $region33: #{vgg_forward.5} parent=0 // pred_fallthru
    _
  // Predicated region
  $region34: #{vgg_forward.5} parent=0 // pred_check
    _
  $region35: #{vgg_forward.5} parent=0 // pred_check_branch
    %32 = sbr.rel (0) target = $region37
  $region36: #{vgg_forward.5} parent=0 // pred_region
    _
  $region37: #{vgg_forward.5} parent=0 // pred_fallthru
    _
  // Predicated region
  $region38: #{vgg_forward.5} parent=0 // pred_check
    _
  $region39: #{vgg_forward.5} parent=0 // pred_check_branch
    %34 = sbr.rel (0) target = $region41
  $region40: #{vgg_forward.5} parent=0 // pred_region
    _
  $region41: #{vgg_forward.5} parent=0 // pred_fallthru
    _
  %v35 = vld [vmem:[%s0] sm:$0xff]
  %v36 = vld [vmem:[%s1] sm:$0xff]
  %v37 = vld [vmem:[%s1 + $0x8] sm:$0xff]
  %v38 = vld [vmem:[%s1 + $0x10] sm:$0xff]
  %v39 = vld [vmem:[%s1 + $0x18] sm:$0xff]
  %v40 = vld [vmem:[%s1 + $0x20] sm:$0xff]
  %v41 = vld [vmem:[%s1 + $0x28] sm:$0xff]
  %v42 = vld [vmem:[%s1 + $0x30] sm:$0xff]
  %v43 = vld [vmem:[%s1 + $0x38] sm:$0xff]
  %v44 = vld [vmem:[%s1 + $0x40] sm:$0xff]
  %v45 = vld [vmem:[%s1 + $0x48] sm:$0xff]
  %v46 = vld [vmem:[%s1 + $0x50] sm:$0xff]
  %v47 = vld [vmem:[%s1 + $0x58] sm:$0xff]
  %v48 = vld [vmem:[%s1 + $0x60] sm:$0xff]
  %v49 = vld [vmem:[%s1 + $0x68] sm:$0xff]
  %v50 = vld [vmem:[%s1 + $0x70] sm:$0xff]
  %v51 = vld [vmem:[%s1 + $0x78] sm:$0xff]
  %v52 = vld [vmem:[%s1 + $0x80] sm:$0xff]
  %v53 = vld [vmem:[%s1 + $0x88] sm:$0xff]
  %v54 = vld [vmem:[%s1 + $0x90] sm:$0xff]
  %v55 = vld [vmem:[%s1 + $0x98] sm:$0xff]
  %v56 = vld [vmem:[%s1 + $0xa0] sm:$0xff]
  %v57 = vld [vmem:[%s1 + $0xa8] sm:$0xff]
  %v58 = vld [vmem:[%s1 + $0xb0] sm:$0xff]
  %v59 = vld [vmem:[%s1 + $0xb8] sm:$0xff]
  %v60 = vld [vmem:[%s1 + $0xc0] sm:$0xff]
  %v61 = vld [vmem:[%s1 + $0xc8] sm:$0xff]
  %v62 = vld [vmem:[%s1 + $0xd0] sm:$0xff]
  %v63 = vld [vmem:[%s1 + $0xd8] sm:$0xff]
  %v64 = vld [vmem:[%s1 + $0xe0] sm:$0xff]
  %v65 = vld [vmem:[%s1 + $0xe8] sm:$0xff]
  %v66 = vld [vmem:[%s1 + $0xf0] sm:$0xff]
  %v67 = vld [vmem:[%s1 + $0xf8] sm:$0xff]
  %v68 = vld [vmem:[%s1 + $0x100] sm:$0xff]
  %v69 = vld [vmem:[%s1 + $0x108] sm:$0xff]
  %v70 = vld [vmem:[%s1 + $0x110] sm:$0xff]
  %v71 = vld [vmem:[%s1 + $0x118] sm:$0xff]
  %v72 = vld [vmem:[%s1 + $0x120] sm:$0xff]
  %v73 = vld [vmem:[%s1 + $0x128] sm:$0xff]
  %v74 = vld [vmem:[%s1 + $0x130] sm:$0xff]
  %v75 = vld [vmem:[%s1 + $0x138] sm:$0xff]
  %v76 = vld [vmem:[%s1 + $0x140] sm:$0xff]
  %v77 = vld [vmem:[%s1 + $0x148] sm:$0xff]
  %v78 = vld [vmem:[%s1 + $0x150] sm:$0xff]
  %v79 = vld [vmem:[%s1 + $0x158] sm:$0xff]
  %v80 = vld [vmem:[%s1 + $0x160] sm:$0xff]
  %v81 = vld [vmem:[%s1 + $0x168] sm:$0xff]
  %v82 = vld [vmem:[%s1 + $0x170] sm:$0xff]
  %v83 = vld [vmem:[%s1 + $0x178] sm:$0xff]
  %v84 = vld [vmem:[%s1 + $0x180] sm:$0xff]
  %v85 = vld [vmem:[%s1 + $0x188] sm:$0xff]
  %v86 = vld [vmem:[%s1 + $0x190] sm:$0xff]
  %v87 = vld [vmem:[%s1 + $0x198] sm:$0xff]
  %v88 = vld [vmem:[%s1 + $0x1a0] sm:$0xff]
  %v89 = vld [vmem:[%s1 + $0x1a8] sm:$0xff]
  %v90 = vld [vmem:[%s1 + $0x1b0] sm:$0xff]
  %v91 = vld [vmem:[%s1 + $0x1b8] sm:$0xff]
  %v92 = vld [vmem:[%s1 + $0x1c0] sm:$0xff]
  %v93 = vld [vmem:[%s1 + $0x1c8] sm:$0xff]
  %v94 = vld [vmem:[%s1 + $0x1d0] sm:$0xff]
  %v95 = vld [vmem:[%s1 + $0x1d8] sm:$0xff]
  %v96 = vld [vmem:[%s1 + $0x1e0] sm:$0xff]
  %v97 = vld [vmem:[%s1 + $0x1e8] sm:$0xff]
  %v98 = vld [vmem:[%s1 + $0x1f0] sm:$0xff]
  %v99 = vld [vmem:[%s1 + $0x1f8] sm:$0xff]
  %v100 = vld [vmem:[%s1 + $0x200] sm:$0xff]
  %v101 = vld [vmem:[%s1 + $0x208] sm:$0xff]
  %v102 = vld [vmem:[%s1 + $0x210] sm:$0xff]
  %v103 = vld [vmem:[%s1 + $0x218] sm:$0xff]
  %v104 = vld [vmem:[%s1 + $0x220] sm:$0xff]
  %v105 = vld [vmem:[%s1 + $0x228] sm:$0xff]
  %v106 = vld [vmem:[%s1 + $0x230] sm:$0xff]
  %v107 = vld [vmem:[%s1 + $0x238] sm:$0xff]
  %v108 = vld [vmem:[%s1 + $0x240] sm:$0xff]
  %v109 = vld [vmem:[%s1 + $0x248] sm:$0xff]
  %v110 = vld [vmem:[%s1 + $0x250] sm:$0xff]
  %v111 = vld [vmem:[%s1 + $0x258] sm:$0xff]
  %v112 = vld [vmem:[%s1 + $0x260] sm:$0xff]
  %v113 = vld [vmem:[%s1 + $0x268] sm:$0xff]
  %v114 = vld [vmem:[%s1 + $0x270] sm:$0xff]
  %v115 = vld [vmem:[%s1 + $0x278] sm:$0xff]
  %v116 = vld [vmem:[%s1 + $0x280] sm:$0xff]
  %v117 = vld [vmem:[%s1 + $0x288] sm:$0xff]
  %v118 = vld [vmem:[%s1 + $0x290] sm:$0xff]
  %v119 = vld [vmem:[%s1 + $0x298] sm:$0xff]
  %v120 = vld [vmem:[%s1 + $0x2a0] sm:$0xff]
  %v121 = vld [vmem:[%s1 + $0x2a8] sm:$0xff]
  %v122 = vld [vmem:[%s1 + $0x2b0] sm:$0xff]
  %v123 = vld [vmem:[%s1 + $0x2b8] sm:$0xff]
  %v124 = vld [vmem:[%s1 + $0x2c0] sm:$0xff]
  %v125 = vld [vmem:[%s1 + $0x2c8] sm:$0xff]
  %v126 = vld [vmem:[%s1 + $0x2d0] sm:$0xff]
  %v127 = vld [vmem:[%s1 + $0x2d8] sm:$0xff]
  %v128 = vld [vmem:[%s1 + $0x2e0] sm:$0xff]
  %v129 = vld [vmem:[%s1 + $0x2e8] sm:$0xff]
  %v130 = vld [vmem:[%s1 + $0x2f0] sm:$0xff]
  %v131 = vld [vmem:[%s1 + $0x2f8] sm:$0xff]
  %v132 = vld [vmem:[%s1 + $0x300] sm:$0xff]
  %v133 = vld [vmem:[%s1 + $0x308] sm:$0xff]
  %v134 = vld [vmem:[%s1 + $0x310] sm:$0xff]
  %v135 = vld [vmem:[%s1 + $0x318] sm:$0xff]
  %v136 = vld [vmem:[%s1 + $0x320] sm:$0xff]
  %v137 = vld [vmem:[%s1 + $0x328] sm:$0xff]
  %v138 = vld [vmem:[%s1 + $0x330] sm:$0xff]
  %v139 = vld [vmem:[%s1 + $0x338] sm:$0xff]
  %v140 = vld [vmem:[%s1 + $0x340] sm:$0xff]
  %v141 = vld [vmem:[%s1 + $0x348] sm:$0xff]
  %v142 = vld [vmem:[%s1 + $0x350] sm:$0xff]
  %v143 = vld [vmem:[%s1 + $0x358] sm:$0xff]
  %v144 = vld [vmem:[%s1 + $0x360] sm:$0xff]
  %v145 = vld [vmem:[%s1 + $0x368] sm:$0xff]
  %v146 = vld [vmem:[%s1 + $0x370] sm:$0xff]
  %v147 = vld [vmem:[%s1 + $0x378] sm:$0xff]
  %v148 = vld [vmem:[%s1 + $0x380] sm:$0xff]
  %v149 = vld [vmem:[%s1 + $0x388] sm:$0xff]
  %v150 = vld [vmem:[%s1 + $0x390] sm:$0xff]
  %v151 = vld [vmem:[%s1 + $0x398] sm:$0xff]
  %v152 = vld [vmem:[%s1 + $0x3a0] sm:$0xff]
  %v153 = vld [vmem:[%s1 + $0x3a8] sm:$0xff]
  %v154 = vld [vmem:[%s1 + $0x3b0] sm:$0xff]
  %v155 = vld [vmem:[%s1 + $0x3b8] sm:$0xff]
  %v156 = vld [vmem:[%s1 + $0x3c0] sm:$0xff]
  %v157 = vld [vmem:[%s1 + $0x3c8] sm:$0xff]
  %v158 = vld [vmem:[%s1 + $0x3d0] sm:$0xff]
  %v159 = vld [vmem:[%s1 + $0x3d8] sm:$0xff]
  %v160 = vld [vmem:[%s1 + $0x3e0] sm:$0xff]
  %v161 = vld [vmem:[%s1 + $0x3e8] sm:$0xff]
  %v162 = vld [vmem:[%s1 + $0x3f0] sm:$0xff]
  %v163 = vld [vmem:[%s1 + $0x3f8] sm:$0xff]
  %v164 = vld [vmem:[%s2] sm:$0x3]
  %v166 = vperm.slane %v164, 0
  %v167 = vperm.slane %v164, 1
  %171 = vst [vmem:[#allocation1] ss:$9 sm:$0xff] %v35
  %v172 = vld [vmem:[#allocation1] sm:$0xff]
  %v173 = vld [vmem:[#allocation1 + $0x9] sm:$0xff]
  %v174 = vld [vmem:[#allocation1 + $0x12] sm:$0xff]
  %v175 = vld [vmem:[#allocation1 + $0x1b] sm:$0xff]
  %v176 = vld [vmem:[#allocation1 + $0x24] sm:$0xff]
  %v177 = vld [vmem:[#allocation1 + $0x2d] sm:$0xff]
  %v178 = vld [vmem:[#allocation1 + $0x36] sm:$0xff]
  %v179 = vld [vmem:[#allocation1 + $0x3f] sm:$0xff]
  %v316 = vunpack.c.l.b16 %v36
  %v317 = vunpack.c.h.b16 %v36
  %v318 = vunpack.c.l.b16 %v37
  %v319 = vunpack.c.h.b16 %v37
  %v320 = vunpack.c.l.b16 %v38
  %v321 = vunpack.c.h.b16 %v38
  %v322 = vunpack.c.l.b16 %v39
  %v323 = vunpack.c.h.b16 %v39
  %v324 = vunpack.c.l.b16 %v40
  %v325 = vunpack.c.h.b16 %v40
  %v326 = vunpack.c.l.b16 %v41
  %v327 = vunpack.c.h.b16 %v41
  %v328 = vunpack.c.l.b16 %v42
  %v329 = vunpack.c.h.b16 %v42
  %v330 = vunpack.c.l.b16 %v43
  %v331 = vunpack.c.h.b16 %v43
  %v332 = vunpack.c.l.b16 %v44
  %v333 = vunpack.c.h.b16 %v44
  %v334 = vunpack.c.l.b16 %v45
  %v335 = vunpack.c.h.b16 %v45
  %v336 = vunpack.c.l.b16 %v46
  %v337 = vunpack.c.h.b16 %v46
  %v338 = vunpack.c.l.b16 %v47
  %v339 = vunpack.c.h.b16 %v47
  %v340 = vunpack.c.l.b16 %v48
  %v341 = vunpack.c.h.b16 %v48
  %v342 = vunpack.c.l.b16 %v49
  %v343 = vunpack.c.h.b16 %v49
  %v344 = vunpack.c.l.b16 %v50
  %v345 = vunpack.c.h.b16 %v50
  %v346 = vunpack.c.l.b16 %v51
  %v347 = vunpack.c.h.b16 %v51
  %v348 = vunpack.c.l.b16 %v52
  %v349 = vunpack.c.h.b16 %v52
  %v350 = vunpack.c.l.b16 %v53
  %v351 = vunpack.c.h.b16 %v53
  %v352 = vunpack.c.l.b16 %v54
  %v353 = vunpack.c.h.b16 %v54
  %v354 = vunpack.c.l.b16 %v55
  %v355 = vunpack.c.h.b16 %v55
  %v356 = vunpack.c.l.b16 %v56
  %v357 = vunpack.c.h.b16 %v56
  %v358 = vunpack.c.l.b16 %v57
  %v359 = vunpack.c.h.b16 %v57
  %v360 = vunpack.c.l.b16 %v58
  %v361 = vunpack.c.h.b16 %v58
  %v362 = vunpack.c.l.b16 %v59
  %v363 = vunpack.c.h.b16 %v59
  %v364 = vunpack.c.l.b16 %v60
  %v365 = vunpack.c.h.b16 %v60
  %v366 = vunpack.c.l.b16 %v61
  %v367 = vunpack.c.h.b16 %v61
  %v368 = vunpack.c.l.b16 %v62
  %v369 = vunpack.c.h.b16 %v62
  %v370 = vunpack.c.l.b16 %v63
  %v371 = vunpack.c.h.b16 %v63
  %v372 = vunpack.c.l.b16 %v64
  %v373 = vunpack.c.h.b16 %v64
  %v374 = vunpack.c.l.b16 %v65
  %v375 = vunpack.c.h.b16 %v65
  %v376 = vunpack.c.l.b16 %v66
  %v377 = vunpack.c.h.b16 %v66
  %v378 = vunpack.c.l.b16 %v67
  %v379 = vunpack.c.h.b16 %v67
  %v380 = vunpack.c.l.b16 %v68
  %v381 = vunpack.c.h.b16 %v68
  %v382 = vunpack.c.l.b16 %v69
  %v383 = vunpack.c.h.b16 %v69
  %v384 = vunpack.c.l.b16 %v70
  %v385 = vunpack.c.h.b16 %v70
  %v386 = vunpack.c.l.b16 %v71
  %v387 = vunpack.c.h.b16 %v71
  %v388 = vunpack.c.l.b16 %v72
  %v389 = vunpack.c.h.b16 %v72
  %v390 = vunpack.c.l.b16 %v73
  %v391 = vunpack.c.h.b16 %v73
  %v392 = vunpack.c.l.b16 %v74
  %v393 = vunpack.c.h.b16 %v74
  %v394 = vunpack.c.l.b16 %v75
  %v395 = vunpack.c.h.b16 %v75
  %v396 = vunpack.c.l.b16 %v76
  %v397 = vunpack.c.h.b16 %v76
  %v398 = vunpack.c.l.b16 %v77
  %v399 = vunpack.c.h.b16 %v77
  %v400 = vunpack.c.l.b16 %v78
  %v401 = vunpack.c.h.b16 %v78
  %v402 = vunpack.c.l.b16 %v79
  %v403 = vunpack.c.h.b16 %v79
  %v404 = vunpack.c.l.b16 %v80
  %v405 = vunpack.c.h.b16 %v80
  %v406 = vunpack.c.l.b16 %v81
  %v407 = vunpack.c.h.b16 %v81
  %v408 = vunpack.c.l.b16 %v82
  %v409 = vunpack.c.h.b16 %v82
  %v410 = vunpack.c.l.b16 %v83
  %v411 = vunpack.c.h.b16 %v83
  %v412 = vunpack.c.l.b16 %v84
  %v413 = vunpack.c.h.b16 %v84
  %v414 = vunpack.c.l.b16 %v85
  %v415 = vunpack.c.h.b16 %v85
  %v416 = vunpack.c.l.b16 %v86
  %v417 = vunpack.c.h.b16 %v86
  %v418 = vunpack.c.l.b16 %v87
  %v419 = vunpack.c.h.b16 %v87
  %v420 = vunpack.c.l.b16 %v88
  %v421 = vunpack.c.h.b16 %v88
  %v422 = vunpack.c.l.b16 %v89
  %v423 = vunpack.c.h.b16 %v89
  %v424 = vunpack.c.l.b16 %v90
  %v425 = vunpack.c.h.b16 %v90
  %v426 = vunpack.c.l.b16 %v91
  %v427 = vunpack.c.h.b16 %v91
  %v428 = vunpack.c.l.b16 %v92
  %v429 = vunpack.c.h.b16 %v92
  %v430 = vunpack.c.l.b16 %v93
  %v431 = vunpack.c.h.b16 %v93
  %v432 = vunpack.c.l.b16 %v94
  %v433 = vunpack.c.h.b16 %v94
  %v434 = vunpack.c.l.b16 %v95
  %v435 = vunpack.c.h.b16 %v95
  %v436 = vunpack.c.l.b16 %v96
  %v437 = vunpack.c.h.b16 %v96
  %v438 = vunpack.c.l.b16 %v97
  %v439 = vunpack.c.h.b16 %v97
  %v440 = vunpack.c.l.b16 %v98
  %v441 = vunpack.c.h.b16 %v98
  %v442 = vunpack.c.l.b16 %v99
  %v443 = vunpack.c.h.b16 %v99
  %v444 = vunpack.c.l.b16 %v100
  %v445 = vunpack.c.h.b16 %v100
  %v446 = vunpack.c.l.b16 %v101
  %v447 = vunpack.c.h.b16 %v101
  %v448 = vunpack.c.l.b16 %v102
  %v449 = vunpack.c.h.b16 %v102
  %v450 = vunpack.c.l.b16 %v103
  %v451 = vunpack.c.h.b16 %v103
  %v452 = vunpack.c.l.b16 %v104
  %v453 = vunpack.c.h.b16 %v104
  %v454 = vunpack.c.l.b16 %v105
  %v455 = vunpack.c.h.b16 %v105
  %v456 = vunpack.c.l.b16 %v106
  %v457 = vunpack.c.h.b16 %v106
  %v458 = vunpack.c.l.b16 %v107
  %v459 = vunpack.c.h.b16 %v107
  %v460 = vunpack.c.l.b16 %v108
  %v461 = vunpack.c.h.b16 %v108
  %v462 = vunpack.c.l.b16 %v109
  %v463 = vunpack.c.h.b16 %v109
  %v464 = vunpack.c.l.b16 %v110
  %v465 = vunpack.c.h.b16 %v110
  %v466 = vunpack.c.l.b16 %v111
  %v467 = vunpack.c.h.b16 %v111
  %v468 = vunpack.c.l.b16 %v112
  %v469 = vunpack.c.h.b16 %v112
  %v470 = vunpack.c.l.b16 %v113
  %v471 = vunpack.c.h.b16 %v113
  %v472 = vunpack.c.l.b16 %v114
  %v473 = vunpack.c.h.b16 %v114
  %v474 = vunpack.c.l.b16 %v115
  %v475 = vunpack.c.h.b16 %v115
  %v476 = vunpack.c.l.b16 %v116
  %v477 = vunpack.c.h.b16 %v116
  %v478 = vunpack.c.l.b16 %v117
  %v479 = vunpack.c.h.b16 %v117
  %v480 = vunpack.c.l.b16 %v118
  %v481 = vunpack.c.h.b16 %v118
  %v482 = vunpack.c.l.b16 %v119
  %v483 = vunpack.c.h.b16 %v119
  %v484 = vunpack.c.l.b16 %v120
  %v485 = vunpack.c.h.b16 %v120
  %v486 = vunpack.c.l.b16 %v121
  %v487 = vunpack.c.h.b16 %v121
  %v488 = vunpack.c.l.b16 %v122
  %v489 = vunpack.c.h.b16 %v122
  %v490 = vunpack.c.l.b16 %v123
  %v491 = vunpack.c.h.b16 %v123
  %v492 = vunpack.c.l.b16 %v124
  %v493 = vunpack.c.h.b16 %v124
  %v494 = vunpack.c.l.b16 %v125
  %v495 = vunpack.c.h.b16 %v125
  %v496 = vunpack.c.l.b16 %v126
  %v497 = vunpack.c.h.b16 %v126
  %v498 = vunpack.c.l.b16 %v127
  %v499 = vunpack.c.h.b16 %v127
  %v500 = vunpack.c.l.b16 %v128
  %v501 = vunpack.c.h.b16 %v128
  %v502 = vunpack.c.l.b16 %v129
  %v503 = vunpack.c.h.b16 %v129
  %v504 = vunpack.c.l.b16 %v130
  %v505 = vunpack.c.h.b16 %v130
  %v506 = vunpack.c.l.b16 %v131
  %v507 = vunpack.c.h.b16 %v131
  %v508 = vunpack.c.l.b16 %v132
  %v509 = vunpack.c.h.b16 %v132
  %v510 = vunpack.c.l.b16 %v133
  %v511 = vunpack.c.h.b16 %v133
  %v512 = vunpack.c.l.b16 %v134
  %v513 = vunpack.c.h.b16 %v134
  %v514 = vunpack.c.l.b16 %v135
  %v515 = vunpack.c.h.b16 %v135
  %v516 = vunpack.c.l.b16 %v136
  %v517 = vunpack.c.h.b16 %v136
  %v518 = vunpack.c.l.b16 %v137
  %v519 = vunpack.c.h.b16 %v137
  %v520 = vunpack.c.l.b16 %v138
  %v521 = vunpack.c.h.b16 %v138
  %v522 = vunpack.c.l.b16 %v139
  %v523 = vunpack.c.h.b16 %v139
  %v524 = vunpack.c.l.b16 %v140
  %v525 = vunpack.c.h.b16 %v140
  %v526 = vunpack.c.l.b16 %v141
  %v527 = vunpack.c.h.b16 %v141
  %v528 = vunpack.c.l.b16 %v142
  %v529 = vunpack.c.h.b16 %v142
  %v530 = vunpack.c.l.b16 %v143
  %v531 = vunpack.c.h.b16 %v143
  %v532 = vunpack.c.l.b16 %v144
  %v533 = vunpack.c.h.b16 %v144
  %v534 = vunpack.c.l.b16 %v145
  %v535 = vunpack.c.h.b16 %v145
  %v536 = vunpack.c.l.b16 %v146
  %v537 = vunpack.c.h.b16 %v146
  %v538 = vunpack.c.l.b16 %v147
  %v539 = vunpack.c.h.b16 %v147
  %v540 = vunpack.c.l.b16 %v148
  %v541 = vunpack.c.h.b16 %v148
  %v542 = vunpack.c.l.b16 %v149
  %v543 = vunpack.c.h.b16 %v149
  %v544 = vunpack.c.l.b16 %v150
  %v545 = vunpack.c.h.b16 %v150
  %v546 = vunpack.c.l.b16 %v151
  %v547 = vunpack.c.h.b16 %v151
  %v548 = vunpack.c.l.b16 %v152
  %v549 = vunpack.c.h.b16 %v152
  %v550 = vunpack.c.l.b16 %v153
  %v551 = vunpack.c.h.b16 %v153
  %v552 = vunpack.c.l.b16 %v154
  %v553 = vunpack.c.h.b16 %v154
  %v554 = vunpack.c.l.b16 %v155
  %v555 = vunpack.c.h.b16 %v155
  %v556 = vunpack.c.l.b16 %v156
  %v557 = vunpack.c.h.b16 %v156
  %v558 = vunpack.c.l.b16 %v157
  %v559 = vunpack.c.h.b16 %v157
  %v560 = vunpack.c.l.b16 %v158
  %v561 = vunpack.c.h.b16 %v158
  %v562 = vunpack.c.l.b16 %v159
  %v563 = vunpack.c.h.b16 %v159
  %v564 = vunpack.c.l.b16 %v160
  %v565 = vunpack.c.h.b16 %v160
  %v566 = vunpack.c.l.b16 %v161
  %v567 = vunpack.c.h.b16 %v161
  %v568 = vunpack.c.l.b16 %v162
  %v569 = vunpack.c.h.b16 %v162
  %v570 = vunpack.c.l.b16 %v163
  %v571 = vunpack.c.h.b16 %v163
  %v572 = vpack.c.b16 %v318, %v316
  %v573 = vpack.c.b16 %v319, %v317
  %v574 = vpack.c.b16 %v322, %v320
  %v575 = vpack.c.b16 %v323, %v321
  %v576 = vpack.c.b16 %v326, %v324
  %v577 = vpack.c.b16 %v327, %v325
  %v578 = vpack.c.b16 %v330, %v328
  %v579 = vpack.c.b16 %v331, %v329
  %v580 = vpack.c.b16 %v334, %v332
  %v581 = vpack.c.b16 %v335, %v333
  %v582 = vpack.c.b16 %v338, %v336
  %v583 = vpack.c.b16 %v339, %v337
  %v584 = vpack.c.b16 %v342, %v340
  %v585 = vpack.c.b16 %v343, %v341
  %v586 = vpack.c.b16 %v346, %v344
  %v587 = vpack.c.b16 %v347, %v345
  %v588 = vpack.c.b16 %v350, %v348
  %v589 = vpack.c.b16 %v351, %v349
  %v590 = vpack.c.b16 %v354, %v352
  %v591 = vpack.c.b16 %v355, %v353
  %v592 = vpack.c.b16 %v358, %v356
  %v593 = vpack.c.b16 %v359, %v357
  %v594 = vpack.c.b16 %v362, %v360
  %v595 = vpack.c.b16 %v363, %v361
  %v596 = vpack.c.b16 %v366, %v364
  %v597 = vpack.c.b16 %v367, %v365
  %v598 = vpack.c.b16 %v370, %v368
  %v599 = vpack.c.b16 %v371, %v369
  %v600 = vpack.c.b16 %v374, %v372
  %v601 = vpack.c.b16 %v375, %v373
  %v602 = vpack.c.b16 %v378, %v376
  %v603 = vpack.c.b16 %v379, %v377
  %v604 = vpack.c.b16 %v382, %v380
  %v605 = vpack.c.b16 %v383, %v381
  %v606 = vpack.c.b16 %v386, %v384
  %v607 = vpack.c.b16 %v387, %v385
  %v608 = vpack.c.b16 %v390, %v388
  %v609 = vpack.c.b16 %v391, %v389
  %v610 = vpack.c.b16 %v394, %v392
  %v611 = vpack.c.b16 %v395, %v393
  %v612 = vpack.c.b16 %v398, %v396
  %v613 = vpack.c.b16 %v399, %v397
  %v614 = vpack.c.b16 %v402, %v400
  %v615 = vpack.c.b16 %v403, %v401
  %v616 = vpack.c.b16 %v406, %v404
  %v617 = vpack.c.b16 %v407, %v405
  %v618 = vpack.c.b16 %v410, %v408
  %v619 = vpack.c.b16 %v411, %v409
  %v620 = vpack.c.b16 %v414, %v412
  %v621 = vpack.c.b16 %v415, %v413
  %v622 = vpack.c.b16 %v418, %v416
  %v623 = vpack.c.b16 %v419, %v417
  %v624 = vpack.c.b16 %v422, %v420
  %v625 = vpack.c.b16 %v423, %v421
  %v626 = vpack.c.b16 %v426, %v424
  %v627 = vpack.c.b16 %v427, %v425
  %v628 = vpack.c.b16 %v430, %v428
  %v629 = vpack.c.b16 %v431, %v429
  %v630 = vpack.c.b16 %v434, %v432
  %v631 = vpack.c.b16 %v435, %v433
  %v632 = vpack.c.b16 %v438, %v436
  %v633 = vpack.c.b16 %v439, %v437
  %v634 = vpack.c.b16 %v442, %v440
  %v635 = vpack.c.b16 %v443, %v441
  %v636 = vpack.c.b16 %v446, %v444
  %v637 = vpack.c.b16 %v447, %v445
  %v638 = vpack.c.b16 %v450, %v448
  %v639 = vpack.c.b16 %v451, %v449
  %v640 = vpack.c.b16 %v454, %v452
  %v641 = vpack.c.b16 %v455, %v453
  %v642 = vpack.c.b16 %v458, %v456
  %v643 = vpack.c.b16 %v459, %v457
  %v644 = vpack.c.b16 %v462, %v460
  %v645 = vpack.c.b16 %v463, %v461
  %v646 = vpack.c.b16 %v466, %v464
  %v647 = vpack.c.b16 %v467, %v465
  %v648 = vpack.c.b16 %v470, %v468
  %v649 = vpack.c.b16 %v471, %v469
  %v650 = vpack.c.b16 %v474, %v472
  %v651 = vpack.c.b16 %v475, %v473
  %v652 = vpack.c.b16 %v478, %v476
  %v653 = vpack.c.b16 %v479, %v477
  %v654 = vpack.c.b16 %v482, %v480
  %v655 = vpack.c.b16 %v483, %v481
  %v656 = vpack.c.b16 %v486, %v484
  %v657 = vpack.c.b16 %v487, %v485
  %v658 = vpack.c.b16 %v490, %v488
  %v659 = vpack.c.b16 %v491, %v489
  %v660 = vpack.c.b16 %v494, %v492
  %v661 = vpack.c.b16 %v495, %v493
  %v662 = vpack.c.b16 %v498, %v496
  %v663 = vpack.c.b16 %v499, %v497
  %v664 = vpack.c.b16 %v502, %v500
  %v665 = vpack.c.b16 %v503, %v501
  %v666 = vpack.c.b16 %v506, %v504
  %v667 = vpack.c.b16 %v507, %v505
  %v668 = vpack.c.b16 %v510, %v508
  %v669 = vpack.c.b16 %v511, %v509
  %v670 = vpack.c.b16 %v514, %v512
  %v671 = vpack.c.b16 %v515, %v513
  %v672 = vpack.c.b16 %v518, %v516
  %v673 = vpack.c.b16 %v519, %v517
  %v674 = vpack.c.b16 %v522, %v520
  %v675 = vpack.c.b16 %v523, %v521
  %v676 = vpack.c.b16 %v526, %v524
  %v677 = vpack.c.b16 %v527, %v525
  %v678 = vpack.c.b16 %v530, %v528
  %v679 = vpack.c.b16 %v531, %v529
  %v680 = vpack.c.b16 %v534, %v532
  %v681 = vpack.c.b16 %v535, %v533
  %v682 = vpack.c.b16 %v538, %v536
  %v683 = vpack.c.b16 %v539, %v537
  %v684 = vpack.c.b16 %v542, %v540
  %v685 = vpack.c.b16 %v543, %v541
  %v686 = vpack.c.b16 %v546, %v544
  %v687 = vpack.c.b16 %v547, %v545
  %v688 = vpack.c.b16 %v550, %v548
  %v689 = vpack.c.b16 %v551, %v549
  %v690 = vpack.c.b16 %v554, %v552
  %v691 = vpack.c.b16 %v555, %v553
  %v692 = vpack.c.b16 %v558, %v556
  %v693 = vpack.c.b16 %v559, %v557
  %v694 = vpack.c.b16 %v562, %v560
  %v695 = vpack.c.b16 %v563, %v561
  %v696 = vpack.c.b16 %v566, %v564
  %v697 = vpack.c.b16 %v567, %v565
  %v698 = vpack.c.b16 %v570, %v568
  %v699 = vpack.c.b16 %v571, %v569
  %828 = vmatpush.bf16.msra.mxu0 %v586
  %829 = vmatpush.bf16.msra.mxu0 %v584
  %830 = vmatpush.bf16.msra.mxu0 %v582
  %831 = vmatpush.bf16.msra.mxu0 %v580
  %832 = vmatpush.bf16.msra.mxu0 %v578
  %833 = vmatpush.bf16.msra.mxu0 %v576
  %834 = vmatpush.bf16.msra.mxu0 %v574
  %835 = vmatpush.bf16.msra.mxu0 %v572
  %836 = vmatmul.bf16.gmra.mxu0 %v172
  %v837 = vpop.f32.mrf.mxu0
  %v838 = vadd.f32 %v166, %v837
  %v839 = vpop.f32.mrf.mxu0
  %840 = vdwg.mxu0
  %841 = vmatpush.bf16.msra.mxu0 %v602
  %842 = vmatpush.bf16.msra.mxu0 %v600
  %843 = vmatpush.bf16.msra.mxu0 %v598
  %844 = vmatpush.bf16.msra.mxu0 %v596
  %845 = vmatpush.bf16.msra.mxu0 %v594
  %846 = vmatpush.bf16.msra.mxu0 %v592
  %847 = vmatpush.bf16.msra.mxu0 %v590
  %848 = vmatpush.bf16.msra.mxu0 %v588
  %849 = vmatmul.bf16.gmra.mxu0 %v173
  %v850 = vpop.f32.mrf.mxu0
  %v851 = vadd.f32 %v838, %v850
  %v852 = vpop.f32.mrf.mxu0
  %853 = vdwg.mxu0
  %854 = vmatpush.bf16.msra.mxu0 %v618
  %855 = vmatpush.bf16.msra.mxu0 %v616
  %856 = vmatpush.bf16.msra.mxu0 %v614
  %857 = vmatpush.bf16.msra.mxu0 %v612
  %858 = vmatpush.bf16.msra.mxu0 %v610
  %859 = vmatpush.bf16.msra.mxu0 %v608
  %860 = vmatpush.bf16.msra.mxu0 %v606
  %861 = vmatpush.bf16.msra.mxu0 %v604
  %862 = vmatmul.bf16.gmra.mxu0 %v174
  %v863 = vpop.f32.mrf.mxu0
  %v864 = vadd.f32 %v851, %v863
  %v865 = vpop.f32.mrf.mxu0
  %866 = vdwg.mxu0
  %867 = vmatpush.bf16.msra.mxu0 %v634
  %868 = vmatpush.bf16.msra.mxu0 %v632
  %869 = vmatpush.bf16.msra.mxu0 %v630
  %870 = vmatpush.bf16.msra.mxu0 %v628
  %871 = vmatpush.bf16.msra.mxu0 %v626
  %872 = vmatpush.bf16.msra.mxu0 %v624
  %873 = vmatpush.bf16.msra.mxu0 %v622
  %874 = vmatpush.bf16.msra.mxu0 %v620
  %875 = vmatmul.bf16.gmra.mxu0 %v175
  %v876 = vpop.f32.mrf.mxu0
  %v877 = vadd.f32 %v864, %v876
  %v878 = vpop.f32.mrf.mxu0
  %879 = vdwg.mxu0
  %880 = vmatpush.bf16.msra.mxu0 %v650
  %881 = vmatpush.bf16.msra.mxu0 %v648
  %882 = vmatpush.bf16.msra.mxu0 %v646
  %883 = vmatpush.bf16.msra.mxu0 %v644
  %884 = vmatpush.bf16.msra.mxu0 %v642
  %885 = vmatpush.bf16.msra.mxu0 %v640
  %886 = vmatpush.bf16.msra.mxu0 %v638
  %887 = vmatpush.bf16.msra.mxu0 %v636
  %888 = vmatmul.bf16.gmra.mxu0 %v176
  %v889 = vpop.f32.mrf.mxu0
  %v890 = vadd.f32 %v877, %v889
  %v891 = vpop.f32.mrf.mxu0
  %892 = vdwg.mxu0
  %893 = vmatpush.bf16.msra.mxu0 %v666
  %894 = vmatpush.bf16.msra.mxu0 %v664
  %895 = vmatpush.bf16.msra.mxu0 %v662
  %896 = vmatpush.bf16.msra.mxu0 %v660
  %897 = vmatpush.bf16.msra.mxu0 %v658
  %898 = vmatpush.bf16.msra.mxu0 %v656
  %899 = vmatpush.bf16.msra.mxu0 %v654
  %900 = vmatpush.bf16.msra.mxu0 %v652
  %901 = vmatmul.bf16.gmra.mxu0 %v177
  %v902 = vpop.f32.mrf.mxu0
  %v903 = vadd.f32 %v890, %v902
  %v904 = vpop.f32.mrf.mxu0
  %905 = vdwg.mxu0
  %906 = vmatpush.bf16.msra.mxu0 %v682
  %907 = vmatpush.bf16.msra.mxu0 %v680
  %908 = vmatpush.bf16.msra.mxu0 %v678
  %909 = vmatpush.bf16.msra.mxu0 %v676
  %910 = vmatpush.bf16.msra.mxu0 %v674
  %911 = vmatpush.bf16.msra.mxu0 %v672
  %912 = vmatpush.bf16.msra.mxu0 %v670
  %913 = vmatpush.bf16.msra.mxu0 %v668
  %914 = vmatmul.bf16.gmra.mxu0 %v178
  %v915 = vpop.f32.mrf.mxu0
  %v916 = vadd.f32 %v903, %v915
  %v917 = vpop.f32.mrf.mxu0
  %918 = vdwg.mxu0
  %919 = vmatpush.bf16.msra.mxu0 %v698
  %920 = vmatpush.bf16.msra.mxu0 %v696
  %921 = vmatpush.bf16.msra.mxu0 %v694
  %922 = vmatpush.bf16.msra.mxu0 %v692
  %923 = vmatpush.bf16.msra.mxu0 %v690
  %924 = vmatpush.bf16.msra.mxu0 %v688
  %925 = vmatpush.bf16.msra.mxu0 %v686
  %926 = vmatpush.bf16.msra.mxu0 %v684
  %927 = vmatmul.bf16.gmra.mxu0 %v179
  %v928 = vpop.f32.mrf.mxu0
  %v929 = vadd.f32 %v916, %v928
  %v930 = vpop.f32.mrf.mxu0
  %931 = vdwg.mxu0
  %932 = vmatpush.bf16.msra.mxu0 %v587
  %933 = vmatpush.bf16.msra.mxu0 %v585
  %934 = vmatpush.bf16.msra.mxu0 %v583
  %935 = vmatpush.bf16.msra.mxu0 %v581
  %936 = vmatpush.bf16.msra.mxu0 %v579
  %937 = vmatpush.bf16.msra.mxu0 %v577
  %938 = vmatpush.bf16.msra.mxu0 %v575
  %939 = vmatpush.bf16.msra.mxu0 %v573
  %940 = vmatmul.bf16.gmra.mxu0 %v172
  %v941 = vpop.f32.mrf.mxu0
  %v942 = vadd.f32 %v167, %v941
  %v943 = vpop.f32.mrf.mxu0
  %944 = vdwg.mxu0
  %945 = vmatpush.bf16.msra.mxu0 %v603
  %946 = vmatpush.bf16.msra.mxu0 %v601
  %947 = vmatpush.bf16.msra.mxu0 %v599
  %948 = vmatpush.bf16.msra.mxu0 %v597
  %949 = vmatpush.bf16.msra.mxu0 %v595
  %950 = vmatpush.bf16.msra.mxu0 %v593
  %951 = vmatpush.bf16.msra.mxu0 %v591
  %952 = vmatpush.bf16.msra.mxu0 %v589
  %953 = vmatmul.bf16.gmra.mxu0 %v173
  %v954 = vpop.f32.mrf.mxu0
  %v955 = vadd.f32 %v942, %v954
  %v956 = vpop.f32.mrf.mxu0
  %957 = vdwg.mxu0
  %958 = vmatpush.bf16.msra.mxu0 %v619
  %959 = vmatpush.bf16.msra.mxu0 %v617
  %960 = vmatpush.bf16.msra.mxu0 %v615
  %961 = vmatpush.bf16.msra.mxu0 %v613
  %962 = vmatpush.bf16.msra.mxu0 %v611
  %963 = vmatpush.bf16.msra.mxu0 %v609
  %964 = vmatpush.bf16.msra.mxu0 %v607
  %965 = vmatpush.bf16.msra.mxu0 %v605
  %966 = vmatmul.bf16.gmra.mxu0 %v174
  %v967 = vpop.f32.mrf.mxu0
  %v968 = vadd.f32 %v955, %v967
  %v969 = vpop.f32.mrf.mxu0
  %970 = vdwg.mxu0
  %971 = vmatpush.bf16.msra.mxu0 %v635
  %972 = vmatpush.bf16.msra.mxu0 %v633
  %973 = vmatpush.bf16.msra.mxu0 %v631
  %974 = vmatpush.bf16.msra.mxu0 %v629
  %975 = vmatpush.bf16.msra.mxu0 %v627
  %976 = vmatpush.bf16.msra.mxu0 %v625
  %977 = vmatpush.bf16.msra.mxu0 %v623
  %978 = vmatpush.bf16.msra.mxu0 %v621
  %979 = vmatmul.bf16.gmra.mxu0 %v175
  %v980 = vpop.f32.mrf.mxu0
  %v981 = vadd.f32 %v968, %v980
  %v982 = vpop.f32.mrf.mxu0
  %983 = vdwg.mxu0
  %984 = vmatpush.bf16.msra.mxu0 %v651
  %985 = vmatpush.bf16.msra.mxu0 %v649
  %986 = vmatpush.bf16.msra.mxu0 %v647
  %987 = vmatpush.bf16.msra.mxu0 %v645
  %988 = vmatpush.bf16.msra.mxu0 %v643
  %989 = vmatpush.bf16.msra.mxu0 %v641
  %990 = vmatpush.bf16.msra.mxu0 %v639
  %991 = vmatpush.bf16.msra.mxu0 %v637
  %992 = vmatmul.bf16.gmra.mxu0 %v176
  %v993 = vpop.f32.mrf.mxu0
  %v994 = vadd.f32 %v981, %v993
  %v995 = vpop.f32.mrf.mxu0
  %996 = vdwg.mxu0
  %997 = vmatpush.bf16.msra.mxu0 %v667
  %998 = vmatpush.bf16.msra.mxu0 %v665
  %999 = vmatpush.bf16.msra.mxu0 %v663
  %1000 = vmatpush.bf16.msra.mxu0 %v661
  %1001 = vmatpush.bf16.msra.mxu0 %v659
  %1002 = vmatpush.bf16.msra.mxu0 %v657
  %1003 = vmatpush.bf16.msra.mxu0 %v655
  %1004 = vmatpush.bf16.msra.mxu0 %v653
  %1005 = vmatmul.bf16.gmra.mxu0 %v177
  %v1006 = vpop.f32.mrf.mxu0
  %v1007 = vadd.f32 %v994, %v1006
  %v1008 = vpop.f32.mrf.mxu0
  %1009 = vdwg.mxu0
  %1010 = vmatpush.bf16.msra.mxu0 %v683
  %1011 = vmatpush.bf16.msra.mxu0 %v681
  %1012 = vmatpush.bf16.msra.mxu0 %v679
  %1013 = vmatpush.bf16.msra.mxu0 %v677
  %1014 = vmatpush.bf16.msra.mxu0 %v675
  %1015 = vmatpush.bf16.msra.mxu0 %v673
  %1016 = vmatpush.bf16.msra.mxu0 %v671
  %1017 = vmatpush.bf16.msra.mxu0 %v669
  %1018 = vmatmul.bf16.gmra.mxu0 %v178
  %v1019 = vpop.f32.mrf.mxu0
  %v1020 = vadd.f32 %v1007, %v1019
  %v1021 = vpop.f32.mrf.mxu0
  %1022 = vdwg.mxu0
  %1023 = vmatpush.bf16.msra.mxu0 %v699
  %1024 = vmatpush.bf16.msra.mxu0 %v697
  %1025 = vmatpush.bf16.msra.mxu0 %v695
  %1026 = vmatpush.bf16.msra.mxu0 %v693
  %1027 = vmatpush.bf16.msra.mxu0 %v691
  %1028 = vmatpush.bf16.msra.mxu0 %v689
  %1029 = vmatpush.bf16.msra.mxu0 %v687
  %1030 = vmatpush.bf16.msra.mxu0 %v685
  %1031 = vmatmul.bf16.gmra.mxu0 %v179
  %v1032 = vpop.f32.mrf.mxu0
  %v1033 = vadd.f32 %v1020, %v1032
  %v1034 = vpop.f32.mrf.mxu0
  %1035 = vdwg.mxu0
  %v1036 = vmax.f32 %v929, 0.0
  %v1037 = vmax.f32 %v1033, 0.0
  %v1038 = vpack.c.bf16 %v1036, %v1036
  %v1039 = vpack.c.bf16 %v1037, %v1037
  %v1040 = vld [vmem:[%s3] sm:$0xff]
  %v1041 = vld [vmem:[%s3 + $0x8] sm:$0xff]
  %v1042 = vld [vmem:[%s3 + $0x10] sm:$0xff]
  %v1043 = vld [vmem:[%s3 + $0x18] sm:$0xff]
  %v1044 = vld [vmem:[%s3 + $0x20] sm:$0xff]
  %v1045 = vld [vmem:[%s3 + $0x28] sm:$0xff]
  %v1046 = vld [vmem:[%s3 + $0x30] sm:$0xff]
  %v1047 = vld [vmem:[%s3 + $0x38] sm:$0xff]
  %v1048 = vld [vmem:[%s3 + $0x40] sm:$0xff]
  %v1049 = vld [vmem:[%s3 + $0x48] sm:$0xff]
  %v1050 = vld [vmem:[%s3 + $0x50] sm:$0xff]
  %v1051 = vld [vmem:[%s3 + $0x58] sm:$0xff]
  %v1052 = vld [vmem:[%s3 + $0x60] sm:$0xff]
  %v1053 = vld [vmem:[%s3 + $0x68] sm:$0xff]
  %v1054 = vld [vmem:[%s3 + $0x70] sm:$0xff]
  %v1055 = vld [vmem:[%s3 + $0x78] sm:$0xff]
  %v1056 = vld [vmem:[%s3 + $0x80] sm:$0xff]
  %v1057 = vld [vmem:[%s3 + $0x88] sm:$0xff]
  %v1058 = vld [vmem:[%s3 + $0x90] sm:$0xff]
  %v1059 = vld [vmem:[%s3 + $0x98] sm:$0xff]
  %v1060 = vld [vmem:[%s3 + $0xa0] sm:$0xff]
  %v1061 = vld [vmem:[%s3 + $0xa8] sm:$0xff]
  %v1062 = vld [vmem:[%s3 + $0xb0] sm:$0xff]
  %v1063 = vld [vmem:[%s3 + $0xb8] sm:$0xff]
  %v1064 = vld [vmem:[%s3 + $0xc0] sm:$0xff]
  %v1065 = vld [vmem:[%s3 + $0xc8] sm:$0xff]
  %v1066 = vld [vmem:[%s3 + $0xd0] sm:$0xff]
  %v1067 = vld [vmem:[%s3 + $0xd8] sm:$0xff]
  %v1068 = vld [vmem:[%s3 + $0xe0] sm:$0xff]
  %v1069 = vld [vmem:[%s3 + $0xe8] sm:$0xff]
  %v1070 = vld [vmem:[%s3 + $0xf0] sm:$0xff]
  %v1071 = vld [vmem:[%s3 + $0xf8] sm:$0xff]
  %v1072 = vld [vmem:[%s4] sm:$0x3]
  %v1074 = vperm.slane %v1072, 0
  %v1075 = vperm.slane %v1072, 1
  %v1110 = vunpack.c.l.b16 %v1040
  %v1111 = vunpack.c.h.b16 %v1040
  %v1112 = vunpack.c.l.b16 %v1041
  %v1113 = vunpack.c.h.b16 %v1041
  %v1114 = vunpack.c.l.b16 %v1042
  %v1115 = vunpack.c.h.b16 %v1042
  %v1116 = vunpack.c.l.b16 %v1043
  %v1117 = vunpack.c.h.b16 %v1043
  %v1118 = vunpack.c.l.b16 %v1044
  %v1119 = vunpack.c.h.b16 %v1044
  %v1120 = vunpack.c.l.b16 %v1045
  %v1121 = vunpack.c.h.b16 %v1045
  %v1122 = vunpack.c.l.b16 %v1046
  %v1123 = vunpack.c.h.b16 %v1046
  %v1124 = vunpack.c.l.b16 %v1047
  %v1125 = vunpack.c.h.b16 %v1047
  %v1126 = vunpack.c.l.b16 %v1048
  %v1127 = vunpack.c.h.b16 %v1048
  %v1128 = vunpack.c.l.b16 %v1049
  %v1129 = vunpack.c.h.b16 %v1049
  %v1130 = vunpack.c.l.b16 %v1050
  %v1131 = vunpack.c.h.b16 %v1050
  %v1132 = vunpack.c.l.b16 %v1051
  %v1133 = vunpack.c.h.b16 %v1051
  %v1134 = vunpack.c.l.b16 %v1052
  %v1135 = vunpack.c.h.b16 %v1052
  %v1136 = vunpack.c.l.b16 %v1053
  %v1137 = vunpack.c.h.b16 %v1053
  %v1138 = vunpack.c.l.b16 %v1054
  %v1139 = vunpack.c.h.b16 %v1054
  %v1140 = vunpack.c.l.b16 %v1055
  %v1141 = vunpack.c.h.b16 %v1055
  %v1142 = vunpack.c.l.b16 %v1056
  %v1143 = vunpack.c.h.b16 %v1056
  %v1144 = vunpack.c.l.b16 %v1057
  %v1145 = vunpack.c.h.b16 %v1057
  %v1146 = vunpack.c.l.b16 %v1058
  %v1147 = vunpack.c.h.b16 %v1058
  %v1148 = vunpack.c.l.b16 %v1059
  %v1149 = vunpack.c.h.b16 %v1059
  %v1150 = vunpack.c.l.b16 %v1060
  %v1151 = vunpack.c.h.b16 %v1060
  %v1152 = vunpack.c.l.b16 %v1061
  %v1153 = vunpack.c.h.b16 %v1061
  %v1154 = vunpack.c.l.b16 %v1062
  %v1155 = vunpack.c.h.b16 %v1062
  %v1156 = vunpack.c.l.b16 %v1063
  %v1157 = vunpack.c.h.b16 %v1063
  %v1158 = vunpack.c.l.b16 %v1064
  %v1159 = vunpack.c.h.b16 %v1064
  %v1160 = vunpack.c.l.b16 %v1065
  %v1161 = vunpack.c.h.b16 %v1065
  %v1162 = vunpack.c.l.b16 %v1066
  %v1163 = vunpack.c.h.b16 %v1066
  %v1164 = vunpack.c.l.b16 %v1067
  %v1165 = vunpack.c.h.b16 %v1067
  %v1166 = vunpack.c.l.b16 %v1068
  %v1167 = vunpack.c.h.b16 %v1068
  %v1168 = vunpack.c.l.b16 %v1069
  %v1169 = vunpack.c.h.b16 %v1069
  %v1170 = vunpack.c.l.b16 %v1070
  %v1171 = vunpack.c.h.b16 %v1070
  %v1172 = vunpack.c.l.b16 %v1071
  %v1173 = vunpack.c.h.b16 %v1071
  %v1174 = vpack.c.b16 %v1112, %v1110
  %v1175 = vpack.c.b16 %v1113, %v1111
  %v1176 = vpack.c.b16 %v1116, %v1114
  %v1177 = vpack.c.b16 %v1117, %v1115
  %v1178 = vpack.c.b16 %v1120, %v1118
  %v1179 = vpack.c.b16 %v1121, %v1119
  %v1180 = vpack.c.b16 %v1124, %v1122
  %v1181 = vpack.c.b16 %v1125, %v1123
  %v1182 = vpack.c.b16 %v1128, %v1126
  %v1183 = vpack.c.b16 %v1129, %v1127
  %v1184 = vpack.c.b16 %v1132, %v1130
  %v1185 = vpack.c.b16 %v1133, %v1131
  %v1186 = vpack.c.b16 %v1136, %v1134
  %v1187 = vpack.c.b16 %v1137, %v1135
  %v1188 = vpack.c.b16 %v1140, %v1138
  %v1189 = vpack.c.b16 %v1141, %v1139
  %v1190 = vpack.c.b16 %v1144, %v1142
  %v1191 = vpack.c.b16 %v1145, %v1143
  %v1192 = vpack.c.b16 %v1148, %v1146
  %v1193 = vpack.c.b16 %v1149, %v1147
  %v1194 = vpack.c.b16 %v1152, %v1150
  %v1195 = vpack.c.b16 %v1153, %v1151
  %v1196 = vpack.c.b16 %v1156, %v1154
  %v1197 = vpack.c.b16 %v1157, %v1155
  %v1198 = vpack.c.b16 %v1160, %v1158
  %v1199 = vpack.c.b16 %v1161, %v1159
  %v1200 = vpack.c.b16 %v1164, %v1162
  %v1201 = vpack.c.b16 %v1165, %v1163
  %v1202 = vpack.c.b16 %v1168, %v1166
  %v1203 = vpack.c.b16 %v1169, %v1167
  %v1204 = vpack.c.b16 %v1172, %v1170
  %v1205 = vpack.c.b16 %v1173, %v1171
  %1238 = vmatpush.bf16.msra.mxu0 %v1188
  %1239 = vmatpush.bf16.msra.mxu0 %v1186
  %1240 = vmatpush.bf16.msra.mxu0 %v1184
  %1241 = vmatpush.bf16.msra.mxu0 %v1182
  %1242 = vmatpush.bf16.msra.mxu0 %v1180
  %1243 = vmatpush.bf16.msra.mxu0 %v1178
  %1244 = vmatpush.bf16.msra.mxu0 %v1176
  %1245 = vmatpush.bf16.msra.mxu0 %v1174
  %1246 = vmatmul.bf16.gmra.mxu0 %v1038
  %v1247 = vpop.f32.mrf.mxu0
  %v1248 = vadd.f32 %v1074, %v1247
  %v1249 = vpop.f32.mrf.mxu0
  %1250 = vdwg.mxu0
  %1251 = vmatpush.bf16.msra.mxu0 %v1204
  %1252 = vmatpush.bf16.msra.mxu0 %v1202
  %1253 = vmatpush.bf16.msra.mxu0 %v1200
  %1254 = vmatpush.bf16.msra.mxu0 %v1198
  %1255 = vmatpush.bf16.msra.mxu0 %v1196
  %1256 = vmatpush.bf16.msra.mxu0 %v1194
  %1257 = vmatpush.bf16.msra.mxu0 %v1192
  %1258 = vmatpush.bf16.msra.mxu0 %v1190
  %1259 = vmatmul.bf16.gmra.mxu0 %v1039
  %v1260 = vpop.f32.mrf.mxu0
  %v1261 = vadd.f32 %v1248, %v1260
  %v1262 = vpop.f32.mrf.mxu0
  %1263 = vdwg.mxu0
  %1264 = vmatpush.bf16.msra.mxu0 %v1189
  %1265 = vmatpush.bf16.msra.mxu0 %v1187
  %1266 = vmatpush.bf16.msra.mxu0 %v1185
  %1267 = vmatpush.bf16.msra.mxu0 %v1183
  %1268 = vmatpush.bf16.msra.mxu0 %v1181
  %1269 = vmatpush.bf16.msra.mxu0 %v1179
  %1270 = vmatpush.bf16.msra.mxu0 %v1177
  %1271 = vmatpush.bf16.msra.mxu0 %v1175
  %1272 = vmatmul.bf16.gmra.mxu0 %v1038
  %v1273 = vpop.f32.mrf.mxu0
  %v1274 = vadd.f32 %v1075, %v1273
  %v1275 = vpop.f32.mrf.mxu0
  %1276 = vdwg.mxu0
  %1277 = vmatpush.bf16.msra.mxu0 %v1205
  %1278 = vmatpush.bf16.msra.mxu0 %v1203
  %1279 = vmatpush.bf16.msra.mxu0 %v1201
  %1280 = vmatpush.bf16.msra.mxu0 %v1199
  %1281 = vmatpush.bf16.msra.mxu0 %v1197
  %1282 = vmatpush.bf16.msra.mxu0 %v1195
  %1283 = vmatpush.bf16.msra.mxu0 %v1193
  %1284 = vmatpush.bf16.msra.mxu0 %v1191
  %1285 = vmatmul.bf16.gmra.mxu0 %v1039
  %v1286 = vpop.f32.mrf.mxu0
  %v1287 = vadd.f32 %v1274, %v1286
  %v1288 = vpop.f32.mrf.mxu0
  %1289 = vdwg.mxu0
  %v1290 = vmax.f32 %v1261, 0.0
  %v1291 = vmax.f32 %v1287, 0.0
  %v1292 = vld [vmem:[%s5] sm:$0xff]
  %v1293 = vld [vmem:[%s5 + $0x8] sm:$0xff]
  %v1294 = vld [vmem:[%s5 + $0x10] sm:$0xff]
  %v1295 = vld [vmem:[%s5 + $0x18] sm:$0xff]
  %v1296 = vld [vmem:[%s5 + $0x20] sm:$0xff]
  %v1297 = vld [vmem:[%s5 + $0x28] sm:$0xff]
  %v1298 = vld [vmem:[%s5 + $0x30] sm:$0xff]
  %v1299 = vld [vmem:[%s5 + $0x38] sm:$0xff]
  %v1300 = vld [vmem:[%s5 + $0x40] sm:$0xff]
  %v1301 = vld [vmem:[%s5 + $0x48] sm:$0xff]
  %v1302 = vld [vmem:[%s5 + $0x50] sm:$0xff]
  %v1303 = vld [vmem:[%s5 + $0x58] sm:$0xff]
  %v1304 = vld [vmem:[%s5 + $0x60] sm:$0xff]
  %v1305 = vld [vmem:[%s5 + $0x68] sm:$0xff]
  %v1306 = vld [vmem:[%s5 + $0x70] sm:$0xff]
  %v1307 = vld [vmem:[%s5 + $0x78] sm:$0xff]
  %v1308 = vld [vmem:[%s5 + $0x80] sm:$0xff]
  %v1309 = vld [vmem:[%s5 + $0x88] sm:$0xff]
  %v1310 = vld [vmem:[%s5 + $0x90] sm:$0xff]
  %v1311 = vld [vmem:[%s5 + $0x98] sm:$0xff]
  %v1312 = vld [vmem:[%s5 + $0xa0] sm:$0xff]
  %v1313 = vld [vmem:[%s5 + $0xa8] sm:$0xff]
  %v1314 = vld [vmem:[%s5 + $0xb0] sm:$0xff]
  %v1315 = vld [vmem:[%s5 + $0xb8] sm:$0xff]
  %v1316 = vld [vmem:[%s5 + $0xc0] sm:$0xff]
  %v1317 = vld [vmem:[%s5 + $0xc8] sm:$0xff]
  %v1318 = vld [vmem:[%s5 + $0xd0] sm:$0xff]
  %v1319 = vld [vmem:[%s5 + $0xd8] sm:$0xff]
  %v1320 = vld [vmem:[%s5 + $0xe0] sm:$0xff]
  %v1321 = vld [vmem:[%s5 + $0xe8] sm:$0xff]
  %v1322 = vld [vmem:[%s5 + $0xf0] sm:$0xff]
  %v1323 = vld [vmem:[%s5 + $0xf8] sm:$0xff]
  %v1324 = vld [vmem:[%s6] sm:$0x3]
  %v1326 = vperm.slane %v1324, 0
  %v1327 = vperm.slane %v1324, 1
  %v1362 = vunpack.c.l.b16 %v1292
  %v1363 = vunpack.c.h.b16 %v1292
  %v1364 = vunpack.c.l.b16 %v1293
  %v1365 = vunpack.c.h.b16 %v1293
  %v1366 = vunpack.c.l.b16 %v1294
  %v1367 = vunpack.c.h.b16 %v1294
  %v1368 = vunpack.c.l.b16 %v1295
  %v1369 = vunpack.c.h.b16 %v1295
  %v1370 = vunpack.c.l.b16 %v1296
  %v1371 = vunpack.c.h.b16 %v1296
  %v1372 = vunpack.c.l.b16 %v1297
  %v1373 = vunpack.c.h.b16 %v1297
  %v1374 = vunpack.c.l.b16 %v1298
  %v1375 = vunpack.c.h.b16 %v1298
  %v1376 = vunpack.c.l.b16 %v1299
  %v1377 = vunpack.c.h.b16 %v1299
  %v1378 = vunpack.c.l.b16 %v1300
  %v1379 = vunpack.c.h.b16 %v1300
  %v1380 = vunpack.c.l.b16 %v1301
  %v1381 = vunpack.c.h.b16 %v1301
  %v1382 = vunpack.c.l.b16 %v1302
  %v1383 = vunpack.c.h.b16 %v1302
  %v1384 = vunpack.c.l.b16 %v1303
  %v1385 = vunpack.c.h.b16 %v1303
  %v1386 = vunpack.c.l.b16 %v1304
  %v1387 = vunpack.c.h.b16 %v1304
  %v1388 = vunpack.c.l.b16 %v1305
  %v1389 = vunpack.c.h.b16 %v1305
  %v1390 = vunpack.c.l.b16 %v1306
  %v1391 = vunpack.c.h.b16 %v1306
  %v1392 = vunpack.c.l.b16 %v1307
  %v1393 = vunpack.c.h.b16 %v1307
  %v1394 = vunpack.c.l.b16 %v1308
  %v1395 = vunpack.c.h.b16 %v1308
  %v1396 = vunpack.c.l.b16 %v1309
  %v1397 = vunpack.c.h.b16 %v1309
  %v1398 = vunpack.c.l.b16 %v1310
  %v1399 = vunpack.c.h.b16 %v1310
  %v1400 = vunpack.c.l.b16 %v1311
  %v1401 = vunpack.c.h.b16 %v1311
  %v1402 = vunpack.c.l.b16 %v1312
  %v1403 = vunpack.c.h.b16 %v1312
  %v1404 = vunpack.c.l.b16 %v1313
  %v1405 = vunpack.c.h.b16 %v1313
  %v1406 = vunpack.c.l.b16 %v1314
  %v1407 = vunpack.c.h.b16 %v1314
  %v1408 = vunpack.c.l.b16 %v1315
  %v1409 = vunpack.c.h.b16 %v1315
  %v1410 = vunpack.c.l.b16 %v1316
  %v1411 = vunpack.c.h.b16 %v1316
  %v1412 = vunpack.c.l.b16 %v1317
  %v1413 = vunpack.c.h.b16 %v1317
  %v1414 = vunpack.c.l.b16 %v1318
  %v1415 = vunpack.c.h.b16 %v1318
  %v1416 = vunpack.c.l.b16 %v1319
  %v1417 = vunpack.c.h.b16 %v1319
  %v1418 = vunpack.c.l.b16 %v1320
  %v1419 = vunpack.c.h.b16 %v1320
  %v1420 = vunpack.c.l.b16 %v1321
  %v1421 = vunpack.c.h.b16 %v1321
  %v1422 = vunpack.c.l.b16 %v1322
  %v1423 = vunpack.c.h.b16 %v1322
  %v1424 = vunpack.c.l.b16 %v1323
  %v1425 = vunpack.c.h.b16 %v1323
  %v1426 = vpack.c.b16 %v1364, %v1362
  %v1427 = vpack.c.b16 %v1365, %v1363
  %v1428 = vpack.c.b16 %v1368, %v1366
  %v1429 = vpack.c.b16 %v1369, %v1367
  %v1430 = vpack.c.b16 %v1372, %v1370
  %v1431 = vpack.c.b16 %v1373, %v1371
  %v1432 = vpack.c.b16 %v1376, %v1374
  %v1433 = vpack.c.b16 %v1377, %v1375
  %v1434 = vpack.c.b16 %v1380, %v1378
  %v1435 = vpack.c.b16 %v1381, %v1379
  %v1436 = vpack.c.b16 %v1384, %v1382
  %v1437 = vpack.c.b16 %v1385, %v1383
  %v1438 = vpack.c.b16 %v1388, %v1386
  %v1439 = vpack.c.b16 %v1389, %v1387
  %v1440 = vpack.c.b16 %v1392, %v1390
  %v1441 = vpack.c.b16 %v1393, %v1391
  %v1442 = vpack.c.b16 %v1396, %v1394
  %v1443 = vpack.c.b16 %v1397, %v1395
  %v1444 = vpack.c.b16 %v1400, %v1398
  %v1445 = vpack.c.b16 %v1401, %v1399
  %v1446 = vpack.c.b16 %v1404, %v1402
  %v1447 = vpack.c.b16 %v1405, %v1403
  %v1448 = vpack.c.b16 %v1408, %v1406
  %v1449 = vpack.c.b16 %v1409, %v1407
  %v1450 = vpack.c.b16 %v1412, %v1410
  %v1451 = vpack.c.b16 %v1413, %v1411
  %v1452 = vpack.c.b16 %v1416, %v1414
  %v1453 = vpack.c.b16 %v1417, %v1415
  %v1454 = vpack.c.b16 %v1420, %v1418
  %v1455 = vpack.c.b16 %v1421, %v1419
  %v1456 = vpack.c.b16 %v1424, %v1422
  %v1457 = vpack.c.b16 %v1425, %v1423
  %1490 = vmatpush.bf16.msra.mxu0 %v1440
  %1491 = vmatpush.bf16.msra.mxu0 %v1438
  %1492 = vmatpush.bf16.msra.mxu0 %v1436
  %1493 = vmatpush.bf16.msra.mxu0 %v1434
  %1494 = vmatpush.bf16.msra.mxu0 %v1432
  %1495 = vmatpush.bf16.msra.mxu0 %v1430
  %1496 = vmatpush.bf16.msra.mxu0 %v1428
  %1497 = vmatpush.bf16.msra.mxu0 %v1426
  %1498 = vmatmul.bf16.gmra.mxu0 %v1038
  %v1499 = vpop.f32.mrf.mxu0
  %v1500 = vadd.f32 %v1326, %v1499
  %v1501 = vpop.f32.mrf.mxu0
  %1502 = vdwg.mxu0
  %1503 = vmatpush.bf16.msra.mxu0 %v1456
  %1504 = vmatpush.bf16.msra.mxu0 %v1454
  %1505 = vmatpush.bf16.msra.mxu0 %v1452
  %1506 = vmatpush.bf16.msra.mxu0 %v1450
  %1507 = vmatpush.bf16.msra.mxu0 %v1448
  %1508 = vmatpush.bf16.msra.mxu0 %v1446
  %1509 = vmatpush.bf16.msra.mxu0 %v1444
  %1510 = vmatpush.bf16.msra.mxu0 %v1442
  %1511 = vmatmul.bf16.gmra.mxu0 %v1039
  %v1512 = vpop.f32.mrf.mxu0
  %v1513 = vadd.f32 %v1500, %v1512
  %v1514 = vpop.f32.mrf.mxu0
  %1515 = vdwg.mxu0
  %1516 = vmatpush.bf16.msra.mxu0 %v1441
  %1517 = vmatpush.bf16.msra.mxu0 %v1439
  %1518 = vmatpush.bf16.msra.mxu0 %v1437
  %1519 = vmatpush.bf16.msra.mxu0 %v1435
  %1520 = vmatpush.bf16.msra.mxu0 %v1433
  %1521 = vmatpush.bf16.msra.mxu0 %v1431
  %1522 = vmatpush.bf16.msra.mxu0 %v1429
  %1523 = vmatpush.bf16.msra.mxu0 %v1427
  %1524 = vmatmul.bf16.gmra.mxu0 %v1038
  %v1525 = vpop.f32.mrf.mxu0
  %v1526 = vadd.f32 %v1327, %v1525
  %v1527 = vpop.f32.mrf.mxu0
  %1528 = vdwg.mxu0
  %1529 = vmatpush.bf16.msra.mxu0 %v1457
  %1530 = vmatpush.bf16.msra.mxu0 %v1455
  %1531 = vmatpush.bf16.msra.mxu0 %v1453
  %1532 = vmatpush.bf16.msra.mxu0 %v1451
  %1533 = vmatpush.bf16.msra.mxu0 %v1449
  %1534 = vmatpush.bf16.msra.mxu0 %v1447
  %1535 = vmatpush.bf16.msra.mxu0 %v1445
  %1536 = vmatpush.bf16.msra.mxu0 %v1443
  %1537 = vmatmul.bf16.gmra.mxu0 %v1039
  %v1538 = vpop.f32.mrf.mxu0
  %v1539 = vadd.f32 %v1526, %v1538
  %v1540 = vpop.f32.mrf.mxu0
  %1541 = vdwg.mxu0
  %v1542 = vmax.f32 %v1513, 0.0
  %v1543 = vmax.f32 %v1539, 0.0
  %v1544 = vpack.c.bf16 %v1290, %v1290
  %v1545 = vpack.c.bf16 %v1291, %v1291
  %v1546 = vld [vmem:[%s7] sm:$0xf]
  %v1547 = vld [vmem:[%s7 + $0x4] sm:$0xf]
  %v1548 = vld [vmem:[%s7 + $0x8] sm:$0xf]
  %v1549 = vld [vmem:[%s7 + $0xc] sm:$0xf]
  %v1550 = vld [vmem:[%s7 + $0x10] sm:$0xf]
  %v1551 = vld [vmem:[%s7 + $0x14] sm:$0xf]
  %v1552 = vld [vmem:[%s7 + $0x18] sm:$0xf]
  %v1553 = vld [vmem:[%s7 + $0x1c] sm:$0xf]
  %v1554 = vld [vmem:[%s7 + $0x20] sm:$0xf]
  %v1555 = vld [vmem:[%s7 + $0x24] sm:$0xf]
  %v1556 = vld [vmem:[%s7 + $0x28] sm:$0xf]
  %v1557 = vld [vmem:[%s7 + $0x2c] sm:$0xf]
  %v1558 = vld [vmem:[%s7 + $0x30] sm:$0xf]
  %v1559 = vld [vmem:[%s7 + $0x34] sm:$0xf]
  %v1560 = vld [vmem:[%s7 + $0x38] sm:$0xf]
  %v1561 = vld [vmem:[%s7 + $0x3c] sm:$0xf]
  %v1562 = vld [vmem:[%s7 + $0x40] sm:$0xf]
  %v1563 = vld [vmem:[%s7 + $0x44] sm:$0xf]
  %v1564 = vld [vmem:[%s7 + $0x48] sm:$0xf]
  %v1565 = vld [vmem:[%s7 + $0x4c] sm:$0xf]
  %v1566 = vld [vmem:[%s7 + $0x50] sm:$0xf]
  %v1567 = vld [vmem:[%s7 + $0x54] sm:$0xf]
  %v1568 = vld [vmem:[%s7 + $0x58] sm:$0xf]
  %v1569 = vld [vmem:[%s7 + $0x5c] sm:$0xf]
  %v1570 = vld [vmem:[%s7 + $0x60] sm:$0xf]
  %v1571 = vld [vmem:[%s7 + $0x64] sm:$0xf]
  %v1572 = vld [vmem:[%s7 + $0x68] sm:$0xf]
  %v1573 = vld [vmem:[%s7 + $0x6c] sm:$0xf]
  %v1574 = vld [vmem:[%s7 + $0x70] sm:$0xf]
  %v1575 = vld [vmem:[%s7 + $0x74] sm:$0xf]
  %v1576 = vld [vmem:[%s7 + $0x78] sm:$0xf]
  %v1577 = vld [vmem:[%s7 + $0x7c] sm:$0xf]
  %v1578 = vpack.c.bf16 %v1542, %v1542
  %v1579 = vpack.c.bf16 %v1543, %v1543
  %v1580 = vld [vmem:[%s8] sm:$0xf]
  %v1581 = vld [vmem:[%s8 + $0x4] sm:$0xf]
  %v1582 = vld [vmem:[%s8 + $0x8] sm:$0xf]
  %v1583 = vld [vmem:[%s8 + $0xc] sm:$0xf]
  %v1584 = vld [vmem:[%s8 + $0x10] sm:$0xf]
  %v1585 = vld [vmem:[%s8 + $0x14] sm:$0xf]
  %v1586 = vld [vmem:[%s8 + $0x18] sm:$0xf]
  %v1587 = vld [vmem:[%s8 + $0x1c] sm:$0xf]
  %v1588 = vld [vmem:[%s8 + $0x20] sm:$0xf]
  %v1589 = vld [vmem:[%s8 + $0x24] sm:$0xf]
  %v1590 = vld [vmem:[%s8 + $0x28] sm:$0xf]
  %v1591 = vld [vmem:[%s8 + $0x2c] sm:$0xf]
  %v1592 = vld [vmem:[%s8 + $0x30] sm:$0xf]
  %v1593 = vld [vmem:[%s8 + $0x34] sm:$0xf]
  %v1594 = vld [vmem:[%s8 + $0x38] sm:$0xf]
  %v1595 = vld [vmem:[%s8 + $0x3c] sm:$0xf]
  %v1596 = vld [vmem:[%s8 + $0x40] sm:$0xf]
  %v1597 = vld [vmem:[%s8 + $0x44] sm:$0xf]
  %v1598 = vld [vmem:[%s8 + $0x48] sm:$0xf]
  %v1599 = vld [vmem:[%s8 + $0x4c] sm:$0xf]
  %v1600 = vld [vmem:[%s8 + $0x50] sm:$0xf]
  %v1601 = vld [vmem:[%s8 + $0x54] sm:$0xf]
  %v1602 = vld [vmem:[%s8 + $0x58] sm:$0xf]
  %v1603 = vld [vmem:[%s8 + $0x5c] sm:$0xf]
  %v1604 = vld [vmem:[%s8 + $0x60] sm:$0xf]
  %v1605 = vld [vmem:[%s8 + $0x64] sm:$0xf]
  %v1606 = vld [vmem:[%s8 + $0x68] sm:$0xf]
  %v1607 = vld [vmem:[%s8 + $0x6c] sm:$0xf]
  %v1608 = vld [vmem:[%s8 + $0x70] sm:$0xf]
  %v1609 = vld [vmem:[%s8 + $0x74] sm:$0xf]
  %v1610 = vld [vmem:[%s8 + $0x78] sm:$0xf]
  %v1611 = vld [vmem:[%s8 + $0x7c] sm:$0xf]
  %v1644 = vunpack.c.l.b16 %v1580
  %v1645 = vunpack.c.l.b16 %v1581
  %v1646 = vunpack.c.l.b16 %v1582
  %v1647 = vunpack.c.l.b16 %v1583
  %v1648 = vunpack.c.l.b16 %v1584
  %v1649 = vunpack.c.l.b16 %v1585
  %v1650 = vunpack.c.l.b16 %v1586
  %v1651 = vunpack.c.l.b16 %v1587
  %v1652 = vunpack.c.l.b16 %v1588
  %v1653 = vunpack.c.l.b16 %v1589
  %v1654 = vunpack.c.l.b16 %v1590
  %v1655 = vunpack.c.l.b16 %v1591
  %v1656 = vunpack.c.l.b16 %v1592
  %v1657 = vunpack.c.l.b16 %v1593
  %v1658 = vunpack.c.l.b16 %v1594
  %v1659 = vunpack.c.l.b16 %v1595
  %v1660 = vunpack.c.l.b16 %v1596
  %v1661 = vunpack.c.l.b16 %v1597
  %v1662 = vunpack.c.l.b16 %v1598
  %v1663 = vunpack.c.l.b16 %v1599
  %v1664 = vunpack.c.l.b16 %v1600
  %v1665 = vunpack.c.l.b16 %v1601
  %v1666 = vunpack.c.l.b16 %v1602
  %v1667 = vunpack.c.l.b16 %v1603
  %v1668 = vunpack.c.l.b16 %v1604
  %v1669 = vunpack.c.l.b16 %v1605
  %v1670 = vunpack.c.l.b16 %v1606
  %v1671 = vunpack.c.l.b16 %v1607
  %v1672 = vunpack.c.l.b16 %v1608
  %v1673 = vunpack.c.l.b16 %v1609
  %v1674 = vunpack.c.l.b16 %v1610
  %v1675 = vunpack.c.l.b16 %v1611
  %v1676 = vpack.c.b16 %v1645, %v1644
  %v1677 = vpack.c.b16 %v1647, %v1646
  %v1678 = vpack.c.b16 %v1649, %v1648
  %v1679 = vpack.c.b16 %v1651, %v1650
  %v1680 = vpack.c.b16 %v1653, %v1652
  %v1681 = vpack.c.b16 %v1655, %v1654
  %v1682 = vpack.c.b16 %v1657, %v1656
  %v1683 = vpack.c.b16 %v1659, %v1658
  %v1684 = vpack.c.b16 %v1661, %v1660
  %v1685 = vpack.c.b16 %v1663, %v1662
  %v1686 = vpack.c.b16 %v1665, %v1664
  %v1687 = vpack.c.b16 %v1667, %v1666
  %v1688 = vpack.c.b16 %v1669, %v1668
  %v1689 = vpack.c.b16 %v1671, %v1670
  %v1690 = vpack.c.b16 %v1673, %v1672
  %v1691 = vpack.c.b16 %v1675, %v1674
  %1708 = vmatpush.bf16.msra.mxu0 %v1683
  %1709 = vmatpush.bf16.msra.mxu0 %v1682
  %1710 = vmatpush.bf16.msra.mxu0 %v1681
  %1711 = vmatpush.bf16.msra.mxu0 %v1680
  %1712 = vmatpush.bf16.msra.mxu0 %v1679
  %1713 = vmatpush.bf16.msra.mxu0 %v1678
  %1714 = vmatpush.bf16.msra.mxu0 %v1677
  %1715 = vmatpush.bf16.msra.mxu0 %v1676
  %1716 = vmatmul.bf16.gmra.mxu0 %v1578
  %v1717 = vpop.f32.mrf.mxu0
  %v1718 = vadd.f32 0.0, %v1717
  %v1719 = vpop.f32.mrf.mxu0
  %1720 = vdwg.mxu0
  %1721 = vmatpush.bf16.msra.mxu0 %v1691
  %1722 = vmatpush.bf16.msra.mxu0 %v1690
  %1723 = vmatpush.bf16.msra.mxu0 %v1689
  %1724 = vmatpush.bf16.msra.mxu0 %v1688
  %1725 = vmatpush.bf16.msra.mxu0 %v1687
  %1726 = vmatpush.bf16.msra.mxu0 %v1686
  %1727 = vmatpush.bf16.msra.mxu0 %v1685
  %1728 = vmatpush.bf16.msra.mxu0 %v1684
  %1729 = vmatmul.bf16.gmra.mxu0 %v1579
  %v1730 = vpop.f32.mrf.mxu0
  %v1731 = vadd.f32 %v1718, %v1730
  %v1732 = vpop.f32.mrf.mxu0
  %1733 = vdwg.mxu0
  %v1766 = vunpack.c.l.b16 %v1546
  %v1767 = vunpack.c.l.b16 %v1547
  %v1768 = vunpack.c.l.b16 %v1548
  %v1769 = vunpack.c.l.b16 %v1549
  %v1770 = vunpack.c.l.b16 %v1550
  %v1771 = vunpack.c.l.b16 %v1551
  %v1772 = vunpack.c.l.b16 %v1552
  %v1773 = vunpack.c.l.b16 %v1553
  %v1774 = vunpack.c.l.b16 %v1554
  %v1775 = vunpack.c.l.b16 %v1555
  %v1776 = vunpack.c.l.b16 %v1556
  %v1777 = vunpack.c.l.b16 %v1557
  %v1778 = vunpack.c.l.b16 %v1558
  %v1779 = vunpack.c.l.b16 %v1559
  %v1780 = vunpack.c.l.b16 %v1560
  %v1781 = vunpack.c.l.b16 %v1561
  %v1782 = vunpack.c.l.b16 %v1562
  %v1783 = vunpack.c.l.b16 %v1563
  %v1784 = vunpack.c.l.b16 %v1564
  %v1785 = vunpack.c.l.b16 %v1565
  %v1786 = vunpack.c.l.b16 %v1566
  %v1787 = vunpack.c.l.b16 %v1567
  %v1788 = vunpack.c.l.b16 %v1568
  %v1789 = vunpack.c.l.b16 %v1569
  %v1790 = vunpack.c.l.b16 %v1570
  %v1791 = vunpack.c.l.b16 %v1571
  %v1792 = vunpack.c.l.b16 %v1572
  %v1793 = vunpack.c.l.b16 %v1573
  %v1794 = vunpack.c.l.b16 %v1574
  %v1795 = vunpack.c.l.b16 %v1575
  %v1796 = vunpack.c.l.b16 %v1576
  %v1797 = vunpack.c.l.b16 %v1577
  %v1798 = vpack.c.b16 %v1767, %v1766
  %v1799 = vpack.c.b16 %v1769, %v1768
  %v1800 = vpack.c.b16 %v1771, %v1770
  %v1801 = vpack.c.b16 %v1773, %v1772
  %v1802 = vpack.c.b16 %v1775, %v1774
  %v1803 = vpack.c.b16 %v1777, %v1776
  %v1804 = vpack.c.b16 %v1779, %v1778
  %v1805 = vpack.c.b16 %v1781, %v1780
  %v1806 = vpack.c.b16 %v1783, %v1782
  %v1807 = vpack.c.b16 %v1785, %v1784
  %v1808 = vpack.c.b16 %v1787, %v1786
  %v1809 = vpack.c.b16 %v1789, %v1788
  %v1810 = vpack.c.b16 %v1791, %v1790
  %v1811 = vpack.c.b16 %v1793, %v1792
  %v1812 = vpack.c.b16 %v1795, %v1794
  %v1813 = vpack.c.b16 %v1797, %v1796
  %1830 = vmatpush.bf16.msra.mxu0 %v1805
  %1831 = vmatpush.bf16.msra.mxu0 %v1804
  %1832 = vmatpush.bf16.msra.mxu0 %v1803
  %1833 = vmatpush.bf16.msra.mxu0 %v1802
  %1834 = vmatpush.bf16.msra.mxu0 %v1801
  %1835 = vmatpush.bf16.msra.mxu0 %v1800
  %1836 = vmatpush.bf16.msra.mxu0 %v1799
  %1837 = vmatpush.bf16.msra.mxu0 %v1798
  %1838 = vmatmul.bf16.gmra.mxu0 %v1544
  %v1839 = vpop.f32.mrf.mxu0
  %v1840 = vadd.f32 %v1731, %v1839
  %v1841 = vpop.f32.mrf.mxu0
  %1842 = vdwg.mxu0
  %1843 = vmatpush.bf16.msra.mxu0 %v1813
  %1844 = vmatpush.bf16.msra.mxu0 %v1812
  %1845 = vmatpush.bf16.msra.mxu0 %v1811
  %1846 = vmatpush.bf16.msra.mxu0 %v1810
  %1847 = vmatpush.bf16.msra.mxu0 %v1809
  %1848 = vmatpush.bf16.msra.mxu0 %v1808
  %1849 = vmatpush.bf16.msra.mxu0 %v1807
  %1850 = vmatpush.bf16.msra.mxu0 %v1806
  %1851 = vmatmul.bf16.gmra.mxu0 %v1545
  %v1852 = vpop.f32.mrf.mxu0
  %v1853 = vadd.f32 %v1840, %v1852
  %v1854 = vpop.f32.mrf.mxu0
  %1855 = vdwg.mxu0
  %v1856 = vld [vmem:[%s9] sm:$0x1]
  %v1858 = vperm.slane %v1856, 0
  %v1860 = vadd.f32 %v1853, %v1858
  %1861 = vst [vmem:[%s10] sm:$0x3] %v1860
  // Predicated region
  $region42: #{vgg_forward.5} parent=0 // pred_check
    _
  $region43: #{vgg_forward.5} parent=0 // pred_check_branch
    %1863 = sbr.rel (0) target = $region45
  $region44: #{vgg_forward.5} parent=0 // pred_region
    _
  $region45: #{vgg_forward.5} parent=0 // pred_fallthru
    _
  // Predicated region
  $region46: #{vgg_forward.5} parent=0 // pred_check
    _
  $region47: #{vgg_forward.5} parent=0 // pred_check_branch
    %1865 = sbr.rel (0) target = $region49
  $region48: #{vgg_forward.5} parent=0 // pred_region
    _
  $region49: #{vgg_forward.5} parent=0 // pred_fallthru
    _

</llo_original>
